<compile_context>
chip_gen: v6e
topology: v6e:2x2x1
jax: 0.10.0
libtpu: 0.0.40
codegen_flags: <defaults>
</compile_context>

<pallas_src>
import math
from functools import partial

import jax
import jax.numpy as jnp
from jax import lax
from jax.experimental import pallas as pl
from jax.experimental.pallas import tpu as pltpu  # noqa: F401  (TPU backend)

# --- small, module-consistent hyperparameters ---
D_MODEL = 32               # d_model
NHEAD = 4                  # nhead
HEAD_DIM = D_MODEL // NHEAD
D_HID = 64                 # dim_feedforward
NLAYERS = 2                # nlayers
SEQ = 8                    # sequence length
BATCH = 2                  # batch size
VOCAB = 11                 # vocab size for the (externally provided) embedding
LN_EPS = 1e-6              # layer_norm_eps

NEG_MASK = -1e10           # PyTorch masked_fill value (-10000000000.0)
NEG_XBATCH = -2e10         # strictly more negative => cross-batch keys always lose


# ----------------------------------------------------------------------------
# Fused Pallas kernel: all encoder layers + final LayerNorm, whole batch.
# ----------------------------------------------------------------------------
def _layer_norm(v, w, b):
  mu = jnp.mean(v, axis=-1, keepdims=True)
  var = jnp.mean((v - mu) ** 2, axis=-1, keepdims=True)
  return (v - mu) * lax.rsqrt(var + LN_EPS) * w + b


def encoder_kernel(x_ref, mask_ref,
                   ln1w_ref, ln1b_ref, wqkv_ref, wo_ref,
                   ln2w_ref, ln2b_ref, w1_ref, b1_ref, w2_ref, b2_ref,
                   lnfw_ref, lnfb_ref, o_ref, *, nhead, nlayers):
  x = x_ref[...]          # (N, D) f32; resident in VMEM for all layers
  mask = mask_ref[...]    # (N, N) additive f32 mask (shared by heads & layers)
  n, d = x.shape
  h3 = 3 * nhead

  for li in range(nlayers):       # static unroll; weights already in VMEM
    # hoisted per-layer parameter reads
    ln1w, ln1b = ln1w_ref[li], ln1b_ref[li]
    ln2w, ln2b = ln2w_ref[li], ln2b_ref[li]
    wqkv = wqkv_ref[li]           # (3H, D, hd) bf16; softmax scale folded into Q
    wo = wo_ref[li]               # (H, hd, D)  bf16
    w1, b1 = w1_ref[li], b1_ref[li]
    w2, b2 = w2_ref[li], b2_ref[li]

    # --- self-attention block: x + out_proj(MHA(norm1(x))) ---
    h = _layer_norm(x, ln1w, ln1b)                               # (N, D) f32
    hb = jnp.broadcast_to(h.astype(jnp.bfloat16)[None], (h3, n, d))
    # all projections for all heads in one batched dot (heads = batch axis)
    qkv = lax.dot_general(hb, wqkv, (((2,), (1,)), ((0,), (0,))),
                          preferred_element_type=jnp.float32)    # (3H, N, hd)
    q = qkv[0:nhead]              # whole-tile leading-axis slices (no lane masks)
    k = qkv[nhead:2 * nhead]
    v = qkv[2 * nhead:3 * nhead]

    # batched all-head scores; scale already folded into the Q weights
    s = lax.dot_general(q, k, (((2,), (2,)), ((0,), (0,))),
                        preferred_element_type=jnp.float32)      # (H, N, N)
    s = s + mask
    s = s - jnp.max(s, axis=-1, keepdims=True)
    p = jnp.exp(s)
    p = p / jnp.sum(p, axis=-1, keepdims=True)    # exact divide (numerical parity)
    attn = lax.dot_general(p, v, (((2,), (1,)), ((0,), (0,))),
                           preferred_element_type=jnp.float32)   # (H, N, hd)
    # concat-over-heads folded into the out-projection: batched dot + head sum
    sa = lax.dot_general(attn.astype(jnp.bfloat16), wo,
                         (((2,), (1,)), ((0,), (0,))),
                         preferred_element_type=jnp.float32)     # (H, N, D)
    x = x + jnp.sum(sa, axis=0)   # dropout1 == identity (eval)

    # --- feed-forward block: x + linear2(relu(linear1(norm2(x)))) ---
    h2 = _layer_norm(x, ln2w, ln2b).astype(jnp.bfloat16)
    ff = jnp.dot(h2, w1, preferred_element_type=jnp.float32) + b1
    ff = jnp.maximum(ff, 0.0).astype(jnp.bfloat16)               # F.relu
    x = x + (jnp.dot(ff, w2, preferred_element_type=jnp.float32) + b2)

  # --- final encoder LayerNorm ---
  o_ref[...] = _layer_norm(x, lnfw_ref[...], lnfb_ref[...])


def run_encoder(x_flat, mask_flat, params):
  """Single fused pallas_call; no grid, everything (< 1 MB) lives in VMEM."""
  n, d = x_flat.shape
  return pl.pallas_call(
      partial(encoder_kernel, nhead=NHEAD, nlayers=NLAYERS),
      out_shape=jax.ShapeDtypeStruct((n, d), jnp.float32),
      input_output_aliases={0: 0},   # reuse the activation HBM buffer as output
  )(x_flat, mask_flat,
    params["ln1_w"], params["ln1_b"], params["wqkv"], params["wo"],
    params["ln2_w"], params["ln2_b"], params["w1"], params["b1"],
    params["w2"], params["b2"],
    params["lnf_w"], params["lnf_b"])


# ----------------------------------------------------------------------------
# Plain-JAX glue: mask construction, embedding, positional encoding, params
# ----------------------------------------------------------------------------
def make_flat_mask(src, inputs_segmentation):
  """(B*S, B*S) additive mask: 0 allowed / -1e10 padding / -2e10 cross-batch.

  The cross-batch value is strictly more negative than the padding value so
  that fully-padded query rows still softmax over their own batch's keys only,
  matching make_src_mask + nn.MultiheadAttention float-mask semantics exactly.
  """
  B, S = src.shape
  N = B * S
  valid = (src > 0).reshape(N)
  batch_ids = jnp.repeat(jnp.arange(B), S)
  same_batch = batch_ids[:, None] == batch_ids[None, :]
  allowed = same_batch & valid[:, None] & valid[None, :]
  if inputs_segmentation is not None:
    seg = inputs_segmentation.reshape(N)
    allowed = allowed & (seg[:, None] == seg[None, :])
  return jnp.where(allowed, 0.0,
                   jnp.where(same_batch, NEG_MASK, NEG_XBATCH)).astype(jnp.float32)


def sinusoidal_pe(max_len, d_model):
  position = jnp.arange(max_len, dtype=jnp.float32)[:, None]
  div_term = jnp.exp(jnp.arange(0, d_model, 2, dtype=jnp.float32)
                     * (-math.log(10000.0) / d_model))
  pe = jnp.zeros((max_len, d_model), jnp.float32)
  pe = pe.at[:, 0::2].set(jnp.sin(position * div_term))
  pe = pe.at[:, 1::2].set(jnp.cos(position * div_term))
  return pe


def xavier_uniform(key, out_f, in_f):
  bound = math.sqrt(6.0 / (in_f + out_f))
  return jax.random.uniform(key, (out_f, in_f), jnp.float32, -bound, bound)


def linear_default(key, out_f, in_f):
  kw, kb = jax.random.split(key)
  bound = 1.0 / math.sqrt(in_f)
  w = jax.random.uniform(kw, (out_f, in_f), jnp.float32, -bound, bound)
  b = jax.random.uniform(kb, (out_f,), jnp.float32, -bound, bound)
  return w, b


def init_params(key):
  keys = jax.random.split(key, NLAYERS + 1)
  params = {
      "embedding": jax.random.normal(keys[0], (VOCAB, D_MODEL), jnp.float32),
      "pe": sinusoidal_pe(256, D_MODEL),
      "lnf_w": jnp.ones((1, D_MODEL), jnp.float32),
      "lnf_b": jnp.zeros((1, D_MODEL), jnp.float32),
      # stacked LayerNorm params (default init: ones / zeros), kept float32
      "ln1_w": jnp.ones((NLAYERS, 1, D_MODEL), jnp.float32),
      "ln1_b": jnp.zeros((NLAYERS, 1, D_MODEL), jnp.float32),
      "ln2_w": jnp.ones((NLAYERS, 1, D_MODEL), jnp.float32),
      "ln2_b": jnp.zeros((NLAYERS, 1, D_MODEL), jnp.float32),
  }
  scale = 1.0 / math.sqrt(HEAD_DIM)
  wqkv_l, wo_l, w1_l, b1_l, w2_l, b2_l = [], [], [], [], [], []
  for li in range(NLAYERS):
    k = jax.random.split(keys[1 + li], 4)
    w_in = xavier_uniform(k[0], 3 * D_MODEL, D_MODEL)   # in_proj  (no bias)
    w_out = xavier_uniform(k[1], D_MODEL, D_MODEL)      # out_proj (no bias)
    w1, b1 = linear_default(k[2], D_HID, D_MODEL)       # linear1 (with bias)
    w2, b2 = linear_default(k[3], D_MODEL, D_HID)       # linear2 (with bias)

    # (D, 3D) -> (3, H, D, hd); fold the 1/sqrt(hd) softmax scale into Q
    wqkv = jnp.transpose(
        w_in.T.reshape(D_MODEL, 3, NHEAD, HEAD_DIM), (1, 2, 0, 3))
    wqkv = wqkv.at[0].multiply(scale)
    wqkv_l.append(
        wqkv.reshape(3 * NHEAD, D_MODEL, HEAD_DIM).astype(jnp.bfloat16))
    # out-proj split per head: concat folded into batched dot + head sum
    wo_l.append(w_out.T.reshape(NHEAD, HEAD_DIM, D_MODEL).astype(jnp.bfloat16))
    w1_l.append(w1.T.astype(jnp.bfloat16))   # (D, F) bf16
    b1_l.append(b1[None, :])                 # (1, F) f32
    w2_l.append(w2.T.astype(jnp.bfloat16))   # (F, D) bf16
    b2_l.append(b2[None, :])                 # (1, D) f32
  params["wqkv"] = jnp.stack(wqkv_l)   # (L, 3H, D, hd) bf16
  params["wo"] = jnp.stack(wo_l)       # (L, H, hd, D)  bf16
  params["w1"] = jnp.stack(w1_l)       # (L, D, F)      bf16
  params["b1"] = jnp.stack(b1_l)       # (L, 1, F)      f32
  params["w2"] = jnp.stack(w2_l)       # (L, F, D)      bf16
  params["b2"] = jnp.stack(b2_l)       # (L, 1, D)      f32
  return params


def encoder_forward(params, src, inputs_positions=None, inputs_segmentation=None):
  src = src.astype(jnp.int32)
  B, S = src.shape
  mask = make_flat_mask(src, inputs_segmentation)        # (B*S, B*S)
  x = params["embedding"][src]                           # shared_embedding(src)
  if inputs_positions is None:
    pe = params["pe"][:S][None, :, :]
  else:
    pe = params["pe"][inputs_positions]
  x = (x + pe).astype(jnp.float32)                       # pos_encoder (dropout = identity)
  x_flat = x.reshape(B * S, D_MODEL)                     # fold batch in the wrapper
  out = run_encoder(x_flat, mask, params)                # fused Pallas kernel
  return out.reshape(B, S, D_MODEL)


if __name__ == "__main__":
  key = jax.random.PRNGKey(0)
  k_params, k_src = jax.random.split(key)
  params = init_params(k_params)

  src = jax.random.randint(k_src, (BATCH, SEQ), 0, VOCAB)
  src = src.at[1, -2:].set(0)      # padding tokens to exercise the mask path

  out = jax.jit(encoder_forward)(params, src)
  jax.block_until_ready(out)
  assert out.shape == (BATCH, SEQ, D_MODEL) and out.dtype == jnp.float32
  assert bool(jnp.all(jnp.isfinite(out)))
  print("KERNEL_OK")
</pallas_src>

<mosaic_0001>
module attributes {stable_mosaic.version = 11 : i64} {
  func.func @encoder_kernel(%arg0: memref<16x32xf32, #tpu.memory_space<vmem>>, %arg1: memref<16x16xf32, #tpu.memory_space<vmem>>, %arg2: memref<2x1x32xf32, #tpu.memory_space<vmem>>, %arg3: memref<2x1x32xf32, #tpu.memory_space<vmem>>, %arg4: memref<2x12x32x8xbf16, #tpu.memory_space<vmem>>, %arg5: memref<2x4x8x32xbf16, #tpu.memory_space<vmem>>, %arg6: memref<2x1x32xf32, #tpu.memory_space<vmem>>, %arg7: memref<2x1x32xf32, #tpu.memory_space<vmem>>, %arg8: memref<2x32x64xbf16, #tpu.memory_space<vmem>>, %arg9: memref<2x1x64xf32, #tpu.memory_space<vmem>>, %arg10: memref<2x64x32xbf16, #tpu.memory_space<vmem>>, %arg11: memref<2x1x32xf32, #tpu.memory_space<vmem>>, %arg12: memref<1x32xf32, #tpu.memory_space<vmem>>, %arg13: memref<1x32xf32, #tpu.memory_space<vmem>>, %arg14: memref<16x32xf32, #tpu.memory_space<vmem>>) attributes {dimension_semantics = [], scalar_prefetch = 0 : i64, scratch_operands = 0 : i64, tpu.core_type = #tpu.core_type<tc>} {
    %c0 = arith.constant 0 : index
    %c0_0 = arith.constant 0 : index
    %0 = vector.load %arg0[%c0, %c0_0] : memref<16x32xf32, #tpu.memory_space<vmem>>, vector<16x32xf32>
    %c0_1 = arith.constant 0 : index
    %c0_2 = arith.constant 0 : index
    %1 = vector.load %arg1[%c0_1, %c0_2] : memref<16x16xf32, #tpu.memory_space<vmem>>, vector<16x16xf32>
    %c0_3 = arith.constant 0 : index
    %c0_4 = arith.constant 0 : index
    %c0_5 = arith.constant 0 : index
    %2 = vector.load %arg2[%c0_3, %c0_4, %c0_5] : memref<2x1x32xf32, #tpu.memory_space<vmem>>, vector<1x1x32xf32>
    %3 = vector.shape_cast %2 : vector<1x1x32xf32> to vector<1x32xf32>
    %c0_6 = arith.constant 0 : index
    %c0_7 = arith.constant 0 : index
    %c0_8 = arith.constant 0 : index
    %4 = vector.load %arg3[%c0_6, %c0_7, %c0_8] : memref<2x1x32xf32, #tpu.memory_space<vmem>>, vector<1x1x32xf32>
    %5 = vector.shape_cast %4 : vector<1x1x32xf32> to vector<1x32xf32>
    %c0_9 = arith.constant 0 : index
    %c0_10 = arith.constant 0 : index
    %c0_11 = arith.constant 0 : index
    %6 = vector.load %arg6[%c0_9, %c0_10, %c0_11] : memref<2x1x32xf32, #tpu.memory_space<vmem>>, vector<1x1x32xf32>
    %7 = vector.shape_cast %6 : vector<1x1x32xf32> to vector<1x32xf32>
    %c0_12 = arith.constant 0 : index
    %c0_13 = arith.constant 0 : index
    %c0_14 = arith.constant 0 : index
    %8 = vector.load %arg7[%c0_12, %c0_13, %c0_14] : memref<2x1x32xf32, #tpu.memory_space<vmem>>, vector<1x1x32xf32>
    %9 = vector.shape_cast %8 : vector<1x1x32xf32> to vector<1x32xf32>
    %c0_15 = arith.constant 0 : index
    %c0_16 = arith.constant 0 : index
    %c0_17 = arith.constant 0 : index
    %c0_18 = arith.constant 0 : index
    %10 = vector.load %arg4[%c0_15, %c0_16, %c0_17, %c0_18] : memref<2x12x32x8xbf16, #tpu.memory_space<vmem>>, vector<1x12x32x8xbf16>
    %11 = vector.shape_cast %10 : vector<1x12x32x8xbf16> to vector<12x32x8xbf16>
    %c0_19 = arith.constant 0 : index
    %c0_20 = arith.constant 0 : index
    %c0_21 = arith.constant 0 : index
    %c0_22 = arith.constant 0 : index
    %12 = vector.load %arg5[%c0_19, %c0_20, %c0_21, %c0_22] : memref<2x4x8x32xbf16, #tpu.memory_space<vmem>>, vector<1x4x8x32xbf16>
    %13 = vector.shape_cast %12 : vector<1x4x8x32xbf16> to vector<4x8x32xbf16>
    %c0_23 = arith.constant 0 : index
    %c0_24 = arith.constant 0 : index
    %c0_25 = arith.constant 0 : index
    %14 = vector.load %arg8[%c0_23, %c0_24, %c0_25] : memref<2x32x64xbf16, #tpu.memory_space<vmem>>, vector<1x32x64xbf16>
    %15 = vector.shape_cast %14 : vector<1x32x64xbf16> to vector<32x64xbf16>
    %c0_26 = arith.constant 0 : index
    %c0_27 = arith.constant 0 : index
    %c0_28 = arith.constant 0 : index
    %16 = vector.load %arg9[%c0_26, %c0_27, %c0_28] : memref<2x1x64xf32, #tpu.memory_space<vmem>>, vector<1x1x64xf32>
    %17 = vector.shape_cast %16 : vector<1x1x64xf32> to vector<1x64xf32>
    %c0_29 = arith.constant 0 : index
    %c0_30 = arith.constant 0 : index
    %c0_31 = arith.constant 0 : index
    %18 = vector.load %arg10[%c0_29, %c0_30, %c0_31] : memref<2x64x32xbf16, #tpu.memory_space<vmem>>, vector<1x64x32xbf16>
    %19 = vector.shape_cast %18 : vector<1x64x32xbf16> to vector<64x32xbf16>
    %c0_32 = arith.constant 0 : index
    %c0_33 = arith.constant 0 : index
    %c0_34 = arith.constant 0 : index
    %20 = vector.load %arg11[%c0_32, %c0_33, %c0_34] : memref<2x1x32xf32, #tpu.memory_space<vmem>>, vector<1x1x32xf32>
    %21 = vector.shape_cast %20 : vector<1x1x32xf32> to vector<1x32xf32>
    %cst = arith.constant dense<0.000000e+00> : vector<16xf32>
    %22 = vector.multi_reduction <add>, %0, %cst [1] : vector<16x32xf32> to vector<16xf32>
    %23 = vector.shape_cast %22 : vector<16xf32> to vector<16x1xf32>
    %cst_35 = arith.constant 3.200000e+01 : f32
    %24 = vector.broadcast %cst_35 : f32 to vector<16x1xf32>
    %25 = arith.divf %23, %24 : vector<16x1xf32>
    %26 = vector.broadcast %25 : vector<16x1xf32> to vector<16x32xf32>
    %27 = arith.subf %0, %26 : vector<16x32xf32>
    %28 = arith.mulf %27, %27 : vector<16x32xf32>
    %cst_36 = arith.constant dense<0.000000e+00> : vector<16xf32>
    %29 = vector.multi_reduction <add>, %28, %cst_36 [1] : vector<16x32xf32> to vector<16xf32>
    %30 = vector.shape_cast %29 : vector<16xf32> to vector<16x1xf32>
    %cst_37 = arith.constant 3.200000e+01 : f32
    %31 = vector.broadcast %cst_37 : f32 to vector<16x1xf32>
    %32 = arith.divf %30, %31 : vector<16x1xf32>
    %33 = vector.broadcast %25 : vector<16x1xf32> to vector<16x32xf32>
    %34 = arith.subf %0, %33 : vector<16x32xf32>
    %cst_38 = arith.constant 9.99999997E-7 : f32
    %35 = vector.broadcast %cst_38 : f32 to vector<16x1xf32>
    %36 = arith.addf %32, %35 : vector<16x1xf32>
    %37 = math.rsqrt %36 : vector<16x1xf32>
    %38 = vector.broadcast %37 : vector<16x1xf32> to vector<16x32xf32>
    %39 = arith.mulf %34, %38 : vector<16x32xf32>
    %40 = vector.broadcast %3 : vector<1x32xf32> to vector<16x32xf32>
    %41 = arith.mulf %39, %40 : vector<16x32xf32>
    %42 = vector.broadcast %5 : vector<1x32xf32> to vector<16x32xf32>
    %43 = arith.addf %41, %42 : vector<16x32xf32>
    %44 = arith.truncf %43 : vector<16x32xf32> to vector<16x32xbf16>
    %45 = vector.shape_cast %44 : vector<16x32xbf16> to vector<1x16x32xbf16>
    %46 = vector.shape_cast %45 : vector<1x16x32xbf16> to vector<1x16x32xbf16>
    %47 = vector.broadcast %46 : vector<1x16x32xbf16> to vector<12x16x32xbf16>
    %cst_39 = arith.constant dense<0.000000e+00> : vector<12x16x8xf32>
    %48 = tpu.matmul %47, %11, %cst_39 {dimension_numbers = #tpu.dot_dimension_numbers<[2], [1], [1], [2], [0, 0, 0, 1, 1, 2], [0], [0]>} : vector<12x16x32xbf16>, vector<12x32x8xbf16>, vector<12x16x8xf32> -> vector<12x16x8xf32>
    %49 = vector.extract_strided_slice %48 {offsets = [0, 0, 0], sizes = [4, 16, 8], strides = [1, 1, 1]} : vector<12x16x8xf32> to vector<4x16x8xf32>
    %50 = vector.extract_strided_slice %48 {offsets = [4, 0, 0], sizes = [4, 16, 8], strides = [1, 1, 1]} : vector<12x16x8xf32> to vector<4x16x8xf32>
    %51 = vector.extract_strided_slice %48 {offsets = [8, 0, 0], sizes = [4, 16, 8], strides = [1, 1, 1]} : vector<12x16x8xf32> to vector<4x16x8xf32>
    %cst_40 = arith.constant dense<0.000000e+00> : vector<4x16x16xf32>
    %52 = tpu.matmul %49, %50, %cst_40 {dimension_numbers = #tpu.dot_dimension_numbers<[2], [2], [1], [1], [0, 0, 0, 1, 1, 1], [0], [0]>} : vector<4x16x8xf32>, vector<4x16x8xf32>, vector<4x16x16xf32> -> vector<4x16x16xf32>
    %53 = vector.shape_cast %1 : vector<16x16xf32> to vector<1x16x16xf32>
    %54 = vector.broadcast %53 : vector<1x16x16xf32> to vector<4x16x16xf32>
    %55 = arith.addf %52, %54 : vector<4x16x16xf32>
    %cst_41 = arith.constant dense<0xFF800000> : vector<4x16xf32>
    %56 = vector.multi_reduction <maximumf>, %55, %cst_41 [2] : vector<4x16x16xf32> to vector<4x16xf32>
    %57 = vector.shape_cast %56 : vector<4x16xf32> to vector<4x16x1xf32>
    %58 = vector.broadcast %57 : vector<4x16x1xf32> to vector<4x16x16xf32>
    %59 = arith.subf %55, %58 : vector<4x16x16xf32>
    %60 = math.exp %59 : vector<4x16x16xf32>
    %cst_42 = arith.constant dense<0.000000e+00> : vector<4x16xf32>
    %61 = vector.multi_reduction <add>, %60, %cst_42 [2] : vector<4x16x16xf32> to vector<4x16xf32>
    %62 = vector.shape_cast %61 : vector<4x16xf32> to vector<4x16x1xf32>
    %63 = vector.broadcast %62 : vector<4x16x1xf32> to vector<4x16x16xf32>
    %64 = arith.divf %60, %63 : vector<4x16x16xf32>
    %cst_43 = arith.constant dense<0.000000e+00> : vector<4x16x8xf32>
    %65 = tpu.matmul %64, %51, %cst_43 {dimension_numbers = #tpu.dot_dimension_numbers<[2], [1], [1], [2], [0, 0, 0, 1, 1, 2], [0], [0]>} : vector<4x16x16xf32>, vector<4x16x8xf32>, vector<4x16x8xf32> -> vector<4x16x8xf32>
    %66 = arith.truncf %65 : vector<4x16x8xf32> to vector<4x16x8xbf16>
    %cst_44 = arith.constant dense<0.000000e+00> : vector<4x16x32xf32>
    %67 = tpu.matmul %66, %13, %cst_44 {dimension_numbers = #tpu.dot_dimension_numbers<[2], [1], [1], [2], [0, 0, 0, 1, 1, 2], [0], [0]>} : vector<4x16x8xbf16>, vector<4x8x32xbf16>, vector<4x16x32xf32> -> vector<4x16x32xf32>
    %cst_45 = arith.constant dense<0.000000e+00> : vector<16x32xf32>
    %68 = vector.multi_reduction <add>, %67, %cst_45 [0] : vector<4x16x32xf32> to vector<16x32xf32>
    %69 = arith.addf %0, %68 : vector<16x32xf32>
    %cst_46 = arith.constant dense<0.000000e+00> : vector<16xf32>
    %70 = vector.multi_reduction <add>, %69, %cst_46 [1] : vector<16x32xf32> to vector<16xf32>
    %71 = vector.shape_cast %70 : vector<16xf32> to vector<16x1xf32>
    %cst_47 = arith.constant 3.200000e+01 : f32
    %72 = vector.broadcast %cst_47 : f32 to vector<16x1xf32>
    %73 = arith.divf %71, %72 : vector<16x1xf32>
    %74 = vector.broadcast %73 : vector<16x1xf32> to vector<16x32xf32>
    %75 = arith.subf %69, %74 : vector<16x32xf32>
    %76 = arith.mulf %75, %75 : vector<16x32xf32>
    %cst_48 = arith.constant dense<0.000000e+00> : vector<16xf32>
    %77 = vector.multi_reduction <add>, %76, %cst_48 [1] : vector<16x32xf32> to vector<16xf32>
    %78 = vector.shape_cast %77 : vector<16xf32> to vector<16x1xf32>
    %cst_49 = arith.constant 3.200000e+01 : f32
    %79 = vector.broadcast %cst_49 : f32 to vector<16x1xf32>
    %80 = arith.divf %78, %79 : vector<16x1xf32>
    %81 = vector.broadcast %73 : vector<16x1xf32> to vector<16x32xf32>
    %82 = arith.subf %69, %81 : vector<16x32xf32>
    %cst_50 = arith.constant 9.99999997E-7 : f32
    %83 = vector.broadcast %cst_50 : f32 to vector<16x1xf32>
    %84 = arith.addf %80, %83 : vector<16x1xf32>
    %85 = math.rsqrt %84 : vector<16x1xf32>
    %86 = vector.broadcast %85 : vector<16x1xf32> to vector<16x32xf32>
    %87 = arith.mulf %82, %86 : vector<16x32xf32>
    %88 = vector.broadcast %7 : vector<1x32xf32> to vector<16x32xf32>
    %89 = arith.mulf %87, %88 : vector<16x32xf32>
    %90 = vector.broadcast %9 : vector<1x32xf32> to vector<16x32xf32>
    %91 = arith.addf %89, %90 : vector<16x32xf32>
    %92 = arith.truncf %91 : vector<16x32xf32> to vector<16x32xbf16>
    %cst_51 = arith.constant dense<0.000000e+00> : vector<16x64xf32>
    %93 = tpu.matmul %92, %15, %cst_51 {dimension_numbers = #tpu.dot_dimension_numbers<[1], [0], [0], [1], [0, 0, 1, 1], [], []>} : vector<16x32xbf16>, vector<32x64xbf16>, vector<16x64xf32> -> vector<16x64xf32>
    %94 = vector.broadcast %17 : vector<1x64xf32> to vector<16x64xf32>
    %95 = arith.addf %93, %94 : vector<16x64xf32>
    %cst_52 = arith.constant 0.000000e+00 : f32
    %96 = vector.broadcast %cst_52 : f32 to vector<16x64xf32>
    %97 = arith.maximumf %95, %96 : vector<16x64xf32>
    %98 = arith.truncf %97 : vector<16x64xf32> to vector<16x64xbf16>
    %cst_53 = arith.constant dense<0.000000e+00> : vector<16x32xf32>
    %99 = tpu.matmul %98, %19, %cst_53 {dimension_numbers = #tpu.dot_dimension_numbers<[1], [0], [0], [1], [0, 0, 1, 1], [], []>} : vector<16x64xbf16>, vector<64x32xbf16>, vector<16x32xf32> -> vector<16x32xf32>
    %100 = vector.broadcast %21 : vector<1x32xf32> to vector<16x32xf32>
    %101 = arith.addf %99, %100 : vector<16x32xf32>
    %102 = arith.addf %69, %101 : vector<16x32xf32>
    %c1 = arith.constant 1 : index
    %c0_54 = arith.constant 0 : index
    %c0_55 = arith.constant 0 : index
    %103 = vector.load %arg2[%c1, %c0_54, %c0_55] : memref<2x1x32xf32, #tpu.memory_space<vmem>>, vector<1x1x32xf32>
    %104 = vector.shape_cast %103 : vector<1x1x32xf32> to vector<1x32xf32>
    %c1_56 = arith.constant 1 : index
    %c0_57 = arith.constant 0 : index
    %c0_58 = arith.constant 0 : index
    %105 = vector.load %arg3[%c1_56, %c0_57, %c0_58] : memref<2x1x32xf32, #tpu.memory_space<vmem>>, vector<1x1x32xf32>
    %106 = vector.shape_cast %105 : vector<1x1x32xf32> to vector<1x32xf32>
    %c1_59 = arith.constant 1 : index
    %c0_60 = arith.constant 0 : index
    %c0_61 = arith.constant 0 : index
    %107 = vector.load %arg6[%c1_59, %c0_60, %c0_61] : memref<2x1x32xf32, #tpu.memory_space<vmem>>, vector<1x1x32xf32>
    %108 = vector.shape_cast %107 : vector<1x1x32xf32> to vector<1x32xf32>
    %c1_62 = arith.constant 1 : index
    %c0_63 = arith.constant 0 : index
    %c0_64 = arith.constant 0 : index
    %109 = vector.load %arg7[%c1_62, %c0_63, %c0_64] : memref<2x1x32xf32, #tpu.memory_space<vmem>>, vector<1x1x32xf32>
    %110 = vector.shape_cast %109 : vector<1x1x32xf32> to vector<1x32xf32>
    %c1_65 = arith.constant 1 : index
    %c0_66 = arith.constant 0 : index
    %c0_67 = arith.constant 0 : index
    %c0_68 = arith.constant 0 : index
    %111 = vector.load %arg4[%c1_65, %c0_66, %c0_67, %c0_68] : memref<2x12x32x8xbf16, #tpu.memory_space<vmem>>, vector<1x12x32x8xbf16>
    %112 = vector.shape_cast %111 : vector<1x12x32x8xbf16> to vector<12x32x8xbf16>
    %c1_69 = arith.constant 1 : index
    %c0_70 = arith.constant 0 : index
    %c0_71 = arith.constant 0 : index
    %c0_72 = arith.constant 0 : index
    %113 = vector.load %arg5[%c1_69, %c0_70, %c0_71, %c0_72] : memref<2x4x8x32xbf16, #tpu.memory_space<vmem>>, vector<1x4x8x32xbf16>
    %114 = vector.shape_cast %113 : vector<1x4x8x32xbf16> to vector<4x8x32xbf16>
    %c1_73 = arith.constant 1 : index
    %c0_74 = arith.constant 0 : index
    %c0_75 = arith.constant 0 : index
    %115 = vector.load %arg8[%c1_73, %c0_74, %c0_75] : memref<2x32x64xbf16, #tpu.memory_space<vmem>>, vector<1x32x64xbf16>
    %116 = vector.shape_cast %115 : vector<1x32x64xbf16> to vector<32x64xbf16>
    %c1_76 = arith.constant 1 : index
    %c0_77 = arith.constant 0 : index
    %c0_78 = arith.constant 0 : index
    %117 = vector.load %arg9[%c1_76, %c0_77, %c0_78] : memref<2x1x64xf32, #tpu.memory_space<vmem>>, vector<1x1x64xf32>
    %118 = vector.shape_cast %117 : vector<1x1x64xf32> to vector<1x64xf32>
    %c1_79 = arith.constant 1 : index
    %c0_80 = arith.constant 0 : index
    %c0_81 = arith.constant 0 : index
    %119 = vector.load %arg10[%c1_79, %c0_80, %c0_81] : memref<2x64x32xbf16, #tpu.memory_space<vmem>>, vector<1x64x32xbf16>
    %120 = vector.shape_cast %119 : vector<1x64x32xbf16> to vector<64x32xbf16>
    %c1_82 = arith.constant 1 : index
    %c0_83 = arith.constant 0 : index
    %c0_84 = arith.constant 0 : index
    %121 = vector.load %arg11[%c1_82, %c0_83, %c0_84] : memref<2x1x32xf32, #tpu.memory_space<vmem>>, vector<1x1x32xf32>
    %122 = vector.shape_cast %121 : vector<1x1x32xf32> to vector<1x32xf32>
    %cst_85 = arith.constant dense<0.000000e+00> : vector<16xf32>
    %123 = vector.multi_reduction <add>, %102, %cst_85 [1] : vector<16x32xf32> to vector<16xf32>
    %124 = vector.shape_cast %123 : vector<16xf32> to vector<16x1xf32>
    %cst_86 = arith.constant 3.200000e+01 : f32
    %125 = vector.broadcast %cst_86 : f32 to vector<16x1xf32>
    %126 = arith.divf %124, %125 : vector<16x1xf32>
    %127 = vector.broadcast %126 : vector<16x1xf32> to vector<16x32xf32>
    %128 = arith.subf %102, %127 : vector<16x32xf32>
    %129 = arith.mulf %128, %128 : vector<16x32xf32>
    %cst_87 = arith.constant dense<0.000000e+00> : vector<16xf32>
    %130 = vector.multi_reduction <add>, %129, %cst_87 [1] : vector<16x32xf32> to vector<16xf32>
    %131 = vector.shape_cast %130 : vector<16xf32> to vector<16x1xf32>
    %cst_88 = arith.constant 3.200000e+01 : f32
    %132 = vector.broadcast %cst_88 : f32 to vector<16x1xf32>
    %133 = arith.divf %131, %132 : vector<16x1xf32>
    %134 = vector.broadcast %126 : vector<16x1xf32> to vector<16x32xf32>
    %135 = arith.subf %102, %134 : vector<16x32xf32>
    %cst_89 = arith.constant 9.99999997E-7 : f32
    %136 = vector.broadcast %cst_89 : f32 to vector<16x1xf32>
    %137 = arith.addf %133, %136 : vector<16x1xf32>
    %138 = math.rsqrt %137 : vector<16x1xf32>
    %139 = vector.broadcast %138 : vector<16x1xf32> to vector<16x32xf32>
    %140 = arith.mulf %135, %139 : vector<16x32xf32>
    %141 = vector.broadcast %104 : vector<1x32xf32> to vector<16x32xf32>
    %142 = arith.mulf %140, %141 : vector<16x32xf32>
    %143 = vector.broadcast %106 : vector<1x32xf32> to vector<16x32xf32>
    %144 = arith.addf %142, %143 : vector<16x32xf32>
    %145 = arith.truncf %144 : vector<16x32xf32> to vector<16x32xbf16>
    %146 = vector.shape_cast %145 : vector<16x32xbf16> to vector<1x16x32xbf16>
    %147 = vector.shape_cast %146 : vector<1x16x32xbf16> to vector<1x16x32xbf16>
    %148 = vector.broadcast %147 : vector<1x16x32xbf16> to vector<12x16x32xbf16>
    %cst_90 = arith.constant dense<0.000000e+00> : vector<12x16x8xf32>
    %149 = tpu.matmul %148, %112, %cst_90 {dimension_numbers = #tpu.dot_dimension_numbers<[2], [1], [1], [2], [0, 0, 0, 1, 1, 2], [0], [0]>} : vector<12x16x32xbf16>, vector<12x32x8xbf16>, vector<12x16x8xf32> -> vector<12x16x8xf32>
    %150 = vector.extract_strided_slice %149 {offsets = [0, 0, 0], sizes = [4, 16, 8], strides = [1, 1, 1]} : vector<12x16x8xf32> to vector<4x16x8xf32>
    %151 = vector.extract_strided_slice %149 {offsets = [4, 0, 0], sizes = [4, 16, 8], strides = [1, 1, 1]} : vector<12x16x8xf32> to vector<4x16x8xf32>
    %152 = vector.extract_strided_slice %149 {offsets = [8, 0, 0], sizes = [4, 16, 8], strides = [1, 1, 1]} : vector<12x16x8xf32> to vector<4x16x8xf32>
    %cst_91 = arith.constant dense<0.000000e+00> : vector<4x16x16xf32>
    %153 = tpu.matmul %150, %151, %cst_91 {dimension_numbers = #tpu.dot_dimension_numbers<[2], [2], [1], [1], [0, 0, 0, 1, 1, 1], [0], [0]>} : vector<4x16x8xf32>, vector<4x16x8xf32>, vector<4x16x16xf32> -> vector<4x16x16xf32>
    %154 = vector.shape_cast %1 : vector<16x16xf32> to vector<1x16x16xf32>
    %155 = vector.broadcast %154 : vector<1x16x16xf32> to vector<4x16x16xf32>
    %156 = arith.addf %153, %155 : vector<4x16x16xf32>
    %cst_92 = arith.constant dense<0xFF800000> : vector<4x16xf32>
    %157 = vector.multi_reduction <maximumf>, %156, %cst_92 [2] : vector<4x16x16xf32> to vector<4x16xf32>
    %158 = vector.shape_cast %157 : vector<4x16xf32> to vector<4x16x1xf32>
    %159 = vector.broadcast %158 : vector<4x16x1xf32> to vector<4x16x16xf32>
    %160 = arith.subf %156, %159 : vector<4x16x16xf32>
    %161 = math.exp %160 : vector<4x16x16xf32>
    %cst_93 = arith.constant dense<0.000000e+00> : vector<4x16xf32>
    %162 = vector.multi_reduction <add>, %161, %cst_93 [2] : vector<4x16x16xf32> to vector<4x16xf32>
    %163 = vector.shape_cast %162 : vector<4x16xf32> to vector<4x16x1xf32>
    %164 = vector.broadcast %163 : vector<4x16x1xf32> to vector<4x16x16xf32>
    %165 = arith.divf %161, %164 : vector<4x16x16xf32>
    %cst_94 = arith.constant dense<0.000000e+00> : vector<4x16x8xf32>
    %166 = tpu.matmul %165, %152, %cst_94 {dimension_numbers = #tpu.dot_dimension_numbers<[2], [1], [1], [2], [0, 0, 0, 1, 1, 2], [0], [0]>} : vector<4x16x16xf32>, vector<4x16x8xf32>, vector<4x16x8xf32> -> vector<4x16x8xf32>
    %167 = arith.truncf %166 : vector<4x16x8xf32> to vector<4x16x8xbf16>
    %cst_95 = arith.constant dense<0.000000e+00> : vector<4x16x32xf32>
    %168 = tpu.matmul %167, %114, %cst_95 {dimension_numbers = #tpu.dot_dimension_numbers<[2], [1], [1], [2], [0, 0, 0, 1, 1, 2], [0], [0]>} : vector<4x16x8xbf16>, vector<4x8x32xbf16>, vector<4x16x32xf32> -> vector<4x16x32xf32>
    %cst_96 = arith.constant dense<0.000000e+00> : vector<16x32xf32>
    %169 = vector.multi_reduction <add>, %168, %cst_96 [0] : vector<4x16x32xf32> to vector<16x32xf32>
    %170 = arith.addf %102, %169 : vector<16x32xf32>
    %cst_97 = arith.constant dense<0.000000e+00> : vector<16xf32>
    %171 = vector.multi_reduction <add>, %170, %cst_97 [1] : vector<16x32xf32> to vector<16xf32>
    %172 = vector.shape_cast %171 : vector<16xf32> to vector<16x1xf32>
    %cst_98 = arith.constant 3.200000e+01 : f32
    %173 = vector.broadcast %cst_98 : f32 to vector<16x1xf32>
    %174 = arith.divf %172, %173 : vector<16x1xf32>
    %175 = vector.broadcast %174 : vector<16x1xf32> to vector<16x32xf32>
    %176 = arith.subf %170, %175 : vector<16x32xf32>
    %177 = arith.mulf %176, %176 : vector<16x32xf32>
    %cst_99 = arith.constant dense<0.000000e+00> : vector<16xf32>
    %178 = vector.multi_reduction <add>, %177, %cst_99 [1] : vector<16x32xf32> to vector<16xf32>
    %179 = vector.shape_cast %178 : vector<16xf32> to vector<16x1xf32>
    %cst_100 = arith.constant 3.200000e+01 : f32
    %180 = vector.broadcast %cst_100 : f32 to vector<16x1xf32>
    %181 = arith.divf %179, %180 : vector<16x1xf32>
    %182 = vector.broadcast %174 : vector<16x1xf32> to vector<16x32xf32>
    %183 = arith.subf %170, %182 : vector<16x32xf32>
    %cst_101 = arith.constant 9.99999997E-7 : f32
    %184 = vector.broadcast %cst_101 : f32 to vector<16x1xf32>
    %185 = arith.addf %181, %184 : vector<16x1xf32>
    %186 = math.rsqrt %185 : vector<16x1xf32>
    %187 = vector.broadcast %186 : vector<16x1xf32> to vector<16x32xf32>
    %188 = arith.mulf %183, %187 : vector<16x32xf32>
    %189 = vector.broadcast %108 : vector<1x32xf32> to vector<16x32xf32>
    %190 = arith.mulf %188, %189 : vector<16x32xf32>
    %191 = vector.broadcast %110 : vector<1x32xf32> to vector<16x32xf32>
    %192 = arith.addf %190, %191 : vector<16x32xf32>
    %193 = arith.truncf %192 : vector<16x32xf32> to vector<16x32xbf16>
    %cst_102 = arith.constant dense<0.000000e+00> : vector<16x64xf32>
    %194 = tpu.matmul %193, %116, %cst_102 {dimension_numbers = #tpu.dot_dimension_numbers<[1], [0], [0], [1], [0, 0, 1, 1], [], []>} : vector<16x32xbf16>, vector<32x64xbf16>, vector<16x64xf32> -> vector<16x64xf32>
    %195 = vector.broadcast %118 : vector<1x64xf32> to vector<16x64xf32>
    %196 = arith.addf %194, %195 : vector<16x64xf32>
    %cst_103 = arith.constant 0.000000e+00 : f32
    %197 = vector.broadcast %cst_103 : f32 to vector<16x64xf32>
    %198 = arith.maximumf %196, %197 : vector<16x64xf32>
    %199 = arith.truncf %198 : vector<16x64xf32> to vector<16x64xbf16>
    %cst_104 = arith.constant dense<0.000000e+00> : vector<16x32xf32>
    %200 = tpu.matmul %199, %120, %cst_104 {dimension_numbers = #tpu.dot_dimension_numbers<[1], [0], [0], [1], [0, 0, 1, 1], [], []>} : vector<16x64xbf16>, vector<64x32xbf16>, vector<16x32xf32> -> vector<16x32xf32>
    %201 = vector.broadcast %122 : vector<1x32xf32> to vector<16x32xf32>
    %202 = arith.addf %200, %201 : vector<16x32xf32>
    %203 = arith.addf %170, %202 : vector<16x32xf32>
    %c0_105 = arith.constant 0 : index
    %c0_106 = arith.constant 0 : index
    %204 = vector.load %arg12[%c0_105, %c0_106] : memref<1x32xf32, #tpu.memory_space<vmem>>, vector<1x32xf32>
    %c0_107 = arith.constant 0 : index
    %c0_108 = arith.constant 0 : index
    %205 = vector.load %arg13[%c0_107, %c0_108] : memref<1x32xf32, #tpu.memory_space<vmem>>, vector<1x32xf32>
    %cst_109 = arith.constant dense<0.000000e+00> : vector<16xf32>
    %206 = vector.multi_reduction <add>, %203, %cst_109 [1] : vector<16x32xf32> to vector<16xf32>
    %207 = vector.shape_cast %206 : vector<16xf32> to vector<16x1xf32>
    %cst_110 = arith.constant 3.200000e+01 : f32
    %208 = vector.broadcast %cst_110 : f32 to vector<16x1xf32>
    %209 = arith.divf %207, %208 : vector<16x1xf32>
    %210 = vector.broadcast %209 : vector<16x1xf32> to vector<16x32xf32>
    %211 = arith.subf %203, %210 : vector<16x32xf32>
    %212 = arith.mulf %211, %211 : vector<16x32xf32>
    %cst_111 = arith.constant dense<0.000000e+00> : vector<16xf32>
    %213 = vector.multi_reduction <add>, %212, %cst_111 [1] : vector<16x32xf32> to vector<16xf32>
    %214 = vector.shape_cast %213 : vector<16xf32> to vector<16x1xf32>
    %cst_112 = arith.constant 3.200000e+01 : f32
    %215 = vector.broadcast %cst_112 : f32 to vector<16x1xf32>
    %216 = arith.divf %214, %215 : vector<16x1xf32>
    %217 = vector.broadcast %209 : vector<16x1xf32> to vector<16x32xf32>
    %218 = arith.subf %203, %217 : vector<16x32xf32>
    %cst_113 = arith.constant 9.99999997E-7 : f32
    %219 = vector.broadcast %cst_113 : f32 to vector<16x1xf32>
    %220 = arith.addf %216, %219 : vector<16x1xf32>
    %221 = math.rsqrt %220 : vector<16x1xf32>
    %222 = vector.broadcast %221 : vector<16x1xf32> to vector<16x32xf32>
    %223 = arith.mulf %218, %222 : vector<16x32xf32>
    %224 = vector.broadcast %204 : vector<1x32xf32> to vector<16x32xf32>
    %225 = arith.mulf %223, %224 : vector<16x32xf32>
    %226 = vector.broadcast %205 : vector<1x32xf32> to vector<16x32xf32>
    %227 = arith.addf %225, %226 : vector<16x32xf32>
    %c0_114 = arith.constant 0 : index
    %c0_115 = arith.constant 0 : index
    %228 = vector.load %arg14[%c0_114, %c0_115] : memref<16x32xf32, #tpu.memory_space<vmem>>, vector<16x32xf32>
    tpu.vector_store %arg14[%c0_114, %c0_115], %227 {strides = array<i32>} : memref<16x32xf32, #tpu.memory_space<vmem>>, vector<16x32xf32>,
    return
  }
}

</mosaic_0001>

<llo_original>
// kernel: encoder_forward.1
$region0: #{encoder_forward.1}
  #allocation0 [shape = 'u32[]', space=smem, size = 0x4, offset = 0x4, fixed_abs, tag = 'smem constant byte address 0x4 - core index']
  #allocation1 [shape = 'u32[144,128]{1,0:T(1,128)}', space=vmem, size = 0x12000, scoped, tag = 'internal scratch']
  %s0 = inlined_call_operand.vmem [shape: f32[16,32], index: 0, kind: input, shape index: {}, may-alias: {0,14}]
  %s1 = inlined_call_operand.vmem [shape: f32[16,16], index: 1, kind: input, shape index: {}]
  %s2 = inlined_call_operand.vmem [shape: f32[2,1,32], index: 2, kind: input, shape index: {}]
  %s3 = inlined_call_operand.vmem [shape: f32[2,1,32], index: 3, kind: input, shape index: {}]
  %s4 = inlined_call_operand.vmem [shape: bf16[2,12,32,8], index: 4, kind: input, shape index: {}]
  %s5 = inlined_call_operand.vmem [shape: bf16[2,4,8,32], index: 5, kind: input, shape index: {}]
  %s6 = inlined_call_operand.vmem [shape: f32[2,1,32], index: 6, kind: input, shape index: {}]
  %s7 = inlined_call_operand.vmem [shape: f32[2,1,32], index: 7, kind: input, shape index: {}]
  %s8 = inlined_call_operand.vmem [shape: bf16[2,32,64], index: 8, kind: input, shape index: {}]
  %s9 = inlined_call_operand.vmem [shape: f32[2,1,64], index: 9, kind: input, shape index: {}]
  %s10 = inlined_call_operand.vmem [shape: bf16[2,64,32], index: 10, kind: input, shape index: {}]
  %s11 = inlined_call_operand.vmem [shape: f32[2,1,32], index: 11, kind: input, shape index: {}]
  %s12 = inlined_call_operand.vmem [shape: f32[1,32], index: 12, kind: input, shape index: {}]
  %s13 = inlined_call_operand.vmem [shape: f32[1,32], index: 13, kind: input, shape index: {}]
  %s14 = inlined_call_operand.vmem [shape: f32[16,32], index: 14, kind: output, shape index: {}, may-alias: {0,14}]
  %s15 = sld [smem:[#allocation0]]
  $region66: #{encoder_forward.1} parent=0
    _
  %s17 = ssub.s32 1, %s15
  %s18 = scalar_select 0, %s17, %s15
  // Predicated region
  $region2: #{encoder_forward.1} parent=0 // pred_check
    _
  $region3: #{encoder_forward.1} parent=0 // pred_check_branch
    %20 = sbr.rel (0) target = $region5
  $region4: #{encoder_forward.1} parent=0 // pred_region
    _
  $region5: #{encoder_forward.1} parent=0 // pred_fallthru
    _
  // Predicated region
  $region6: #{encoder_forward.1} parent=0 // pred_check
    _
  $region7: #{encoder_forward.1} parent=0 // pred_check_branch
    %22 = sbr.rel (0) target = $region9
  $region8: #{encoder_forward.1} parent=0 // pred_region
    _
  $region9: #{encoder_forward.1} parent=0 // pred_fallthru
    _
  // Predicated region
  $region10: #{encoder_forward.1} parent=0 // pred_check
    _
  $region11: #{encoder_forward.1} parent=0 // pred_check_branch
    %24 = sbr.rel (0) target = $region13
  $region12: #{encoder_forward.1} parent=0 // pred_region
    _
  $region13: #{encoder_forward.1} parent=0 // pred_fallthru
    _
  // Predicated region
  $region14: #{encoder_forward.1} parent=0 // pred_check
    _
  $region15: #{encoder_forward.1} parent=0 // pred_check_branch
    %26 = sbr.rel (0) target = $region17
  $region16: #{encoder_forward.1} parent=0 // pred_region
    _
  $region17: #{encoder_forward.1} parent=0 // pred_fallthru
    _
  // Predicated region
  $region18: #{encoder_forward.1} parent=0 // pred_check
    _
  $region19: #{encoder_forward.1} parent=0 // pred_check_branch
    %28 = sbr.rel (0) target = $region21
  $region20: #{encoder_forward.1} parent=0 // pred_region
    _
  $region21: #{encoder_forward.1} parent=0 // pred_fallthru
    _
  // Predicated region
  $region22: #{encoder_forward.1} parent=0 // pred_check
    _
  $region23: #{encoder_forward.1} parent=0 // pred_check_branch
    %30 = sbr.rel (0) target = $region25
  $region24: #{encoder_forward.1} parent=0 // pred_region
    _
  $region25: #{encoder_forward.1} parent=0 // pred_fallthru
    _
  // Predicated region
  $region26: #{encoder_forward.1} parent=0 // pred_check
    _
  $region27: #{encoder_forward.1} parent=0 // pred_check_branch
    %32 = sbr.rel (0) target = $region29
  $region28: #{encoder_forward.1} parent=0 // pred_region
    _
  $region29: #{encoder_forward.1} parent=0 // pred_fallthru
    _
  // Predicated region
  $region30: #{encoder_forward.1} parent=0 // pred_check
    _
  $region31: #{encoder_forward.1} parent=0 // pred_check_branch
    %34 = sbr.rel (0) target = $region33
  $region32: #{encoder_forward.1} parent=0 // pred_region
    _
  $region33: #{encoder_forward.1} parent=0 // pred_fallthru
    _
  // Predicated region
  $region34: #{encoder_forward.1} parent=0 // pred_check
    _
  $region35: #{encoder_forward.1} parent=0 // pred_check_branch
    %36 = sbr.rel (0) target = $region37
  $region36: #{encoder_forward.1} parent=0 // pred_region
    _
  $region37: #{encoder_forward.1} parent=0 // pred_fallthru
    _
  // Predicated region
  $region38: #{encoder_forward.1} parent=0 // pred_check
    _
  $region39: #{encoder_forward.1} parent=0 // pred_check_branch
    %38 = sbr.rel (0) target = $region41
  $region40: #{encoder_forward.1} parent=0 // pred_region
    _
  $region41: #{encoder_forward.1} parent=0 // pred_fallthru
    _
  // Predicated region
  $region42: #{encoder_forward.1} parent=0 // pred_check
    _
  $region43: #{encoder_forward.1} parent=0 // pred_check_branch
    %40 = sbr.rel (0) target = $region45
  $region44: #{encoder_forward.1} parent=0 // pred_region
    _
  $region45: #{encoder_forward.1} parent=0 // pred_fallthru
    _
  // Predicated region
  $region46: #{encoder_forward.1} parent=0 // pred_check
    _
  $region47: #{encoder_forward.1} parent=0 // pred_check_branch
    %42 = sbr.rel (0) target = $region49
  $region48: #{encoder_forward.1} parent=0 // pred_region
    _
  $region49: #{encoder_forward.1} parent=0 // pred_fallthru
    _
  // Predicated region
  $region50: #{encoder_forward.1} parent=0 // pred_check
    _
  $region51: #{encoder_forward.1} parent=0 // pred_check_branch
    %44 = sbr.rel (0) target = $region53
  $region52: #{encoder_forward.1} parent=0 // pred_region
    _
  $region53: #{encoder_forward.1} parent=0 // pred_fallthru
    _
  // Predicated region
  $region54: #{encoder_forward.1} parent=0 // pred_check
    _
  $region55: #{encoder_forward.1} parent=0 // pred_check_branch
    %46 = sbr.rel (0) target = $region57
  $region56: #{encoder_forward.1} parent=0 // pred_region
    _
  $region57: #{encoder_forward.1} parent=0 // pred_fallthru
    _
  %v48 = vld [vmem:[%s0] sm:$0xff]
  %v49 = vld [vmem:[%s0 + $0x8] sm:$0xff]
  %v50 = vld [vmem:[%s1] sm:$0xff]
  %v51 = vld [vmem:[%s1 + $0x8] sm:$0xff]
  %v52 = vld [vmem:[%s2] sm:$0x1]
  %v53 = vld [vmem:[%s3] sm:$0x1]
  %v54 = vld [vmem:[%s6] sm:$0x1]
  %v55 = vld [vmem:[%s7] sm:$0x1]
  %v56 = vld [vmem:[%s4] sm:$0xf]
  %v57 = vld [vmem:[%s4 + $0x4] sm:$0xf]
  %v58 = vld [vmem:[%s4 + $0x8] sm:$0xf]
  %v59 = vld [vmem:[%s4 + $0xc] sm:$0xf]
  %v60 = vld [vmem:[%s4 + $0x10] sm:$0xf]
  %v61 = vld [vmem:[%s4 + $0x14] sm:$0xf]
  %v62 = vld [vmem:[%s4 + $0x18] sm:$0xf]
  %v63 = vld [vmem:[%s4 + $0x1c] sm:$0xf]
  %v64 = vld [vmem:[%s4 + $0x20] sm:$0xf]
  %v65 = vld [vmem:[%s4 + $0x24] sm:$0xf]
  %v66 = vld [vmem:[%s4 + $0x28] sm:$0xf]
  %v67 = vld [vmem:[%s4 + $0x2c] sm:$0xf]
  %v68 = vld [vmem:[%s4 + $0x30] sm:$0xf]
  %v69 = vld [vmem:[%s4 + $0x34] sm:$0xf]
  %v70 = vld [vmem:[%s4 + $0x38] sm:$0xf]
  %v71 = vld [vmem:[%s4 + $0x3c] sm:$0xf]
  %v72 = vld [vmem:[%s4 + $0x40] sm:$0xf]
  %v73 = vld [vmem:[%s4 + $0x44] sm:$0xf]
  %v74 = vld [vmem:[%s4 + $0x48] sm:$0xf]
  %v75 = vld [vmem:[%s4 + $0x4c] sm:$0xf]
  %v76 = vld [vmem:[%s4 + $0x50] sm:$0xf]
  %v77 = vld [vmem:[%s4 + $0x54] sm:$0xf]
  %v78 = vld [vmem:[%s4 + $0x58] sm:$0xf]
  %v79 = vld [vmem:[%s4 + $0x5c] sm:$0xf]
  %v80 = vld [vmem:[%s4 + $0x60] sm:$0xf]
  %v81 = vld [vmem:[%s4 + $0x64] sm:$0xf]
  %v82 = vld [vmem:[%s4 + $0x68] sm:$0xf]
  %v83 = vld [vmem:[%s4 + $0x6c] sm:$0xf]
  %v84 = vld [vmem:[%s4 + $0x70] sm:$0xf]
  %v85 = vld [vmem:[%s4 + $0x74] sm:$0xf]
  %v86 = vld [vmem:[%s4 + $0x78] sm:$0xf]
  %v87 = vld [vmem:[%s4 + $0x7c] sm:$0xf]
  %v88 = vld [vmem:[%s4 + $0x80] sm:$0xf]
  %v89 = vld [vmem:[%s4 + $0x84] sm:$0xf]
  %v90 = vld [vmem:[%s4 + $0x88] sm:$0xf]
  %v91 = vld [vmem:[%s4 + $0x8c] sm:$0xf]
  %v92 = vld [vmem:[%s4 + $0x90] sm:$0xf]
  %v93 = vld [vmem:[%s4 + $0x94] sm:$0xf]
  %v94 = vld [vmem:[%s4 + $0x98] sm:$0xf]
  %v95 = vld [vmem:[%s4 + $0x9c] sm:$0xf]
  %v96 = vld [vmem:[%s4 + $0xa0] sm:$0xf]
  %v97 = vld [vmem:[%s4 + $0xa4] sm:$0xf]
  %v98 = vld [vmem:[%s4 + $0xa8] sm:$0xf]
  %v99 = vld [vmem:[%s4 + $0xac] sm:$0xf]
  %v100 = vld [vmem:[%s4 + $0xb0] sm:$0xf]
  %v101 = vld [vmem:[%s4 + $0xb4] sm:$0xf]
  %v102 = vld [vmem:[%s4 + $0xb8] sm:$0xf]
  %v103 = vld [vmem:[%s4 + $0xbc] sm:$0xf]
  %v104 = vld [vmem:[%s5] sm:$0xf]
  %v105 = vld [vmem:[%s5 + $0x4] sm:$0xf]
  %v106 = vld [vmem:[%s5 + $0x8] sm:$0xf]
  %v107 = vld [vmem:[%s5 + $0xc] sm:$0xf]
  %v108 = vld [vmem:[%s8] sm:$0xf]
  %v109 = vld [vmem:[%s8 + $0x4] sm:$0xf]
  %v110 = vld [vmem:[%s8 + $0x8] sm:$0xf]
  %v111 = vld [vmem:[%s8 + $0xc] sm:$0xf]
  %v112 = vld [vmem:[%s9] sm:$0x1]
  %v113 = vld [vmem:[%s10] sm:$0xf]
  %v114 = vld [vmem:[%s10 + $0x4] sm:$0xf]
  %v115 = vld [vmem:[%s10 + $0x8] sm:$0xf]
  %v116 = vld [vmem:[%s10 + $0xc] sm:$0xf]
  %v117 = vld [vmem:[%s10 + $0x10] sm:$0xf]
  %v118 = vld [vmem:[%s10 + $0x14] sm:$0xf]
  %v119 = vld [vmem:[%s10 + $0x18] sm:$0xf]
  %v120 = vld [vmem:[%s10 + $0x1c] sm:$0xf]
  %v121 = vld [vmem:[%s11] sm:$0x1]
  %vm122 = vcmask 261120
  %v123 = vsel %vm122, %v48, 0.0
  %124 = vadd.xlane.f32.xlu0 %v123
  %v125 = vpop.xlane.xlu0 %124
  %v126 = vsel %vm122, %v49, 0.0
  %127 = vadd.xlane.f32.xlu0 %v126
  %v128 = vpop.xlane.xlu0 %127
  %v129 = vrcp.pop 32.0
  %v130 = vmul.f32 %v125, %v129
  %v131 = vmul.f32 %v128, %v129
  %v132 = vsub.f32 %v48, %v130
  %v133 = vsub.f32 %v49, %v131
  %v134 = vmul.f32 %v132, %v132
  %v135 = vmul.f32 %v133, %v133
  %v136 = vsel %vm122, %v134, 0.0
  %137 = vadd.xlane.f32.xlu0 %v136
  %v138 = vpop.xlane.xlu0 %137
  %v139 = vsel %vm122, %v135, 0.0
  %140 = vadd.xlane.f32.xlu0 %v139
  %v141 = vpop.xlane.xlu0 %140
  %v142 = vmul.f32 %v138, %v129
  %v143 = vmul.f32 %v141, %v129
  %v144 = vadd.f32 %v142, 1e-06
  %v145 = vadd.f32 %v143, 1e-06
  %v146 = vrsqrt.pop %v144
  %v147 = vrsqrt.pop %v145
  %v148 = vmul.f32 %v132, %v146
  %v149 = vmul.f32 %v133, %v147
  %v151 = vlaneseq
  %v152 = vshrl.u32 %v151, 7
  %v153 = vsub.s32 0, %v152
  %v154 = vrot.slane %v52, %v153
  %v156 = vmul.f32 %v148, %v154
  %v157 = vmul.f32 %v149, %v154
  %v159 = vlaneseq
  %v160 = vshrl.u32 %v159, 7
  %v161 = vsub.s32 0, %v160
  %v162 = vrot.slane %v53, %v161
  %v164 = vadd.f32 %v156, %v162
  %v165 = vadd.f32 %v157, %v162
  %v166 = vpack.c.bf16 %v165, %v164
  %v171 = vunpack.c.l.b16 %v56
  %v172 = vunpack.c.l.b16 %v57
  %v173 = vunpack.c.l.b16 %v58
  %v174 = vunpack.c.l.b16 %v59
  %v175 = vpack.c.b16 %v172, %v171
  %v176 = vpack.c.b16 %v174, %v173
  %v180 = vsel %vm122, %v166, 0
  %182 = vmatprep.subr.bf16.mxu0 0
  %183 = vmatpush1.bf16.msra.mxu0 0
  %184 = vmatprep.subr.bf16.mxu0 0
  %185 = vmatpush1.bf16.msra.mxu0 0
  %186 = vmatprep.subr.bf16.mxu0 0
  %187 = vmatpush1.bf16.msra.mxu0 0
  %188 = vmatprep.subr.bf16.mxu0 0
  %189 = vmatpush1.bf16.msra.mxu0 0
  %190 = vmatprep.subr.bf16.mxu0 0
  %191 = vmatpush1.bf16.msra.mxu0 0
  %192 = vmatprep.subr.bf16.mxu0 0
  %193 = vmatpush1.bf16.msra.mxu0 0
  %194 = vmatprep.subr.bf16.mxu0 0
  %195 = vmatpush1.bf16.msra.mxu0 %v176
  %196 = vmatprep.subr.bf16.mxu0 0
  %197 = vmatpush1.bf16.msra.mxu0 %v175
  %198 = vmatprep.subr.bf16.mxu0 0
  %199 = vmatpush2.bf16.msra.mxu0 0
  %200 = vmatprep.subr.bf16.mxu0 0
  %201 = vmatpush2.bf16.msra.mxu0 0
  %202 = vmatprep.subr.bf16.mxu0 0
  %203 = vmatpush2.bf16.msra.mxu0 0
  %204 = vmatprep.subr.bf16.mxu0 0
  %205 = vmatpush2.bf16.msra.mxu0 0
  %206 = vmatprep.subr.bf16.mxu0 0
  %207 = vmatpush2.bf16.msra.mxu0 0
  %208 = vmatprep.subr.bf16.mxu0 0
  %209 = vmatpush2.bf16.msra.mxu0 0
  %210 = vmatprep.subr.bf16.mxu0 0
  %211 = vmatpush2.bf16.msra.mxu0 0
  %212 = vmatprep.subr.bf16.mxu0 0
  %213 = vmatpush2.bf16.msra.mxu0 0
  %214 = vmatprep.mubr.bf16.mxu0 0
  %215 = vmatmul.mubr.bf16.gmra.mxu0 %v180
  %v216 = vpop.f32.mrf.mxu0
  %v217 = vadd.f32 0.0, %v216
  %v218 = vpop.f32.mrf.mxu0
  %v219 = vpop.f32.mrf.mxu0
  %v220 = vadd.f32 0.0, %v219
  %v221 = vpop.f32.mrf.mxu0
  %222 = vdwg.mxu0
  %v227 = vunpack.c.l.b16 %v60
  %v228 = vunpack.c.l.b16 %v61
  %v229 = vunpack.c.l.b16 %v62
  %v230 = vunpack.c.l.b16 %v63
  %v231 = vpack.c.b16 %v228, %v227
  %v232 = vpack.c.b16 %v230, %v229
  %235 = vmatprep.subr.bf16.mxu0 0
  %236 = vmatpush1.bf16.msra.mxu0 0
  %237 = vmatprep.subr.bf16.mxu0 0
  %238 = vmatpush1.bf16.msra.mxu0 0
  %239 = vmatprep.subr.bf16.mxu0 0
  %240 = vmatpush1.bf16.msra.mxu0 0
  %241 = vmatprep.subr.bf16.mxu0 0
  %242 = vmatpush1.bf16.msra.mxu0 0
  %243 = vmatprep.subr.bf16.mxu0 0
  %244 = vmatpush1.bf16.msra.mxu0 0
  %245 = vmatprep.subr.bf16.mxu0 0
  %246 = vmatpush1.bf16.msra.mxu0 0
  %247 = vmatprep.subr.bf16.mxu0 0
  %248 = vmatpush1.bf16.msra.mxu0 %v232
  %249 = vmatprep.subr.bf16.mxu0 0
  %250 = vmatpush1.bf16.msra.mxu0 %v231
  %251 = vmatprep.subr.bf16.mxu0 0
  %252 = vmatpush2.bf16.msra.mxu0 0
  %253 = vmatprep.subr.bf16.mxu0 0
  %254 = vmatpush2.bf16.msra.mxu0 0
  %255 = vmatprep.subr.bf16.mxu0 0
  %256 = vmatpush2.bf16.msra.mxu0 0
  %257 = vmatprep.subr.bf16.mxu0 0
  %258 = vmatpush2.bf16.msra.mxu0 0
  %259 = vmatprep.subr.bf16.mxu0 0
  %260 = vmatpush2.bf16.msra.mxu0 0
  %261 = vmatprep.subr.bf16.mxu0 0
  %262 = vmatpush2.bf16.msra.mxu0 0
  %263 = vmatprep.subr.bf16.mxu0 0
  %264 = vmatpush2.bf16.msra.mxu0 0
  %265 = vmatprep.subr.bf16.mxu0 0
  %266 = vmatpush2.bf16.msra.mxu0 0
  %267 = vmatprep.mubr.bf16.mxu0 0
  %268 = vmatmul.mubr.bf16.gmra.mxu0 %v180
  %v269 = vpop.f32.mrf.mxu0
  %v270 = vadd.f32 0.0, %v269
  %v271 = vpop.f32.mrf.mxu0
  %v272 = vpop.f32.mrf.mxu0
  %v273 = vadd.f32 0.0, %v272
  %v274 = vpop.f32.mrf.mxu0
  %275 = vdwg.mxu0
  %v280 = vunpack.c.l.b16 %v64
  %v281 = vunpack.c.l.b16 %v65
  %v282 = vunpack.c.l.b16 %v66
  %v283 = vunpack.c.l.b16 %v67
  %v284 = vpack.c.b16 %v281, %v280
  %v285 = vpack.c.b16 %v283, %v282
  %288 = vmatprep.subr.bf16.mxu0 0
  %289 = vmatpush1.bf16.msra.mxu0 0
  %290 = vmatprep.subr.bf16.mxu0 0
  %291 = vmatpush1.bf16.msra.mxu0 0
  %292 = vmatprep.subr.bf16.mxu0 0
  %293 = vmatpush1.bf16.msra.mxu0 0
  %294 = vmatprep.subr.bf16.mxu0 0
  %295 = vmatpush1.bf16.msra.mxu0 0
  %296 = vmatprep.subr.bf16.mxu0 0
  %297 = vmatpush1.bf16.msra.mxu0 0
  %298 = vmatprep.subr.bf16.mxu0 0
  %299 = vmatpush1.bf16.msra.mxu0 0
  %300 = vmatprep.subr.bf16.mxu0 0
  %301 = vmatpush1.bf16.msra.mxu0 %v285
  %302 = vmatprep.subr.bf16.mxu0 0
  %303 = vmatpush1.bf16.msra.mxu0 %v284
  %304 = vmatprep.subr.bf16.mxu0 0
  %305 = vmatpush2.bf16.msra.mxu0 0
  %306 = vmatprep.subr.bf16.mxu0 0
  %307 = vmatpush2.bf16.msra.mxu0 0
  %308 = vmatprep.subr.bf16.mxu0 0
  %309 = vmatpush2.bf16.msra.mxu0 0
  %310 = vmatprep.subr.bf16.mxu0 0
  %311 = vmatpush2.bf16.msra.mxu0 0
  %312 = vmatprep.subr.bf16.mxu0 0
  %313 = vmatpush2.bf16.msra.mxu0 0
  %314 = vmatprep.subr.bf16.mxu0 0
  %315 = vmatpush2.bf16.msra.mxu0 0
  %316 = vmatprep.subr.bf16.mxu0 0
  %317 = vmatpush2.bf16.msra.mxu0 0
  %318 = vmatprep.subr.bf16.mxu0 0
  %319 = vmatpush2.bf16.msra.mxu0 0
  %320 = vmatprep.mubr.bf16.mxu0 0
  %321 = vmatmul.mubr.bf16.gmra.mxu0 %v180
  %v322 = vpop.f32.mrf.mxu0
  %v323 = vadd.f32 0.0, %v322
  %v324 = vpop.f32.mrf.mxu0
  %v325 = vpop.f32.mrf.mxu0
  %v326 = vadd.f32 0.0, %v325
  %v327 = vpop.f32.mrf.mxu0
  %328 = vdwg.mxu0
  %v333 = vunpack.c.l.b16 %v68
  %v334 = vunpack.c.l.b16 %v69
  %v335 = vunpack.c.l.b16 %v70
  %v336 = vunpack.c.l.b16 %v71
  %v337 = vpack.c.b16 %v334, %v333
  %v338 = vpack.c.b16 %v336, %v335
  %341 = vmatprep.subr.bf16.mxu0 0
  %342 = vmatpush1.bf16.msra.mxu0 0
  %343 = vmatprep.subr.bf16.mxu0 0
  %344 = vmatpush1.bf16.msra.mxu0 0
  %345 = vmatprep.subr.bf16.mxu0 0
  %346 = vmatpush1.bf16.msra.mxu0 0
  %347 = vmatprep.subr.bf16.mxu0 0
  %348 = vmatpush1.bf16.msra.mxu0 0
  %349 = vmatprep.subr.bf16.mxu0 0
  %350 = vmatpush1.bf16.msra.mxu0 0
  %351 = vmatprep.subr.bf16.mxu0 0
  %352 = vmatpush1.bf16.msra.mxu0 0
  %353 = vmatprep.subr.bf16.mxu0 0
  %354 = vmatpush1.bf16.msra.mxu0 %v338
  %355 = vmatprep.subr.bf16.mxu0 0
  %356 = vmatpush1.bf16.msra.mxu0 %v337
  %357 = vmatprep.subr.bf16.mxu0 0
  %358 = vmatpush2.bf16.msra.mxu0 0
  %359 = vmatprep.subr.bf16.mxu0 0
  %360 = vmatpush2.bf16.msra.mxu0 0
  %361 = vmatprep.subr.bf16.mxu0 0
  %362 = vmatpush2.bf16.msra.mxu0 0
  %363 = vmatprep.subr.bf16.mxu0 0
  %364 = vmatpush2.bf16.msra.mxu0 0
  %365 = vmatprep.subr.bf16.mxu0 0
  %366 = vmatpush2.bf16.msra.mxu0 0
  %367 = vmatprep.subr.bf16.mxu0 0
  %368 = vmatpush2.bf16.msra.mxu0 0
  %369 = vmatprep.subr.bf16.mxu0 0
  %370 = vmatpush2.bf16.msra.mxu0 0
  %371 = vmatprep.subr.bf16.mxu0 0
  %372 = vmatpush2.bf16.msra.mxu0 0
  %373 = vmatprep.mubr.bf16.mxu0 0
  %374 = vmatmul.mubr.bf16.gmra.mxu0 %v180
  %v375 = vpop.f32.mrf.mxu0
  %v376 = vadd.f32 0.0, %v375
  %v377 = vpop.f32.mrf.mxu0
  %v378 = vpop.f32.mrf.mxu0
  %v379 = vadd.f32 0.0, %v378
  %v380 = vpop.f32.mrf.mxu0
  %381 = vdwg.mxu0
  %v386 = vunpack.c.l.b16 %v72
  %v387 = vunpack.c.l.b16 %v73
  %v388 = vunpack.c.l.b16 %v74
  %v389 = vunpack.c.l.b16 %v75
  %v390 = vpack.c.b16 %v387, %v386
  %v391 = vpack.c.b16 %v389, %v388
  %394 = vmatprep.subr.bf16.mxu0 0
  %395 = vmatpush1.bf16.msra.mxu0 0
  %396 = vmatprep.subr.bf16.mxu0 0
  %397 = vmatpush1.bf16.msra.mxu0 0
  %398 = vmatprep.subr.bf16.mxu0 0
  %399 = vmatpush1.bf16.msra.mxu0 0
  %400 = vmatprep.subr.bf16.mxu0 0
  %401 = vmatpush1.bf16.msra.mxu0 0
  %402 = vmatprep.subr.bf16.mxu0 0
  %403 = vmatpush1.bf16.msra.mxu0 0
  %404 = vmatprep.subr.bf16.mxu0 0
  %405 = vmatpush1.bf16.msra.mxu0 0
  %406 = vmatprep.subr.bf16.mxu0 0
  %407 = vmatpush1.bf16.msra.mxu0 %v391
  %408 = vmatprep.subr.bf16.mxu0 0
  %409 = vmatpush1.bf16.msra.mxu0 %v390
  %410 = vmatprep.subr.bf16.mxu0 0
  %411 = vmatpush2.bf16.msra.mxu0 0
  %412 = vmatprep.subr.bf16.mxu0 0
  %413 = vmatpush2.bf16.msra.mxu0 0
  %414 = vmatprep.subr.bf16.mxu0 0
  %415 = vmatpush2.bf16.msra.mxu0 0
  %416 = vmatprep.subr.bf16.mxu0 0
  %417 = vmatpush2.bf16.msra.mxu0 0
  %418 = vmatprep.subr.bf16.mxu0 0
  %419 = vmatpush2.bf16.msra.mxu0 0
  %420 = vmatprep.subr.bf16.mxu0 0
  %421 = vmatpush2.bf16.msra.mxu0 0
  %422 = vmatprep.subr.bf16.mxu0 0
  %423 = vmatpush2.bf16.msra.mxu0 0
  %424 = vmatprep.subr.bf16.mxu0 0
  %425 = vmatpush2.bf16.msra.mxu0 0
  %426 = vmatprep.mubr.bf16.mxu0 0
  %427 = vmatmul.mubr.bf16.gmra.mxu0 %v180
  %v428 = vpop.f32.mrf.mxu0
  %v429 = vadd.f32 0.0, %v428
  %v430 = vpop.f32.mrf.mxu0
  %v431 = vpop.f32.mrf.mxu0
  %v432 = vadd.f32 0.0, %v431
  %v433 = vpop.f32.mrf.mxu0
  %434 = vdwg.mxu0
  %v439 = vunpack.c.l.b16 %v76
  %v440 = vunpack.c.l.b16 %v77
  %v441 = vunpack.c.l.b16 %v78
  %v442 = vunpack.c.l.b16 %v79
  %v443 = vpack.c.b16 %v440, %v439
  %v444 = vpack.c.b16 %v442, %v441
  %447 = vmatprep.subr.bf16.mxu0 0
  %448 = vmatpush1.bf16.msra.mxu0 0
  %449 = vmatprep.subr.bf16.mxu0 0
  %450 = vmatpush1.bf16.msra.mxu0 0
  %451 = vmatprep.subr.bf16.mxu0 0
  %452 = vmatpush1.bf16.msra.mxu0 0
  %453 = vmatprep.subr.bf16.mxu0 0
  %454 = vmatpush1.bf16.msra.mxu0 0
  %455 = vmatprep.subr.bf16.mxu0 0
  %456 = vmatpush1.bf16.msra.mxu0 0
  %457 = vmatprep.subr.bf16.mxu0 0
  %458 = vmatpush1.bf16.msra.mxu0 0
  %459 = vmatprep.subr.bf16.mxu0 0
  %460 = vmatpush1.bf16.msra.mxu0 %v444
  %461 = vmatprep.subr.bf16.mxu0 0
  %462 = vmatpush1.bf16.msra.mxu0 %v443
  %463 = vmatprep.subr.bf16.mxu0 0
  %464 = vmatpush2.bf16.msra.mxu0 0
  %465 = vmatprep.subr.bf16.mxu0 0
  %466 = vmatpush2.bf16.msra.mxu0 0
  %467 = vmatprep.subr.bf16.mxu0 0
  %468 = vmatpush2.bf16.msra.mxu0 0
  %469 = vmatprep.subr.bf16.mxu0 0
  %470 = vmatpush2.bf16.msra.mxu0 0
  %471 = vmatprep.subr.bf16.mxu0 0
  %472 = vmatpush2.bf16.msra.mxu0 0
  %473 = vmatprep.subr.bf16.mxu0 0
  %474 = vmatpush2.bf16.msra.mxu0 0
  %475 = vmatprep.subr.bf16.mxu0 0
  %476 = vmatpush2.bf16.msra.mxu0 0
  %477 = vmatprep.subr.bf16.mxu0 0
  %478 = vmatpush2.bf16.msra.mxu0 0
  %479 = vmatprep.mubr.bf16.mxu0 0
  %480 = vmatmul.mubr.bf16.gmra.mxu0 %v180
  %v481 = vpop.f32.mrf.mxu0
  %v482 = vadd.f32 0.0, %v481
  %v483 = vpop.f32.mrf.mxu0
  %v484 = vpop.f32.mrf.mxu0
  %v485 = vadd.f32 0.0, %v484
  %v486 = vpop.f32.mrf.mxu0
  %487 = vdwg.mxu0
  %v492 = vunpack.c.l.b16 %v80
  %v493 = vunpack.c.l.b16 %v81
  %v494 = vunpack.c.l.b16 %v82
  %v495 = vunpack.c.l.b16 %v83
  %v496 = vpack.c.b16 %v493, %v492
  %v497 = vpack.c.b16 %v495, %v494
  %500 = vmatprep.subr.bf16.mxu0 0
  %501 = vmatpush1.bf16.msra.mxu0 0
  %502 = vmatprep.subr.bf16.mxu0 0
  %503 = vmatpush1.bf16.msra.mxu0 0
  %504 = vmatprep.subr.bf16.mxu0 0
  %505 = vmatpush1.bf16.msra.mxu0 0
  %506 = vmatprep.subr.bf16.mxu0 0
  %507 = vmatpush1.bf16.msra.mxu0 0
  %508 = vmatprep.subr.bf16.mxu0 0
  %509 = vmatpush1.bf16.msra.mxu0 0
  %510 = vmatprep.subr.bf16.mxu0 0
  %511 = vmatpush1.bf16.msra.mxu0 0
  %512 = vmatprep.subr.bf16.mxu0 0
  %513 = vmatpush1.bf16.msra.mxu0 %v497
  %514 = vmatprep.subr.bf16.mxu0 0
  %515 = vmatpush1.bf16.msra.mxu0 %v496
  %516 = vmatprep.subr.bf16.mxu0 0
  %517 = vmatpush2.bf16.msra.mxu0 0
  %518 = vmatprep.subr.bf16.mxu0 0
  %519 = vmatpush2.bf16.msra.mxu0 0
  %520 = vmatprep.subr.bf16.mxu0 0
  %521 = vmatpush2.bf16.msra.mxu0 0
  %522 = vmatprep.subr.bf16.mxu0 0
  %523 = vmatpush2.bf16.msra.mxu0 0
  %524 = vmatprep.subr.bf16.mxu0 0
  %525 = vmatpush2.bf16.msra.mxu0 0
  %526 = vmatprep.subr.bf16.mxu0 0
  %527 = vmatpush2.bf16.msra.mxu0 0
  %528 = vmatprep.subr.bf16.mxu0 0
  %529 = vmatpush2.bf16.msra.mxu0 0
  %530 = vmatprep.subr.bf16.mxu0 0
  %531 = vmatpush2.bf16.msra.mxu0 0
  %532 = vmatprep.mubr.bf16.mxu0 0
  %533 = vmatmul.mubr.bf16.gmra.mxu0 %v180
  %v534 = vpop.f32.mrf.mxu0
  %v535 = vadd.f32 0.0, %v534
  %v536 = vpop.f32.mrf.mxu0
  %v537 = vpop.f32.mrf.mxu0
  %v538 = vadd.f32 0.0, %v537
  %v539 = vpop.f32.mrf.mxu0
  %540 = vdwg.mxu0
  %v545 = vunpack.c.l.b16 %v84
  %v546 = vunpack.c.l.b16 %v85
  %v547 = vunpack.c.l.b16 %v86
  %v548 = vunpack.c.l.b16 %v87
  %v549 = vpack.c.b16 %v546, %v545
  %v550 = vpack.c.b16 %v548, %v547
  %553 = vmatprep.subr.bf16.mxu0 0
  %554 = vmatpush1.bf16.msra.mxu0 0
  %555 = vmatprep.subr.bf16.mxu0 0
  %556 = vmatpush1.bf16.msra.mxu0 0
  %557 = vmatprep.subr.bf16.mxu0 0
  %558 = vmatpush1.bf16.msra.mxu0 0
  %559 = vmatprep.subr.bf16.mxu0 0
  %560 = vmatpush1.bf16.msra.mxu0 0
  %561 = vmatprep.subr.bf16.mxu0 0
  %562 = vmatpush1.bf16.msra.mxu0 0
  %563 = vmatprep.subr.bf16.mxu0 0
  %564 = vmatpush1.bf16.msra.mxu0 0
  %565 = vmatprep.subr.bf16.mxu0 0
  %566 = vmatpush1.bf16.msra.mxu0 %v550
  %567 = vmatprep.subr.bf16.mxu0 0
  %568 = vmatpush1.bf16.msra.mxu0 %v549
  %569 = vmatprep.subr.bf16.mxu0 0
  %570 = vmatpush2.bf16.msra.mxu0 0
  %571 = vmatprep.subr.bf16.mxu0 0
  %572 = vmatpush2.bf16.msra.mxu0 0
  %573 = vmatprep.subr.bf16.mxu0 0
  %574 = vmatpush2.bf16.msra.mxu0 0
  %575 = vmatprep.subr.bf16.mxu0 0
  %576 = vmatpush2.bf16.msra.mxu0 0
  %577 = vmatprep.subr.bf16.mxu0 0
  %578 = vmatpush2.bf16.msra.mxu0 0
  %579 = vmatprep.subr.bf16.mxu0 0
  %580 = vmatpush2.bf16.msra.mxu0 0
  %581 = vmatprep.subr.bf16.mxu0 0
  %582 = vmatpush2.bf16.msra.mxu0 0
  %583 = vmatprep.subr.bf16.mxu0 0
  %584 = vmatpush2.bf16.msra.mxu0 0
  %585 = vmatprep.mubr.bf16.mxu0 0
  %586 = vmatmul.mubr.bf16.gmra.mxu0 %v180
  %v587 = vpop.f32.mrf.mxu0
  %v588 = vadd.f32 0.0, %v587
  %v589 = vpop.f32.mrf.mxu0
  %v590 = vpop.f32.mrf.mxu0
  %v591 = vadd.f32 0.0, %v590
  %v592 = vpop.f32.mrf.mxu0
  %593 = vdwg.mxu0
  %v598 = vunpack.c.l.b16 %v88
  %v599 = vunpack.c.l.b16 %v89
  %v600 = vunpack.c.l.b16 %v90
  %v601 = vunpack.c.l.b16 %v91
  %v602 = vpack.c.b16 %v599, %v598
  %v603 = vpack.c.b16 %v601, %v600
  %606 = vmatprep.subr.bf16.mxu0 0
  %607 = vmatpush1.bf16.msra.mxu0 0
  %608 = vmatprep.subr.bf16.mxu0 0
  %609 = vmatpush1.bf16.msra.mxu0 0
  %610 = vmatprep.subr.bf16.mxu0 0
  %611 = vmatpush1.bf16.msra.mxu0 0
  %612 = vmatprep.subr.bf16.mxu0 0
  %613 = vmatpush1.bf16.msra.mxu0 0
  %614 = vmatprep.subr.bf16.mxu0 0
  %615 = vmatpush1.bf16.msra.mxu0 0
  %616 = vmatprep.subr.bf16.mxu0 0
  %617 = vmatpush1.bf16.msra.mxu0 0
  %618 = vmatprep.subr.bf16.mxu0 0
  %619 = vmatpush1.bf16.msra.mxu0 %v603
  %620 = vmatprep.subr.bf16.mxu0 0
  %621 = vmatpush1.bf16.msra.mxu0 %v602
  %622 = vmatprep.subr.bf16.mxu0 0
  %623 = vmatpush2.bf16.msra.mxu0 0
  %624 = vmatprep.subr.bf16.mxu0 0
  %625 = vmatpush2.bf16.msra.mxu0 0
  %626 = vmatprep.subr.bf16.mxu0 0
  %627 = vmatpush2.bf16.msra.mxu0 0
  %628 = vmatprep.subr.bf16.mxu0 0
  %629 = vmatpush2.bf16.msra.mxu0 0
  %630 = vmatprep.subr.bf16.mxu0 0
  %631 = vmatpush2.bf16.msra.mxu0 0
  %632 = vmatprep.subr.bf16.mxu0 0
  %633 = vmatpush2.bf16.msra.mxu0 0
  %634 = vmatprep.subr.bf16.mxu0 0
  %635 = vmatpush2.bf16.msra.mxu0 0
  %636 = vmatprep.subr.bf16.mxu0 0
  %637 = vmatpush2.bf16.msra.mxu0 0
  %638 = vmatprep.mubr.bf16.mxu0 0
  %639 = vmatmul.mubr.bf16.gmra.mxu0 %v180
  %v640 = vpop.f32.mrf.mxu0
  %v641 = vadd.f32 0.0, %v640
  %v642 = vpop.f32.mrf.mxu0
  %v643 = vpop.f32.mrf.mxu0
  %v644 = vadd.f32 0.0, %v643
  %v645 = vpop.f32.mrf.mxu0
  %646 = vdwg.mxu0
  %v651 = vunpack.c.l.b16 %v92
  %v652 = vunpack.c.l.b16 %v93
  %v653 = vunpack.c.l.b16 %v94
  %v654 = vunpack.c.l.b16 %v95
  %v655 = vpack.c.b16 %v652, %v651
  %v656 = vpack.c.b16 %v654, %v653
  %659 = vmatprep.subr.bf16.mxu0 0
  %660 = vmatpush1.bf16.msra.mxu0 0
  %661 = vmatprep.subr.bf16.mxu0 0
  %662 = vmatpush1.bf16.msra.mxu0 0
  %663 = vmatprep.subr.bf16.mxu0 0
  %664 = vmatpush1.bf16.msra.mxu0 0
  %665 = vmatprep.subr.bf16.mxu0 0
  %666 = vmatpush1.bf16.msra.mxu0 0
  %667 = vmatprep.subr.bf16.mxu0 0
  %668 = vmatpush1.bf16.msra.mxu0 0
  %669 = vmatprep.subr.bf16.mxu0 0
  %670 = vmatpush1.bf16.msra.mxu0 0
  %671 = vmatprep.subr.bf16.mxu0 0
  %672 = vmatpush1.bf16.msra.mxu0 %v656
  %673 = vmatprep.subr.bf16.mxu0 0
  %674 = vmatpush1.bf16.msra.mxu0 %v655
  %675 = vmatprep.subr.bf16.mxu0 0
  %676 = vmatpush2.bf16.msra.mxu0 0
  %677 = vmatprep.subr.bf16.mxu0 0
  %678 = vmatpush2.bf16.msra.mxu0 0
  %679 = vmatprep.subr.bf16.mxu0 0
  %680 = vmatpush2.bf16.msra.mxu0 0
  %681 = vmatprep.subr.bf16.mxu0 0
  %682 = vmatpush2.bf16.msra.mxu0 0
  %683 = vmatprep.subr.bf16.mxu0 0
  %684 = vmatpush2.bf16.msra.mxu0 0
  %685 = vmatprep.subr.bf16.mxu0 0
  %686 = vmatpush2.bf16.msra.mxu0 0
  %687 = vmatprep.subr.bf16.mxu0 0
  %688 = vmatpush2.bf16.msra.mxu0 0
  %689 = vmatprep.subr.bf16.mxu0 0
  %690 = vmatpush2.bf16.msra.mxu0 0
  %691 = vmatprep.mubr.bf16.mxu0 0
  %692 = vmatmul.mubr.bf16.gmra.mxu0 %v180
  %v693 = vpop.f32.mrf.mxu0
  %v694 = vadd.f32 0.0, %v693
  %v695 = vpop.f32.mrf.mxu0
  %v696 = vpop.f32.mrf.mxu0
  %v697 = vadd.f32 0.0, %v696
  %v698 = vpop.f32.mrf.mxu0
  %699 = vdwg.mxu0
  %v704 = vunpack.c.l.b16 %v96
  %v705 = vunpack.c.l.b16 %v97
  %v706 = vunpack.c.l.b16 %v98
  %v707 = vunpack.c.l.b16 %v99
  %v708 = vpack.c.b16 %v705, %v704
  %v709 = vpack.c.b16 %v707, %v706
  %712 = vmatprep.subr.bf16.mxu0 0
  %713 = vmatpush1.bf16.msra.mxu0 0
  %714 = vmatprep.subr.bf16.mxu0 0
  %715 = vmatpush1.bf16.msra.mxu0 0
  %716 = vmatprep.subr.bf16.mxu0 0
  %717 = vmatpush1.bf16.msra.mxu0 0
  %718 = vmatprep.subr.bf16.mxu0 0
  %719 = vmatpush1.bf16.msra.mxu0 0
  %720 = vmatprep.subr.bf16.mxu0 0
  %721 = vmatpush1.bf16.msra.mxu0 0
  %722 = vmatprep.subr.bf16.mxu0 0
  %723 = vmatpush1.bf16.msra.mxu0 0
  %724 = vmatprep.subr.bf16.mxu0 0
  %725 = vmatpush1.bf16.msra.mxu0 %v709
  %726 = vmatprep.subr.bf16.mxu0 0
  %727 = vmatpush1.bf16.msra.mxu0 %v708
  %728 = vmatprep.subr.bf16.mxu0 0
  %729 = vmatpush2.bf16.msra.mxu0 0
  %730 = vmatprep.subr.bf16.mxu0 0
  %731 = vmatpush2.bf16.msra.mxu0 0
  %732 = vmatprep.subr.bf16.mxu0 0
  %733 = vmatpush2.bf16.msra.mxu0 0
  %734 = vmatprep.subr.bf16.mxu0 0
  %735 = vmatpush2.bf16.msra.mxu0 0
  %736 = vmatprep.subr.bf16.mxu0 0
  %737 = vmatpush2.bf16.msra.mxu0 0
  %738 = vmatprep.subr.bf16.mxu0 0
  %739 = vmatpush2.bf16.msra.mxu0 0
  %740 = vmatprep.subr.bf16.mxu0 0
  %741 = vmatpush2.bf16.msra.mxu0 0
  %742 = vmatprep.subr.bf16.mxu0 0
  %743 = vmatpush2.bf16.msra.mxu0 0
  %744 = vmatprep.mubr.bf16.mxu0 0
  %745 = vmatmul.mubr.bf16.gmra.mxu0 %v180
  %v746 = vpop.f32.mrf.mxu0
  %v747 = vadd.f32 0.0, %v746
  %v748 = vpop.f32.mrf.mxu0
  %v749 = vpop.f32.mrf.mxu0
  %v750 = vadd.f32 0.0, %v749
  %v751 = vpop.f32.mrf.mxu0
  %752 = vdwg.mxu0
  %v757 = vunpack.c.l.b16 %v100
  %v758 = vunpack.c.l.b16 %v101
  %v759 = vunpack.c.l.b16 %v102
  %v760 = vunpack.c.l.b16 %v103
  %v761 = vpack.c.b16 %v758, %v757
  %v762 = vpack.c.b16 %v760, %v759
  %765 = vmatprep.subr.bf16.mxu0 0
  %766 = vmatpush1.bf16.msra.mxu0 0
  %767 = vmatprep.subr.bf16.mxu0 0
  %768 = vmatpush1.bf16.msra.mxu0 0
  %769 = vmatprep.subr.bf16.mxu0 0
  %770 = vmatpush1.bf16.msra.mxu0 0
  %771 = vmatprep.subr.bf16.mxu0 0
  %772 = vmatpush1.bf16.msra.mxu0 0
  %773 = vmatprep.subr.bf16.mxu0 0
  %774 = vmatpush1.bf16.msra.mxu0 0
  %775 = vmatprep.subr.bf16.mxu0 0
  %776 = vmatpush1.bf16.msra.mxu0 0
  %777 = vmatprep.subr.bf16.mxu0 0
  %778 = vmatpush1.bf16.msra.mxu0 %v762
  %779 = vmatprep.subr.bf16.mxu0 0
  %780 = vmatpush1.bf16.msra.mxu0 %v761
  %781 = vmatprep.subr.bf16.mxu0 0
  %782 = vmatpush2.bf16.msra.mxu0 0
  %783 = vmatprep.subr.bf16.mxu0 0
  %784 = vmatpush2.bf16.msra.mxu0 0
  %785 = vmatprep.subr.bf16.mxu0 0
  %786 = vmatpush2.bf16.msra.mxu0 0
  %787 = vmatprep.subr.bf16.mxu0 0
  %788 = vmatpush2.bf16.msra.mxu0 0
  %789 = vmatprep.subr.bf16.mxu0 0
  %790 = vmatpush2.bf16.msra.mxu0 0
  %791 = vmatprep.subr.bf16.mxu0 0
  %792 = vmatpush2.bf16.msra.mxu0 0
  %793 = vmatprep.subr.bf16.mxu0 0
  %794 = vmatpush2.bf16.msra.mxu0 0
  %795 = vmatprep.subr.bf16.mxu0 0
  %796 = vmatpush2.bf16.msra.mxu0 0
  %797 = vmatprep.mubr.bf16.mxu0 0
  %798 = vmatmul.mubr.bf16.gmra.mxu0 %v180
  %v799 = vpop.f32.mrf.mxu0
  %v800 = vadd.f32 0.0, %v799
  %v801 = vpop.f32.mrf.mxu0
  %v802 = vpop.f32.mrf.mxu0
  %v803 = vadd.f32 0.0, %v802
  %v804 = vpop.f32.mrf.mxu0
  %805 = vdwg.mxu0
  %vm806 = vcmask 64512
  %v808 = vsel %vm806, %v217, 0
  %v811 = vsel %vm806, %v220, 0
  %v814 = vsel %vm806, %v429, 0
  %v817 = vsel %vm806, %v432, 0
  %819 = vmatprep.subr.mxu0 0.0
  %820 = vmatpush1.xpose.msra.mxu0 0.0
  %821 = vmatprep.subr.mxu0 0.0
  %822 = vmatpush1.xpose.msra.mxu0 0.0
  %823 = vmatprep.subr.mxu0 0.0
  %824 = vmatpush1.xpose.msra.mxu0 0.0
  %825 = vmatprep.subr.mxu0 0.0
  %826 = vmatpush1.xpose.msra.mxu0 0.0
  %827 = vmatprep.subr.mxu0 0.0
  %828 = vmatpush1.xpose.msra.mxu0 0.0
  %829 = vmatprep.subr.mxu0 0.0
  %830 = vmatpush1.xpose.msra.mxu0 0.0
  %831 = vmatprep.subr.mxu0 0.0
  %832 = vmatpush1.xpose.msra.mxu0 0.0
  %833 = vmatprep.subr.mxu0 0.0
  %834 = vmatpush1.xpose.msra.mxu0 0.0
  %835 = vmatprep.subr.mxu0 0.0
  %836 = vmatpush1.xpose.msra.mxu0 0.0
  %837 = vmatprep.subr.mxu0 0.0
  %838 = vmatpush1.xpose.msra.mxu0 0.0
  %839 = vmatprep.subr.mxu0 0.0
  %840 = vmatpush1.xpose.msra.mxu0 0.0
  %841 = vmatprep.subr.mxu0 0.0
  %842 = vmatpush1.xpose.msra.mxu0 0.0
  %843 = vmatprep.subr.mxu0 0.0
  %844 = vmatpush1.xpose.msra.mxu0 0.0
  %845 = vmatprep.subr.mxu0 0.0
  %846 = vmatpush1.xpose.msra.mxu0 0.0
  %847 = vmatprep.subr.mxu0 0.0
  %848 = vmatpush1.xpose.msra.mxu0 %v817
  %849 = vmatprep.subr.mxu0 0.0
  %850 = vmatpush1.xpose.msra.mxu0 %v814
  %851 = vmatprep.subr.mxu0 0.0
  %852 = vmatpush2.xpose.msra.mxu0 0.0
  %853 = vmatprep.subr.mxu0 0.0
  %854 = vmatpush2.xpose.msra.mxu0 0.0
  %855 = vmatprep.subr.mxu0 0.0
  %856 = vmatpush2.xpose.msra.mxu0 0.0
  %857 = vmatprep.subr.mxu0 0.0
  %858 = vmatpush2.xpose.msra.mxu0 0.0
  %859 = vmatprep.subr.mxu0 0.0
  %860 = vmatpush2.xpose.msra.mxu0 0.0
  %861 = vmatprep.subr.mxu0 0.0
  %862 = vmatpush2.xpose.msra.mxu0 0.0
  %863 = vmatprep.subr.mxu0 0.0
  %864 = vmatpush2.xpose.msra.mxu0 0.0
  %865 = vmatprep.subr.mxu0 0.0
  %866 = vmatpush2.xpose.msra.mxu0 0.0
  %867 = vmatprep.subr.mxu0 0.0
  %868 = vmatpush2.xpose.msra.mxu0 0.0
  %869 = vmatprep.subr.mxu0 0.0
  %870 = vmatpush2.xpose.msra.mxu0 0.0
  %871 = vmatprep.subr.mxu0 0.0
  %872 = vmatpush2.xpose.msra.mxu0 0.0
  %873 = vmatprep.subr.mxu0 0.0
  %874 = vmatpush2.xpose.msra.mxu0 0.0
  %875 = vmatprep.subr.mxu0 0.0
  %876 = vmatpush2.xpose.msra.mxu0 0.0
  %877 = vmatprep.subr.mxu0 0.0
  %878 = vmatpush2.xpose.msra.mxu0 0.0
  %879 = vmatprep.subr.mxu0 0.0
  %880 = vmatpush2.xpose.msra.mxu0 0.0
  %881 = vmatprep.subr.mxu0 0.0
  %882 = vmatpush2.xpose.msra.mxu0 0.0
  %883 = vmatprep.mubr.f32.mxu0 0.0
  %884 = vmatmul.mubr.f32.gmra.mxu0 %v808
  %v885 = vpop.f32.mrf.mxu0
  %v886 = vadd.f32 %v50, %v885
  %v887 = vpop.f32.mrf.mxu0
  %888 = vmatprep.mubr.f32.mxu0 0.0
  %889 = vmatmul.mubr.f32.gmra.mxu0 %v811
  %v890 = vpop.f32.mrf.mxu0
  %v891 = vadd.f32 %v51, %v890
  %v892 = vpop.f32.mrf.mxu0
  %893 = vdwg.mxu0
  %v895 = vsel %vm806, %v270, 0
  %v898 = vsel %vm806, %v273, 0
  %v901 = vsel %vm806, %v482, 0
  %v904 = vsel %vm806, %v485, 0
  %906 = vmatprep.subr.mxu0 0.0
  %907 = vmatpush1.xpose.msra.mxu0 0.0
  %908 = vmatprep.subr.mxu0 0.0
  %909 = vmatpush1.xpose.msra.mxu0 0.0
  %910 = vmatprep.subr.mxu0 0.0
  %911 = vmatpush1.xpose.msra.mxu0 0.0
  %912 = vmatprep.subr.mxu0 0.0
  %913 = vmatpush1.xpose.msra.mxu0 0.0
  %914 = vmatprep.subr.mxu0 0.0
  %915 = vmatpush1.xpose.msra.mxu0 0.0
  %916 = vmatprep.subr.mxu0 0.0
  %917 = vmatpush1.xpose.msra.mxu0 0.0
  %918 = vmatprep.subr.mxu0 0.0
  %919 = vmatpush1.xpose.msra.mxu0 0.0
  %920 = vmatprep.subr.mxu0 0.0
  %921 = vmatpush1.xpose.msra.mxu0 0.0
  %922 = vmatprep.subr.mxu0 0.0
  %923 = vmatpush1.xpose.msra.mxu0 0.0
  %924 = vmatprep.subr.mxu0 0.0
  %925 = vmatpush1.xpose.msra.mxu0 0.0
  %926 = vmatprep.subr.mxu0 0.0
  %927 = vmatpush1.xpose.msra.mxu0 0.0
  %928 = vmatprep.subr.mxu0 0.0
  %929 = vmatpush1.xpose.msra.mxu0 0.0
  %930 = vmatprep.subr.mxu0 0.0
  %931 = vmatpush1.xpose.msra.mxu0 0.0
  %932 = vmatprep.subr.mxu0 0.0
  %933 = vmatpush1.xpose.msra.mxu0 0.0
  %934 = vmatprep.subr.mxu0 0.0
  %935 = vmatpush1.xpose.msra.mxu0 %v904
  %936 = vmatprep.subr.mxu0 0.0
  %937 = vmatpush1.xpose.msra.mxu0 %v901
  %938 = vmatprep.subr.mxu0 0.0
  %939 = vmatpush2.xpose.msra.mxu0 0.0
  %940 = vmatprep.subr.mxu0 0.0
  %941 = vmatpush2.xpose.msra.mxu0 0.0
  %942 = vmatprep.subr.mxu0 0.0
  %943 = vmatpush2.xpose.msra.mxu0 0.0
  %944 = vmatprep.subr.mxu0 0.0
  %945 = vmatpush2.xpose.msra.mxu0 0.0
  %946 = vmatprep.subr.mxu0 0.0
  %947 = vmatpush2.xpose.msra.mxu0 0.0
  %948 = vmatprep.subr.mxu0 0.0
  %949 = vmatpush2.xpose.msra.mxu0 0.0
  %950 = vmatprep.subr.mxu0 0.0
  %951 = vmatpush2.xpose.msra.mxu0 0.0
  %952 = vmatprep.subr.mxu0 0.0
  %953 = vmatpush2.xpose.msra.mxu0 0.0
  %954 = vmatprep.subr.mxu0 0.0
  %955 = vmatpush2.xpose.msra.mxu0 0.0
  %956 = vmatprep.subr.mxu0 0.0
  %957 = vmatpush2.xpose.msra.mxu0 0.0
  %958 = vmatprep.subr.mxu0 0.0
  %959 = vmatpush2.xpose.msra.mxu0 0.0
  %960 = vmatprep.subr.mxu0 0.0
  %961 = vmatpush2.xpose.msra.mxu0 0.0
  %962 = vmatprep.subr.mxu0 0.0
  %963 = vmatpush2.xpose.msra.mxu0 0.0
  %964 = vmatprep.subr.mxu0 0.0
  %965 = vmatpush2.xpose.msra.mxu0 0.0
  %966 = vmatprep.subr.mxu0 0.0
  %967 = vmatpush2.xpose.msra.mxu0 0.0
  %968 = vmatprep.subr.mxu0 0.0
  %969 = vmatpush2.xpose.msra.mxu0 0.0
  %970 = vmatprep.mubr.f32.mxu0 0.0
  %971 = vmatmul.mubr.f32.gmra.mxu0 %v895
  %v972 = vpop.f32.mrf.mxu0
  %v973 = vadd.f32 %v50, %v972
  %v974 = vpop.f32.mrf.mxu0
  %975 = vmatprep.mubr.f32.mxu0 0.0
  %976 = vmatmul.mubr.f32.gmra.mxu0 %v898
  %v977 = vpop.f32.mrf.mxu0
  %v978 = vadd.f32 %v51, %v977
  %v979 = vpop.f32.mrf.mxu0
  %980 = vdwg.mxu0
  %v982 = vsel %vm806, %v323, 0
  %v985 = vsel %vm806, %v326, 0
  %v988 = vsel %vm806, %v535, 0
  %v991 = vsel %vm806, %v538, 0
  %993 = vmatprep.subr.mxu0 0.0
  %994 = vmatpush1.xpose.msra.mxu0 0.0
  %995 = vmatprep.subr.mxu0 0.0
  %996 = vmatpush1.xpose.msra.mxu0 0.0
  %997 = vmatprep.subr.mxu0 0.0
  %998 = vmatpush1.xpose.msra.mxu0 0.0
  %999 = vmatprep.subr.mxu0 0.0
  %1000 = vmatpush1.xpose.msra.mxu0 0.0
  %1001 = vmatprep.subr.mxu0 0.0
  %1002 = vmatpush1.xpose.msra.mxu0 0.0
  %1003 = vmatprep.subr.mxu0 0.0
  %1004 = vmatpush1.xpose.msra.mxu0 0.0
  %1005 = vmatprep.subr.mxu0 0.0
  %1006 = vmatpush1.xpose.msra.mxu0 0.0
  %1007 = vmatprep.subr.mxu0 0.0
  %1008 = vmatpush1.xpose.msra.mxu0 0.0
  %1009 = vmatprep.subr.mxu0 0.0
  %1010 = vmatpush1.xpose.msra.mxu0 0.0
  %1011 = vmatprep.subr.mxu0 0.0
  %1012 = vmatpush1.xpose.msra.mxu0 0.0
  %1013 = vmatprep.subr.mxu0 0.0
  %1014 = vmatpush1.xpose.msra.mxu0 0.0
  %1015 = vmatprep.subr.mxu0 0.0
  %1016 = vmatpush1.xpose.msra.mxu0 0.0
  %1017 = vmatprep.subr.mxu0 0.0
  %1018 = vmatpush1.xpose.msra.mxu0 0.0
  %1019 = vmatprep.subr.mxu0 0.0
  %1020 = vmatpush1.xpose.msra.mxu0 0.0
  %1021 = vmatprep.subr.mxu0 0.0
  %1022 = vmatpush1.xpose.msra.mxu0 %v991
  %1023 = vmatprep.subr.mxu0 0.0
  %1024 = vmatpush1.xpose.msra.mxu0 %v988
  %1025 = vmatprep.subr.mxu0 0.0
  %1026 = vmatpush2.xpose.msra.mxu0 0.0
  %1027 = vmatprep.subr.mxu0 0.0
  %1028 = vmatpush2.xpose.msra.mxu0 0.0
  %1029 = vmatprep.subr.mxu0 0.0
  %1030 = vmatpush2.xpose.msra.mxu0 0.0
  %1031 = vmatprep.subr.mxu0 0.0
  %1032 = vmatpush2.xpose.msra.mxu0 0.0
  %1033 = vmatprep.subr.mxu0 0.0
  %1034 = vmatpush2.xpose.msra.mxu0 0.0
  %1035 = vmatprep.subr.mxu0 0.0
  %1036 = vmatpush2.xpose.msra.mxu0 0.0
  %1037 = vmatprep.subr.mxu0 0.0
  %1038 = vmatpush2.xpose.msra.mxu0 0.0
  %1039 = vmatprep.subr.mxu0 0.0
  %1040 = vmatpush2.xpose.msra.mxu0 0.0
  %1041 = vmatprep.subr.mxu0 0.0
  %1042 = vmatpush2.xpose.msra.mxu0 0.0
  %1043 = vmatprep.subr.mxu0 0.0
  %1044 = vmatpush2.xpose.msra.mxu0 0.0
  %1045 = vmatprep.subr.mxu0 0.0
  %1046 = vmatpush2.xpose.msra.mxu0 0.0
  %1047 = vmatprep.subr.mxu0 0.0
  %1048 = vmatpush2.xpose.msra.mxu0 0.0
  %1049 = vmatprep.subr.mxu0 0.0
  %1050 = vmatpush2.xpose.msra.mxu0 0.0
  %1051 = vmatprep.subr.mxu0 0.0
  %1052 = vmatpush2.xpose.msra.mxu0 0.0
  %1053 = vmatprep.subr.mxu0 0.0
  %1054 = vmatpush2.xpose.msra.mxu0 0.0
  %1055 = vmatprep.subr.mxu0 0.0
  %1056 = vmatpush2.xpose.msra.mxu0 0.0
  %1057 = vmatprep.mubr.f32.mxu0 0.0
  %1058 = vmatmul.mubr.f32.gmra.mxu0 %v982
  %v1059 = vpop.f32.mrf.mxu0
  %v1060 = vadd.f32 %v50, %v1059
  %v1061 = vpop.f32.mrf.mxu0
  %1062 = vmatprep.mubr.f32.mxu0 0.0
  %1063 = vmatmul.mubr.f32.gmra.mxu0 %v985
  %v1064 = vpop.f32.mrf.mxu0
  %v1065 = vadd.f32 %v51, %v1064
  %v1066 = vpop.f32.mrf.mxu0
  %1067 = vdwg.mxu0
  %v1069 = vsel %vm806, %v376, 0
  %v1072 = vsel %vm806, %v379, 0
  %v1075 = vsel %vm806, %v588, 0
  %v1078 = vsel %vm806, %v591, 0
  %1080 = vmatprep.subr.mxu0 0.0
  %1081 = vmatpush1.xpose.msra.mxu0 0.0
  %1082 = vmatprep.subr.mxu0 0.0
  %1083 = vmatpush1.xpose.msra.mxu0 0.0
  %1084 = vmatprep.subr.mxu0 0.0
  %1085 = vmatpush1.xpose.msra.mxu0 0.0
  %1086 = vmatprep.subr.mxu0 0.0
  %1087 = vmatpush1.xpose.msra.mxu0 0.0
  %1088 = vmatprep.subr.mxu0 0.0
  %1089 = vmatpush1.xpose.msra.mxu0 0.0
  %1090 = vmatprep.subr.mxu0 0.0
  %1091 = vmatpush1.xpose.msra.mxu0 0.0
  %1092 = vmatprep.subr.mxu0 0.0
  %1093 = vmatpush1.xpose.msra.mxu0 0.0
  %1094 = vmatprep.subr.mxu0 0.0
  %1095 = vmatpush1.xpose.msra.mxu0 0.0
  %1096 = vmatprep.subr.mxu0 0.0
  %1097 = vmatpush1.xpose.msra.mxu0 0.0
  %1098 = vmatprep.subr.mxu0 0.0
  %1099 = vmatpush1.xpose.msra.mxu0 0.0
  %1100 = vmatprep.subr.mxu0 0.0
  %1101 = vmatpush1.xpose.msra.mxu0 0.0
  %1102 = vmatprep.subr.mxu0 0.0
  %1103 = vmatpush1.xpose.msra.mxu0 0.0
  %1104 = vmatprep.subr.mxu0 0.0
  %1105 = vmatpush1.xpose.msra.mxu0 0.0
  %1106 = vmatprep.subr.mxu0 0.0
  %1107 = vmatpush1.xpose.msra.mxu0 0.0
  %1108 = vmatprep.subr.mxu0 0.0
  %1109 = vmatpush1.xpose.msra.mxu0 %v1078
  %1110 = vmatprep.subr.mxu0 0.0
  %1111 = vmatpush1.xpose.msra.mxu0 %v1075
  %1112 = vmatprep.subr.mxu0 0.0
  %1113 = vmatpush2.xpose.msra.mxu0 0.0
  %1114 = vmatprep.subr.mxu0 0.0
  %1115 = vmatpush2.xpose.msra.mxu0 0.0
  %1116 = vmatprep.subr.mxu0 0.0
  %1117 = vmatpush2.xpose.msra.mxu0 0.0
  %1118 = vmatprep.subr.mxu0 0.0
  %1119 = vmatpush2.xpose.msra.mxu0 0.0
  %1120 = vmatprep.subr.mxu0 0.0
  %1121 = vmatpush2.xpose.msra.mxu0 0.0
  %1122 = vmatprep.subr.mxu0 0.0
  %1123 = vmatpush2.xpose.msra.mxu0 0.0
  %1124 = vmatprep.subr.mxu0 0.0
  %1125 = vmatpush2.xpose.msra.mxu0 0.0
  %1126 = vmatprep.subr.mxu0 0.0
  %1127 = vmatpush2.xpose.msra.mxu0 0.0
  %1128 = vmatprep.subr.mxu0 0.0
  %1129 = vmatpush2.xpose.msra.mxu0 0.0
  %1130 = vmatprep.subr.mxu0 0.0
  %1131 = vmatpush2.xpose.msra.mxu0 0.0
  %1132 = vmatprep.subr.mxu0 0.0
  %1133 = vmatpush2.xpose.msra.mxu0 0.0
  %1134 = vmatprep.subr.mxu0 0.0
  %1135 = vmatpush2.xpose.msra.mxu0 0.0
  %1136 = vmatprep.subr.mxu0 0.0
  %1137 = vmatpush2.xpose.msra.mxu0 0.0
  %1138 = vmatprep.subr.mxu0 0.0
  %1139 = vmatpush2.xpose.msra.mxu0 0.0
  %1140 = vmatprep.subr.mxu0 0.0
  %1141 = vmatpush2.xpose.msra.mxu0 0.0
  %1142 = vmatprep.subr.mxu0 0.0
  %1143 = vmatpush2.xpose.msra.mxu0 0.0
  %1144 = vmatprep.mubr.f32.mxu0 0.0
  %1145 = vmatmul.mubr.f32.gmra.mxu0 %v1069
  %v1146 = vpop.f32.mrf.mxu0
  %v1147 = vadd.f32 %v50, %v1146
  %v1148 = vpop.f32.mrf.mxu0
  %1149 = vmatprep.mubr.f32.mxu0 0.0
  %1150 = vmatmul.mubr.f32.gmra.mxu0 %v1072
  %v1151 = vpop.f32.mrf.mxu0
  %v1152 = vadd.f32 %v51, %v1151
  %v1153 = vpop.f32.mrf.mxu0
  %1154 = vdwg.mxu0
  %vm1155 = vcmask 130048
  %v1156 = vsel %vm1155, %v886, -inf
  %1157 = vmax.xlane.f32.xlu0 %v1156
  %v1158 = vpop.xlane.xlu0 %1157
  %v1159 = vsel %vm1155, %v891, -inf
  %1160 = vmax.xlane.f32.xlu0 %v1159
  %v1161 = vpop.xlane.xlu0 %1160
  %v1162 = vsel %vm1155, %v973, -inf
  %1163 = vmax.xlane.f32.xlu0 %v1162
  %v1164 = vpop.xlane.xlu0 %1163
  %v1165 = vsel %vm1155, %v978, -inf
  %1166 = vmax.xlane.f32.xlu0 %v1165
  %v1167 = vpop.xlane.xlu0 %1166
  %v1168 = vsel %vm1155, %v1060, -inf
  %1169 = vmax.xlane.f32.xlu0 %v1168
  %v1170 = vpop.xlane.xlu0 %1169
  %v1171 = vsel %vm1155, %v1065, -inf
  %1172 = vmax.xlane.f32.xlu0 %v1171
  %v1173 = vpop.xlane.xlu0 %1172
  %v1174 = vsel %vm1155, %v1147, -inf
  %1175 = vmax.xlane.f32.xlu0 %v1174
  %v1176 = vpop.xlane.xlu0 %1175
  %v1177 = vsel %vm1155, %v1152, -inf
  %1178 = vmax.xlane.f32.xlu0 %v1177
  %v1179 = vpop.xlane.xlu0 %1178
  %v1180 = vsub.f32 %v886, %v1158
  %v1181 = vsub.f32 %v891, %v1161
  %v1182 = vsub.f32 %v973, %v1164
  %v1183 = vsub.f32 %v978, %v1167
  %v1184 = vsub.f32 %v1060, %v1170
  %v1185 = vsub.f32 %v1065, %v1173
  %v1186 = vsub.f32 %v1147, %v1176
  %v1187 = vsub.f32 %v1152, %v1179
  %v1188 = vmul.f32 %v1180, 1.442695
  %v1189 = vpow.pop %v1188
  %v1190 = vmul.f32 %v1181, 1.442695
  %v1191 = vpow.pop %v1190
  %v1192 = vmul.f32 %v1182, 1.442695
  %v1193 = vpow.pop %v1192
  %v1194 = vmul.f32 %v1183, 1.442695
  %v1195 = vpow.pop %v1194
  %v1196 = vmul.f32 %v1184, 1.442695
  %v1197 = vpow.pop %v1196
  %v1198 = vmul.f32 %v1185, 1.442695
  %v1199 = vpow.pop %v1198
  %v1200 = vmul.f32 %v1186, 1.442695
  %v1201 = vpow.pop %v1200
  %v1202 = vmul.f32 %v1187, 1.442695
  %v1203 = vpow.pop %v1202
  %v1204 = vsel %vm1155, %v1189, 0.0
  %1205 = vadd.xlane.f32.xlu0 %v1204
  %v1206 = vpop.xlane.xlu0 %1205
  %v1207 = vsel %vm1155, %v1191, 0.0
  %1208 = vadd.xlane.f32.xlu0 %v1207
  %v1209 = vpop.xlane.xlu0 %1208
  %v1210 = vsel %vm1155, %v1193, 0.0
  %1211 = vadd.xlane.f32.xlu0 %v1210
  %v1212 = vpop.xlane.xlu0 %1211
  %v1213 = vsel %vm1155, %v1195, 0.0
  %1214 = vadd.xlane.f32.xlu0 %v1213
  %v1215 = vpop.xlane.xlu0 %1214
  %v1216 = vsel %vm1155, %v1197, 0.0
  %1217 = vadd.xlane.f32.xlu0 %v1216
  %v1218 = vpop.xlane.xlu0 %1217
  %v1219 = vsel %vm1155, %v1199, 0.0
  %1220 = vadd.xlane.f32.xlu0 %v1219
  %v1221 = vpop.xlane.xlu0 %1220
  %v1222 = vsel %vm1155, %v1201, 0.0
  %1223 = vadd.xlane.f32.xlu0 %v1222
  %v1224 = vpop.xlane.xlu0 %1223
  %v1225 = vsel %vm1155, %v1203, 0.0
  %1226 = vadd.xlane.f32.xlu0 %v1225
  %v1227 = vpop.xlane.xlu0 %1226
  %v1228 = vrcp.pop %v1206
  %v1229 = vmul.f32 %v1189, %v1228
  %v1230 = vrcp.pop %v1209
  %v1231 = vmul.f32 %v1191, %v1230
  %v1232 = vrcp.pop %v1212
  %v1233 = vmul.f32 %v1193, %v1232
  %v1234 = vrcp.pop %v1215
  %v1235 = vmul.f32 %v1195, %v1234
  %v1236 = vrcp.pop %v1218
  %v1237 = vmul.f32 %v1197, %v1236
  %v1238 = vrcp.pop %v1221
  %v1239 = vmul.f32 %v1199, %v1238
  %v1240 = vrcp.pop %v1224
  %v1241 = vmul.f32 %v1201, %v1240
  %v1242 = vrcp.pop %v1227
  %v1243 = vmul.f32 %v1203, %v1242
  %v1245 = vsel %vm1155, %v1229, 0
  %v1248 = vsel %vm1155, %v1231, 0
  %1250 = vmatprep.subr.mxu0 0.0
  %1251 = vmatpush1.msra.mxu0 0.0
  %1252 = vmatprep.subr.mxu0 0.0
  %1253 = vmatpush1.msra.mxu0 0.0
  %1254 = vmatprep.subr.mxu0 0.0
  %1255 = vmatpush1.msra.mxu0 0.0
  %1256 = vmatprep.subr.mxu0 0.0
  %1257 = vmatpush1.msra.mxu0 0.0
  %1258 = vmatprep.subr.mxu0 0.0
  %1259 = vmatpush1.msra.mxu0 0.0
  %1260 = vmatprep.subr.mxu0 0.0
  %1261 = vmatpush1.msra.mxu0 0.0
  %1262 = vmatprep.subr.mxu0 0.0
  %1263 = vmatpush1.msra.mxu0 0.0
  %1264 = vmatprep.subr.mxu0 0.0
  %1265 = vmatpush1.msra.mxu0 0.0
  %1266 = vmatprep.subr.mxu0 0.0
  %1267 = vmatpush1.msra.mxu0 0.0
  %1268 = vmatprep.subr.mxu0 0.0
  %1269 = vmatpush1.msra.mxu0 0.0
  %1270 = vmatprep.subr.mxu0 0.0
  %1271 = vmatpush1.msra.mxu0 0.0
  %1272 = vmatprep.subr.mxu0 0.0
  %1273 = vmatpush1.msra.mxu0 0.0
  %1274 = vmatprep.subr.mxu0 0.0
  %1275 = vmatpush1.msra.mxu0 0.0
  %1276 = vmatprep.subr.mxu0 0.0
  %1277 = vmatpush1.msra.mxu0 0.0
  %1278 = vmatprep.subr.mxu0 0.0
  %1279 = vmatpush1.msra.mxu0 %v644
  %1280 = vmatprep.subr.mxu0 0.0
  %1281 = vmatpush1.msra.mxu0 %v641
  %1282 = vmatprep.subr.mxu0 0.0
  %1283 = vmatpush2.msra.mxu0 0.0
  %1284 = vmatprep.subr.mxu0 0.0
  %1285 = vmatpush2.msra.mxu0 0.0
  %1286 = vmatprep.subr.mxu0 0.0
  %1287 = vmatpush2.msra.mxu0 0.0
  %1288 = vmatprep.subr.mxu0 0.0
  %1289 = vmatpush2.msra.mxu0 0.0
  %1290 = vmatprep.subr.mxu0 0.0
  %1291 = vmatpush2.msra.mxu0 0.0
  %1292 = vmatprep.subr.mxu0 0.0
  %1293 = vmatpush2.msra.mxu0 0.0
  %1294 = vmatprep.subr.mxu0 0.0
  %1295 = vmatpush2.msra.mxu0 0.0
  %1296 = vmatprep.subr.mxu0 0.0
  %1297 = vmatpush2.msra.mxu0 0.0
  %1298 = vmatprep.subr.mxu0 0.0
  %1299 = vmatpush2.msra.mxu0 0.0
  %1300 = vmatprep.subr.mxu0 0.0
  %1301 = vmatpush2.msra.mxu0 0.0
  %1302 = vmatprep.subr.mxu0 0.0
  %1303 = vmatpush2.msra.mxu0 0.0
  %1304 = vmatprep.subr.mxu0 0.0
  %1305 = vmatpush2.msra.mxu0 0.0
  %1306 = vmatprep.subr.mxu0 0.0
  %1307 = vmatpush2.msra.mxu0 0.0
  %1308 = vmatprep.subr.mxu0 0.0
  %1309 = vmatpush2.msra.mxu0 0.0
  %1310 = vmatprep.subr.mxu0 0.0
  %1311 = vmatpush2.msra.mxu0 0.0
  %1312 = vmatprep.subr.mxu0 0.0
  %1313 = vmatpush2.msra.mxu0 0.0
  %1314 = vmatprep.mubr.f32.mxu0 0.0
  %1315 = vmatmul.mubr.f32.gmra.mxu0 %v1245
  %v1316 = vpop.f32.mrf.mxu0
  %v1317 = vadd.f32 0.0, %v1316
  %v1318 = vpop.f32.mrf.mxu0
  %1319 = vmatprep.mubr.f32.mxu0 0.0
  %1320 = vmatmul.mubr.f32.gmra.mxu0 %v1248
  %v1321 = vpop.f32.mrf.mxu0
  %v1322 = vadd.f32 0.0, %v1321
  %v1323 = vpop.f32.mrf.mxu0
  %1324 = vdwg.mxu0
  %v1326 = vsel %vm1155, %v1233, 0
  %v1329 = vsel %vm1155, %v1235, 0
  %1331 = vmatprep.subr.mxu0 0.0
  %1332 = vmatpush1.msra.mxu0 0.0
  %1333 = vmatprep.subr.mxu0 0.0
  %1334 = vmatpush1.msra.mxu0 0.0
  %1335 = vmatprep.subr.mxu0 0.0
  %1336 = vmatpush1.msra.mxu0 0.0
  %1337 = vmatprep.subr.mxu0 0.0
  %1338 = vmatpush1.msra.mxu0 0.0
  %1339 = vmatprep.subr.mxu0 0.0
  %1340 = vmatpush1.msra.mxu0 0.0
  %1341 = vmatprep.subr.mxu0 0.0
  %1342 = vmatpush1.msra.mxu0 0.0
  %1343 = vmatprep.subr.mxu0 0.0
  %1344 = vmatpush1.msra.mxu0 0.0
  %1345 = vmatprep.subr.mxu0 0.0
  %1346 = vmatpush1.msra.mxu0 0.0
  %1347 = vmatprep.subr.mxu0 0.0
  %1348 = vmatpush1.msra.mxu0 0.0
  %1349 = vmatprep.subr.mxu0 0.0
  %1350 = vmatpush1.msra.mxu0 0.0
  %1351 = vmatprep.subr.mxu0 0.0
  %1352 = vmatpush1.msra.mxu0 0.0
  %1353 = vmatprep.subr.mxu0 0.0
  %1354 = vmatpush1.msra.mxu0 0.0
  %1355 = vmatprep.subr.mxu0 0.0
  %1356 = vmatpush1.msra.mxu0 0.0
  %1357 = vmatprep.subr.mxu0 0.0
  %1358 = vmatpush1.msra.mxu0 0.0
  %1359 = vmatprep.subr.mxu0 0.0
  %1360 = vmatpush1.msra.mxu0 %v697
  %1361 = vmatprep.subr.mxu0 0.0
  %1362 = vmatpush1.msra.mxu0 %v694
  %1363 = vmatprep.subr.mxu0 0.0
  %1364 = vmatpush2.msra.mxu0 0.0
  %1365 = vmatprep.subr.mxu0 0.0
  %1366 = vmatpush2.msra.mxu0 0.0
  %1367 = vmatprep.subr.mxu0 0.0
  %1368 = vmatpush2.msra.mxu0 0.0
  %1369 = vmatprep.subr.mxu0 0.0
  %1370 = vmatpush2.msra.mxu0 0.0
  %1371 = vmatprep.subr.mxu0 0.0
  %1372 = vmatpush2.msra.mxu0 0.0
  %1373 = vmatprep.subr.mxu0 0.0
  %1374 = vmatpush2.msra.mxu0 0.0
  %1375 = vmatprep.subr.mxu0 0.0
  %1376 = vmatpush2.msra.mxu0 0.0
  %1377 = vmatprep.subr.mxu0 0.0
  %1378 = vmatpush2.msra.mxu0 0.0
  %1379 = vmatprep.subr.mxu0 0.0
  %1380 = vmatpush2.msra.mxu0 0.0
  %1381 = vmatprep.subr.mxu0 0.0
  %1382 = vmatpush2.msra.mxu0 0.0
  %1383 = vmatprep.subr.mxu0 0.0
  %1384 = vmatpush2.msra.mxu0 0.0
  %1385 = vmatprep.subr.mxu0 0.0
  %1386 = vmatpush2.msra.mxu0 0.0
  %1387 = vmatprep.subr.mxu0 0.0
  %1388 = vmatpush2.msra.mxu0 0.0
  %1389 = vmatprep.subr.mxu0 0.0
  %1390 = vmatpush2.msra.mxu0 0.0
  %1391 = vmatprep.subr.mxu0 0.0
  %1392 = vmatpush2.msra.mxu0 0.0
  %1393 = vmatprep.subr.mxu0 0.0
  %1394 = vmatpush2.msra.mxu0 0.0
  %1395 = vmatprep.mubr.f32.mxu0 0.0
  %1396 = vmatmul.mubr.f32.gmra.mxu0 %v1326
  %v1397 = vpop.f32.mrf.mxu0
  %v1398 = vadd.f32 0.0, %v1397
  %v1399 = vpop.f32.mrf.mxu0
  %1400 = vmatprep.mubr.f32.mxu0 0.0
  %1401 = vmatmul.mubr.f32.gmra.mxu0 %v1329
  %v1402 = vpop.f32.mrf.mxu0
  %v1403 = vadd.f32 0.0, %v1402
  %v1404 = vpop.f32.mrf.mxu0
  %1405 = vdwg.mxu0
  %v1407 = vsel %vm1155, %v1237, 0
  %v1410 = vsel %vm1155, %v1239, 0
  %1412 = vmatprep.subr.mxu0 0.0
  %1413 = vmatpush1.msra.mxu0 0.0
  %1414 = vmatprep.subr.mxu0 0.0
  %1415 = vmatpush1.msra.mxu0 0.0
  %1416 = vmatprep.subr.mxu0 0.0
  %1417 = vmatpush1.msra.mxu0 0.0
  %1418 = vmatprep.subr.mxu0 0.0
  %1419 = vmatpush1.msra.mxu0 0.0
  %1420 = vmatprep.subr.mxu0 0.0
  %1421 = vmatpush1.msra.mxu0 0.0
  %1422 = vmatprep.subr.mxu0 0.0
  %1423 = vmatpush1.msra.mxu0 0.0
  %1424 = vmatprep.subr.mxu0 0.0
  %1425 = vmatpush1.msra.mxu0 0.0
  %1426 = vmatprep.subr.mxu0 0.0
  %1427 = vmatpush1.msra.mxu0 0.0
  %1428 = vmatprep.subr.mxu0 0.0
  %1429 = vmatpush1.msra.mxu0 0.0
  %1430 = vmatprep.subr.mxu0 0.0
  %1431 = vmatpush1.msra.mxu0 0.0
  %1432 = vmatprep.subr.mxu0 0.0
  %1433 = vmatpush1.msra.mxu0 0.0
  %1434 = vmatprep.subr.mxu0 0.0
  %1435 = vmatpush1.msra.mxu0 0.0
  %1436 = vmatprep.subr.mxu0 0.0
  %1437 = vmatpush1.msra.mxu0 0.0
  %1438 = vmatprep.subr.mxu0 0.0
  %1439 = vmatpush1.msra.mxu0 0.0
  %1440 = vmatprep.subr.mxu0 0.0
  %1441 = vmatpush1.msra.mxu0 %v750
  %1442 = vmatprep.subr.mxu0 0.0
  %1443 = vmatpush1.msra.mxu0 %v747
  %1444 = vmatprep.subr.mxu0 0.0
  %1445 = vmatpush2.msra.mxu0 0.0
  %1446 = vmatprep.subr.mxu0 0.0
  %1447 = vmatpush2.msra.mxu0 0.0
  %1448 = vmatprep.subr.mxu0 0.0
  %1449 = vmatpush2.msra.mxu0 0.0
  %1450 = vmatprep.subr.mxu0 0.0
  %1451 = vmatpush2.msra.mxu0 0.0
  %1452 = vmatprep.subr.mxu0 0.0
  %1453 = vmatpush2.msra.mxu0 0.0
  %1454 = vmatprep.subr.mxu0 0.0
  %1455 = vmatpush2.msra.mxu0 0.0
  %1456 = vmatprep.subr.mxu0 0.0
  %1457 = vmatpush2.msra.mxu0 0.0
  %1458 = vmatprep.subr.mxu0 0.0
  %1459 = vmatpush2.msra.mxu0 0.0
  %1460 = vmatprep.subr.mxu0 0.0
  %1461 = vmatpush2.msra.mxu0 0.0
  %1462 = vmatprep.subr.mxu0 0.0
  %1463 = vmatpush2.msra.mxu0 0.0
  %1464 = vmatprep.subr.mxu0 0.0
  %1465 = vmatpush2.msra.mxu0 0.0
  %1466 = vmatprep.subr.mxu0 0.0
  %1467 = vmatpush2.msra.mxu0 0.0
  %1468 = vmatprep.subr.mxu0 0.0
  %1469 = vmatpush2.msra.mxu0 0.0
  %1470 = vmatprep.subr.mxu0 0.0
  %1471 = vmatpush2.msra.mxu0 0.0
  %1472 = vmatprep.subr.mxu0 0.0
  %1473 = vmatpush2.msra.mxu0 0.0
  %1474 = vmatprep.subr.mxu0 0.0
  %1475 = vmatpush2.msra.mxu0 0.0
  %1476 = vmatprep.mubr.f32.mxu0 0.0
  %1477 = vmatmul.mubr.f32.gmra.mxu0 %v1407
  %v1478 = vpop.f32.mrf.mxu0
  %v1479 = vadd.f32 0.0, %v1478
  %v1480 = vpop.f32.mrf.mxu0
  %1481 = vmatprep.mubr.f32.mxu0 0.0
  %1482 = vmatmul.mubr.f32.gmra.mxu0 %v1410
  %v1483 = vpop.f32.mrf.mxu0
  %v1484 = vadd.f32 0.0, %v1483
  %v1485 = vpop.f32.mrf.mxu0
  %1486 = vdwg.mxu0
  %v1488 = vsel %vm1155, %v1241, 0
  %v1491 = vsel %vm1155, %v1243, 0
  %1493 = vmatprep.subr.mxu0 0.0
  %1494 = vmatpush1.msra.mxu0 0.0
  %1495 = vmatprep.subr.mxu0 0.0
  %1496 = vmatpush1.msra.mxu0 0.0
  %1497 = vmatprep.subr.mxu0 0.0
  %1498 = vmatpush1.msra.mxu0 0.0
  %1499 = vmatprep.subr.mxu0 0.0
  %1500 = vmatpush1.msra.mxu0 0.0
  %1501 = vmatprep.subr.mxu0 0.0
  %1502 = vmatpush1.msra.mxu0 0.0
  %1503 = vmatprep.subr.mxu0 0.0
  %1504 = vmatpush1.msra.mxu0 0.0
  %1505 = vmatprep.subr.mxu0 0.0
  %1506 = vmatpush1.msra.mxu0 0.0
  %1507 = vmatprep.subr.mxu0 0.0
  %1508 = vmatpush1.msra.mxu0 0.0
  %1509 = vmatprep.subr.mxu0 0.0
  %1510 = vmatpush1.msra.mxu0 0.0
  %1511 = vmatprep.subr.mxu0 0.0
  %1512 = vmatpush1.msra.mxu0 0.0
  %1513 = vmatprep.subr.mxu0 0.0
  %1514 = vmatpush1.msra.mxu0 0.0
  %1515 = vmatprep.subr.mxu0 0.0
  %1516 = vmatpush1.msra.mxu0 0.0
  %1517 = vmatprep.subr.mxu0 0.0
  %1518 = vmatpush1.msra.mxu0 0.0
  %1519 = vmatprep.subr.mxu0 0.0
  %1520 = vmatpush1.msra.mxu0 0.0
  %1521 = vmatprep.subr.mxu0 0.0
  %1522 = vmatpush1.msra.mxu0 %v803
  %1523 = vmatprep.subr.mxu0 0.0
  %1524 = vmatpush1.msra.mxu0 %v800
  %1525 = vmatprep.subr.mxu0 0.0
  %1526 = vmatpush2.msra.mxu0 0.0
  %1527 = vmatprep.subr.mxu0 0.0
  %1528 = vmatpush2.msra.mxu0 0.0
  %1529 = vmatprep.subr.mxu0 0.0
  %1530 = vmatpush2.msra.mxu0 0.0
  %1531 = vmatprep.subr.mxu0 0.0
  %1532 = vmatpush2.msra.mxu0 0.0
  %1533 = vmatprep.subr.mxu0 0.0
  %1534 = vmatpush2.msra.mxu0 0.0
  %1535 = vmatprep.subr.mxu0 0.0
  %1536 = vmatpush2.msra.mxu0 0.0
  %1537 = vmatprep.subr.mxu0 0.0
  %1538 = vmatpush2.msra.mxu0 0.0
  %1539 = vmatprep.subr.mxu0 0.0
  %1540 = vmatpush2.msra.mxu0 0.0
  %1541 = vmatprep.subr.mxu0 0.0
  %1542 = vmatpush2.msra.mxu0 0.0
  %1543 = vmatprep.subr.mxu0 0.0
  %1544 = vmatpush2.msra.mxu0 0.0
  %1545 = vmatprep.subr.mxu0 0.0
  %1546 = vmatpush2.msra.mxu0 0.0
  %1547 = vmatprep.subr.mxu0 0.0
  %1548 = vmatpush2.msra.mxu0 0.0
  %1549 = vmatprep.subr.mxu0 0.0
  %1550 = vmatpush2.msra.mxu0 0.0
  %1551 = vmatprep.subr.mxu0 0.0
  %1552 = vmatpush2.msra.mxu0 0.0
  %1553 = vmatprep.subr.mxu0 0.0
  %1554 = vmatpush2.msra.mxu0 0.0
  %1555 = vmatprep.subr.mxu0 0.0
  %1556 = vmatpush2.msra.mxu0 0.0
  %1557 = vmatprep.mubr.f32.mxu0 0.0
  %1558 = vmatmul.mubr.f32.gmra.mxu0 %v1488
  %v1559 = vpop.f32.mrf.mxu0
  %v1560 = vadd.f32 0.0, %v1559
  %v1561 = vpop.f32.mrf.mxu0
  %1562 = vmatprep.mubr.f32.mxu0 0.0
  %1563 = vmatmul.mubr.f32.gmra.mxu0 %v1491
  %v1564 = vpop.f32.mrf.mxu0
  %v1565 = vadd.f32 0.0, %v1564
  %v1566 = vpop.f32.mrf.mxu0
  %1567 = vdwg.mxu0
  %v1568 = vpack.c.bf16 %v1322, %v1317
  %v1569 = vpack.c.bf16 %v1403, %v1398
  %v1570 = vpack.c.bf16 %v1484, %v1479
  %v1571 = vpack.c.bf16 %v1565, %v1560
  %v1573 = vsel %vm806, %v1568, 0
  %vm1575 = vcmask 1043456
  %v1577 = vsel %vm1575, %v104, 0
  %1579 = vmatprep.subr.bf16.mxu0 0
  %1580 = vmatpush1.bf16.msra.mxu0 0
  %1581 = vmatprep.subr.bf16.mxu0 0
  %1582 = vmatpush1.bf16.msra.mxu0 0
  %1583 = vmatprep.subr.bf16.mxu0 0
  %1584 = vmatpush1.bf16.msra.mxu0 0
  %1585 = vmatprep.subr.bf16.mxu0 0
  %1586 = vmatpush1.bf16.msra.mxu0 0
  %1587 = vmatprep.subr.bf16.mxu0 0
  %1588 = vmatpush1.bf16.msra.mxu0 0
  %1589 = vmatprep.subr.bf16.mxu0 0
  %1590 = vmatpush1.bf16.msra.mxu0 0
  %1591 = vmatprep.subr.bf16.mxu0 0
  %1592 = vmatpush1.bf16.msra.mxu0 0
  %1593 = vmatprep.subr.bf16.mxu0 0
  %1594 = vmatpush1.bf16.msra.mxu0 %v1577
  %1595 = vmatprep.subr.bf16.mxu0 0
  %1596 = vmatpush2.bf16.msra.mxu0 0
  %1597 = vmatprep.subr.bf16.mxu0 0
  %1598 = vmatpush2.bf16.msra.mxu0 0
  %1599 = vmatprep.subr.bf16.mxu0 0
  %1600 = vmatpush2.bf16.msra.mxu0 0
  %1601 = vmatprep.subr.bf16.mxu0 0
  %1602 = vmatpush2.bf16.msra.mxu0 0
  %1603 = vmatprep.subr.bf16.mxu0 0
  %1604 = vmatpush2.bf16.msra.mxu0 0
  %1605 = vmatprep.subr.bf16.mxu0 0
  %1606 = vmatpush2.bf16.msra.mxu0 0
  %1607 = vmatprep.subr.bf16.mxu0 0
  %1608 = vmatpush2.bf16.msra.mxu0 0
  %1609 = vmatprep.subr.bf16.mxu0 0
  %1610 = vmatpush2.bf16.msra.mxu0 0
  %1611 = vmatprep.mubr.bf16.mxu0 0
  %1612 = vmatmul.mubr.bf16.gmra.mxu0 %v1573
  %v1613 = vpop.f32.mrf.mxu0
  %v1614 = vadd.f32 0.0, %v1613
  %v1615 = vpop.f32.mrf.mxu0
  %v1616 = vpop.f32.mrf.mxu0
  %v1617 = vadd.f32 0.0, %v1616
  %v1618 = vpop.f32.mrf.mxu0
  %1619 = vdwg.mxu0
  %v1621 = vsel %vm806, %v1569, 0
  %v1624 = vsel %vm1575, %v105, 0
  %1626 = vmatprep.subr.bf16.mxu0 0
  %1627 = vmatpush1.bf16.msra.mxu0 0
  %1628 = vmatprep.subr.bf16.mxu0 0
  %1629 = vmatpush1.bf16.msra.mxu0 0
  %1630 = vmatprep.subr.bf16.mxu0 0
  %1631 = vmatpush1.bf16.msra.mxu0 0
  %1632 = vmatprep.subr.bf16.mxu0 0
  %1633 = vmatpush1.bf16.msra.mxu0 0
  %1634 = vmatprep.subr.bf16.mxu0 0
  %1635 = vmatpush1.bf16.msra.mxu0 0
  %1636 = vmatprep.subr.bf16.mxu0 0
  %1637 = vmatpush1.bf16.msra.mxu0 0
  %1638 = vmatprep.subr.bf16.mxu0 0
  %1639 = vmatpush1.bf16.msra.mxu0 0
  %1640 = vmatprep.subr.bf16.mxu0 0
  %1641 = vmatpush1.bf16.msra.mxu0 %v1624
  %1642 = vmatprep.subr.bf16.mxu0 0
  %1643 = vmatpush2.bf16.msra.mxu0 0
  %1644 = vmatprep.subr.bf16.mxu0 0
  %1645 = vmatpush2.bf16.msra.mxu0 0
  %1646 = vmatprep.subr.bf16.mxu0 0
  %1647 = vmatpush2.bf16.msra.mxu0 0
  %1648 = vmatprep.subr.bf16.mxu0 0
  %1649 = vmatpush2.bf16.msra.mxu0 0
  %1650 = vmatprep.subr.bf16.mxu0 0
  %1651 = vmatpush2.bf16.msra.mxu0 0
  %1652 = vmatprep.subr.bf16.mxu0 0
  %1653 = vmatpush2.bf16.msra.mxu0 0
  %1654 = vmatprep.subr.bf16.mxu0 0
  %1655 = vmatpush2.bf16.msra.mxu0 0
  %1656 = vmatprep.subr.bf16.mxu0 0
  %1657 = vmatpush2.bf16.msra.mxu0 0
  %1658 = vmatprep.mubr.bf16.mxu0 0
  %1659 = vmatmul.mubr.bf16.gmra.mxu0 %v1621
  %v1660 = vpop.f32.mrf.mxu0
  %v1661 = vadd.f32 0.0, %v1660
  %v1662 = vpop.f32.mrf.mxu0
  %v1663 = vpop.f32.mrf.mxu0
  %v1664 = vadd.f32 0.0, %v1663
  %v1665 = vpop.f32.mrf.mxu0
  %1666 = vdwg.mxu0
  %v1668 = vsel %vm806, %v1570, 0
  %v1671 = vsel %vm1575, %v106, 0
  %1673 = vmatprep.subr.bf16.mxu0 0
  %1674 = vmatpush1.bf16.msra.mxu0 0
  %1675 = vmatprep.subr.bf16.mxu0 0
  %1676 = vmatpush1.bf16.msra.mxu0 0
  %1677 = vmatprep.subr.bf16.mxu0 0
  %1678 = vmatpush1.bf16.msra.mxu0 0
  %1679 = vmatprep.subr.bf16.mxu0 0
  %1680 = vmatpush1.bf16.msra.mxu0 0
  %1681 = vmatprep.subr.bf16.mxu0 0
  %1682 = vmatpush1.bf16.msra.mxu0 0
  %1683 = vmatprep.subr.bf16.mxu0 0
  %1684 = vmatpush1.bf16.msra.mxu0 0
  %1685 = vmatprep.subr.bf16.mxu0 0
  %1686 = vmatpush1.bf16.msra.mxu0 0
  %1687 = vmatprep.subr.bf16.mxu0 0
  %1688 = vmatpush1.bf16.msra.mxu0 %v1671
  %1689 = vmatprep.subr.bf16.mxu0 0
  %1690 = vmatpush2.bf16.msra.mxu0 0
  %1691 = vmatprep.subr.bf16.mxu0 0
  %1692 = vmatpush2.bf16.msra.mxu0 0
  %1693 = vmatprep.subr.bf16.mxu0 0
  %1694 = vmatpush2.bf16.msra.mxu0 0
  %1695 = vmatprep.subr.bf16.mxu0 0
  %1696 = vmatpush2.bf16.msra.mxu0 0
  %1697 = vmatprep.subr.bf16.mxu0 0
  %1698 = vmatpush2.bf16.msra.mxu0 0
  %1699 = vmatprep.subr.bf16.mxu0 0
  %1700 = vmatpush2.bf16.msra.mxu0 0
  %1701 = vmatprep.subr.bf16.mxu0 0
  %1702 = vmatpush2.bf16.msra.mxu0 0
  %1703 = vmatprep.subr.bf16.mxu0 0
  %1704 = vmatpush2.bf16.msra.mxu0 0
  %1705 = vmatprep.mubr.bf16.mxu0 0
  %1706 = vmatmul.mubr.bf16.gmra.mxu0 %v1668
  %v1707 = vpop.f32.mrf.mxu0
  %v1708 = vadd.f32 0.0, %v1707
  %v1709 = vpop.f32.mrf.mxu0
  %v1710 = vpop.f32.mrf.mxu0
  %v1711 = vadd.f32 0.0, %v1710
  %v1712 = vpop.f32.mrf.mxu0
  %1713 = vdwg.mxu0
  %v1715 = vsel %vm806, %v1571, 0
  %v1718 = vsel %vm1575, %v107, 0
  %1720 = vmatprep.subr.bf16.mxu0 0
  %1721 = vmatpush1.bf16.msra.mxu0 0
  %1722 = vmatprep.subr.bf16.mxu0 0
  %1723 = vmatpush1.bf16.msra.mxu0 0
  %1724 = vmatprep.subr.bf16.mxu0 0
  %1725 = vmatpush1.bf16.msra.mxu0 0
  %1726 = vmatprep.subr.bf16.mxu0 0
  %1727 = vmatpush1.bf16.msra.mxu0 0
  %1728 = vmatprep.subr.bf16.mxu0 0
  %1729 = vmatpush1.bf16.msra.mxu0 0
  %1730 = vmatprep.subr.bf16.mxu0 0
  %1731 = vmatpush1.bf16.msra.mxu0 0
  %1732 = vmatprep.subr.bf16.mxu0 0
  %1733 = vmatpush1.bf16.msra.mxu0 0
  %1734 = vmatprep.subr.bf16.mxu0 0
  %1735 = vmatpush1.bf16.msra.mxu0 %v1718
  %1736 = vmatprep.subr.bf16.mxu0 0
  %1737 = vmatpush2.bf16.msra.mxu0 0
  %1738 = vmatprep.subr.bf16.mxu0 0
  %1739 = vmatpush2.bf16.msra.mxu0 0
  %1740 = vmatprep.subr.bf16.mxu0 0
  %1741 = vmatpush2.bf16.msra.mxu0 0
  %1742 = vmatprep.subr.bf16.mxu0 0
  %1743 = vmatpush2.bf16.msra.mxu0 0
  %1744 = vmatprep.subr.bf16.mxu0 0
  %1745 = vmatpush2.bf16.msra.mxu0 0
  %1746 = vmatprep.subr.bf16.mxu0 0
  %1747 = vmatpush2.bf16.msra.mxu0 0
  %1748 = vmatprep.subr.bf16.mxu0 0
  %1749 = vmatpush2.bf16.msra.mxu0 0
  %1750 = vmatprep.subr.bf16.mxu0 0
  %1751 = vmatpush2.bf16.msra.mxu0 0
  %1752 = vmatprep.mubr.bf16.mxu0 0
  %1753 = vmatmul.mubr.bf16.gmra.mxu0 %v1715
  %v1754 = vpop.f32.mrf.mxu0
  %v1755 = vadd.f32 0.0, %v1754
  %v1756 = vpop.f32.mrf.mxu0
  %v1757 = vpop.f32.mrf.mxu0
  %v1758 = vadd.f32 0.0, %v1757
  %v1759 = vpop.f32.mrf.mxu0
  %1760 = vdwg.mxu0
  %v1761 = vsel %vm122, %v1614, 0.0
  %v1762 = vsel %vm122, %v1661, 0.0
  %v1763 = vadd.f32 %v1761, %v1762
  %v1764 = vsel %vm122, %v1708, 0.0
  %v1765 = vadd.f32 %v1763, %v1764
  %v1766 = vsel %vm122, %v1755, 0.0
  %v1767 = vadd.f32 %v1765, %v1766
  %v1768 = vsel %vm122, %v1617, 0.0
  %v1769 = vsel %vm122, %v1664, 0.0
  %v1770 = vadd.f32 %v1768, %v1769
  %v1771 = vsel %vm122, %v1711, 0.0
  %v1772 = vadd.f32 %v1770, %v1771
  %v1773 = vsel %vm122, %v1758, 0.0
  %v1774 = vadd.f32 %v1772, %v1773
  %v1775 = vadd.f32 %v48, %v1767
  %v1776 = vadd.f32 %v49, %v1774
  %v1777 = vsel %vm122, %v1775, 0.0
  %1778 = vadd.xlane.f32.xlu0 %v1777
  %v1779 = vpop.xlane.xlu0 %1778
  %v1780 = vsel %vm122, %v1776, 0.0
  %1781 = vadd.xlane.f32.xlu0 %v1780
  %v1782 = vpop.xlane.xlu0 %1781
  %v1783 = vmul.f32 %v1779, %v129
  %v1784 = vmul.f32 %v1782, %v129
  %v1785 = vsub.f32 %v1775, %v1783
  %v1786 = vsub.f32 %v1776, %v1784
  %v1787 = vmul.f32 %v1785, %v1785
  %v1788 = vmul.f32 %v1786, %v1786
  %v1789 = vsel %vm122, %v1787, 0.0
  %1790 = vadd.xlane.f32.xlu0 %v1789
  %v1791 = vpop.xlane.xlu0 %1790
  %v1792 = vsel %vm122, %v1788, 0.0
  %1793 = vadd.xlane.f32.xlu0 %v1792
  %v1794 = vpop.xlane.xlu0 %1793
  %v1795 = vmul.f32 %v1791, %v129
  %v1796 = vmul.f32 %v1794, %v129
  %v1797 = vadd.f32 %v1795, 1e-06
  %v1798 = vadd.f32 %v1796, 1e-06
  %v1799 = vrsqrt.pop %v1797
  %v1800 = vrsqrt.pop %v1798
  %v1801 = vmul.f32 %v1785, %v1799
  %v1802 = vmul.f32 %v1786, %v1800
  %v1804 = vlaneseq
  %v1805 = vshrl.u32 %v1804, 7
  %v1806 = vsub.s32 0, %v1805
  %v1807 = vrot.slane %v54, %v1806
  %v1809 = vmul.f32 %v1801, %v1807
  %v1810 = vmul.f32 %v1802, %v1807
  %v1812 = vlaneseq
  %v1813 = vshrl.u32 %v1812, 7
  %v1814 = vsub.s32 0, %v1813
  %v1815 = vrot.slane %v55, %v1814
  %v1817 = vadd.f32 %v1809, %v1815
  %v1818 = vadd.f32 %v1810, %v1815
  %v1819 = vpack.c.bf16 %v1818, %v1817
  %v1821 = vlaneseq
  %v1822 = vshrl.u32 %v1821, 7
  %v1823 = vsub.s32 0, %v1822
  %v1824 = vrot.slane %v112, %v1823
  %v1830 = vunpack.c.l.b16 %v108
  %v1831 = vunpack.c.l.b16 %v109
  %v1832 = vunpack.c.l.b16 %v110
  %v1833 = vunpack.c.l.b16 %v111
  %v1834 = vpack.c.b16 %v1831, %v1830
  %v1835 = vpack.c.b16 %v1833, %v1832
  %v1839 = vsel %vm122, %v1819, 0
  %1841 = vmatprep.subr.bf16.mxu0 0
  %1842 = vmatpush1.bf16.msra.mxu0 0
  %1843 = vmatprep.subr.bf16.mxu0 0
  %1844 = vmatpush1.bf16.msra.mxu0 0
  %1845 = vmatprep.subr.bf16.mxu0 0
  %1846 = vmatpush1.bf16.msra.mxu0 0
  %1847 = vmatprep.subr.bf16.mxu0 0
  %1848 = vmatpush1.bf16.msra.mxu0 0
  %1849 = vmatprep.subr.bf16.mxu0 0
  %1850 = vmatpush1.bf16.msra.mxu0 0
  %1851 = vmatprep.subr.bf16.mxu0 0
  %1852 = vmatpush1.bf16.msra.mxu0 0
  %1853 = vmatprep.subr.bf16.mxu0 0
  %1854 = vmatpush1.bf16.msra.mxu0 %v1835
  %1855 = vmatprep.subr.bf16.mxu0 0
  %1856 = vmatpush1.bf16.msra.mxu0 %v1834
  %1857 = vmatprep.subr.bf16.mxu0 0
  %1858 = vmatpush2.bf16.msra.mxu0 0
  %1859 = vmatprep.subr.bf16.mxu0 0
  %1860 = vmatpush2.bf16.msra.mxu0 0
  %1861 = vmatprep.subr.bf16.mxu0 0
  %1862 = vmatpush2.bf16.msra.mxu0 0
  %1863 = vmatprep.subr.bf16.mxu0 0
  %1864 = vmatpush2.bf16.msra.mxu0 0
  %1865 = vmatprep.subr.bf16.mxu0 0
  %1866 = vmatpush2.bf16.msra.mxu0 0
  %1867 = vmatprep.subr.bf16.mxu0 0
  %1868 = vmatpush2.bf16.msra.mxu0 0
  %1869 = vmatprep.subr.bf16.mxu0 0
  %1870 = vmatpush2.bf16.msra.mxu0 0
  %1871 = vmatprep.subr.bf16.mxu0 0
  %1872 = vmatpush2.bf16.msra.mxu0 0
  %1873 = vmatprep.mubr.bf16.mxu0 0
  %1874 = vmatmul.mubr.bf16.gmra.mxu0 %v1839
  %v1875 = vpop.f32.mrf.mxu0
  %v1876 = vadd.f32 %v1824, %v1875
  %v1877 = vpop.f32.mrf.mxu0
  %v1878 = vpop.f32.mrf.mxu0
  %v1879 = vadd.f32 %v1824, %v1878
  %v1880 = vpop.f32.mrf.mxu0
  %1881 = vdwg.mxu0
  %v1882 = vmax.f32 %v1876, 0.0
  %v1883 = vmax.f32 %v1879, 0.0
  %v1884 = vpack.c.bf16 %v1883, %v1882
  %v1886 = vlaneseq
  %v1887 = vshrl.u32 %v1886, 7
  %v1888 = vsub.s32 0, %v1887
  %v1889 = vrot.slane %v121, %v1888
  %v1899 = vunpack.c.l.b16 %v113
  %v1900 = vunpack.c.l.b16 %v114
  %v1901 = vunpack.c.l.b16 %v115
  %v1902 = vunpack.c.l.b16 %v116
  %v1903 = vunpack.c.l.b16 %v117
  %v1904 = vunpack.c.l.b16 %v118
  %v1905 = vunpack.c.l.b16 %v119
  %v1906 = vunpack.c.l.b16 %v120
  %v1907 = vpack.c.b16 %v1900, %v1899
  %v1908 = vpack.c.b16 %v1902, %v1901
  %v1909 = vpack.c.b16 %v1904, %v1903
  %v1910 = vpack.c.b16 %v1906, %v1905
  %vm1915 = vcmask 523264
  %v1917 = vsel %vm1915, %v1884, 0
  %1919 = vmatprep.subr.bf16.mxu0 0
  %1920 = vmatpush1.bf16.msra.mxu0 0
  %1921 = vmatprep.subr.bf16.mxu0 0
  %1922 = vmatpush1.bf16.msra.mxu0 0
  %1923 = vmatprep.subr.bf16.mxu0 0
  %1924 = vmatpush1.bf16.msra.mxu0 0
  %1925 = vmatprep.subr.bf16.mxu0 0
  %1926 = vmatpush1.bf16.msra.mxu0 0
  %1927 = vmatprep.subr.bf16.mxu0 0
  %1928 = vmatpush1.bf16.msra.mxu0 %v1910
  %1929 = vmatprep.subr.bf16.mxu0 0
  %1930 = vmatpush1.bf16.msra.mxu0 %v1909
  %1931 = vmatprep.subr.bf16.mxu0 0
  %1932 = vmatpush1.bf16.msra.mxu0 %v1908
  %1933 = vmatprep.subr.bf16.mxu0 0
  %1934 = vmatpush1.bf16.msra.mxu0 %v1907
  %1935 = vmatprep.subr.bf16.mxu0 0
  %1936 = vmatpush2.bf16.msra.mxu0 0
  %1937 = vmatprep.subr.bf16.mxu0 0
  %1938 = vmatpush2.bf16.msra.mxu0 0
  %1939 = vmatprep.subr.bf16.mxu0 0
  %1940 = vmatpush2.bf16.msra.mxu0 0
  %1941 = vmatprep.subr.bf16.mxu0 0
  %1942 = vmatpush2.bf16.msra.mxu0 0
  %1943 = vmatprep.subr.bf16.mxu0 0
  %1944 = vmatpush2.bf16.msra.mxu0 0
  %1945 = vmatprep.subr.bf16.mxu0 0
  %1946 = vmatpush2.bf16.msra.mxu0 0
  %1947 = vmatprep.subr.bf16.mxu0 0
  %1948 = vmatpush2.bf16.msra.mxu0 0
  %1949 = vmatprep.subr.bf16.mxu0 0
  %1950 = vmatpush2.bf16.msra.mxu0 0
  %1951 = vmatprep.mubr.bf16.mxu0 0
  %1952 = vmatmul.mubr.bf16.gmra.mxu0 %v1917
  %v1953 = vpop.f32.mrf.mxu0
  %v1954 = vadd.f32 %v1889, %v1953
  %v1955 = vpop.f32.mrf.mxu0
  %v1956 = vpop.f32.mrf.mxu0
  %v1957 = vadd.f32 %v1889, %v1956
  %v1958 = vpop.f32.mrf.mxu0
  %1959 = vdwg.mxu0
  %v1960 = vadd.f32 %v1775, %v1954
  %v1961 = vadd.f32 %v1776, %v1957
  %s1962 = scalar_lea.vmem %s2, 1
  %v1963 = vld [vmem:[%s1962] sm:$0x1]
  %s1964 = scalar_lea.vmem %s3, 1
  %v1965 = vld [vmem:[%s1964] sm:$0x1]
  %s1966 = scalar_lea.vmem %s6, 1
  %v1967 = vld [vmem:[%s1966] sm:$0x1]
  %s1968 = scalar_lea.vmem %s7, 1
  %v1969 = vld [vmem:[%s1968] sm:$0x1]
  %s1970 = scalar_lea.vmem %s4, 192
  %v1971 = vld [vmem:[%s1970] sm:$0xf]
  %v1972 = vld [vmem:[%s1970 + $0x4] sm:$0xf]
  %v1973 = vld [vmem:[%s1970 + $0x8] sm:$0xf]
  %v1974 = vld [vmem:[%s1970 + $0xc] sm:$0xf]
  %v1975 = vld [vmem:[%s1970 + $0x10] sm:$0xf]
  %v1976 = vld [vmem:[%s1970 + $0x14] sm:$0xf]
  %v1977 = vld [vmem:[%s1970 + $0x18] sm:$0xf]
  %v1978 = vld [vmem:[%s1970 + $0x1c] sm:$0xf]
  %v1979 = vld [vmem:[%s1970 + $0x20] sm:$0xf]
  %v1980 = vld [vmem:[%s1970 + $0x24] sm:$0xf]
  %v1981 = vld [vmem:[%s1970 + $0x28] sm:$0xf]
  %v1982 = vld [vmem:[%s1970 + $0x2c] sm:$0xf]
  %v1983 = vld [vmem:[%s1970 + $0x30] sm:$0xf]
  %v1984 = vld [vmem:[%s1970 + $0x34] sm:$0xf]
  %v1985 = vld [vmem:[%s1970 + $0x38] sm:$0xf]
  %v1986 = vld [vmem:[%s1970 + $0x3c] sm:$0xf]
  %v1987 = vld [vmem:[%s1970 + $0x40] sm:$0xf]
  %v1988 = vld [vmem:[%s1970 + $0x44] sm:$0xf]
  %v1989 = vld [vmem:[%s1970 + $0x48] sm:$0xf]
  %v1990 = vld [vmem:[%s1970 + $0x4c] sm:$0xf]
  %v1991 = vld [vmem:[%s1970 + $0x50] sm:$0xf]
  %v1992 = vld [vmem:[%s1970 + $0x54] sm:$0xf]
  %v1993 = vld [vmem:[%s1970 + $0x58] sm:$0xf]
  %v1994 = vld [vmem:[%s1970 + $0x5c] sm:$0xf]
  %v1995 = vld [vmem:[%s1970 + $0x60] sm:$0xf]
  %v1996 = vld [vmem:[%s1970 + $0x64] sm:$0xf]
  %v1997 = vld [vmem:[%s1970 + $0x68] sm:$0xf]
  %v1998 = vld [vmem:[%s1970 + $0x6c] sm:$0xf]
  %v1999 = vld [vmem:[%s1970 + $0x70] sm:$0xf]
  %v2000 = vld [vmem:[%s1970 + $0x74] sm:$0xf]
  %v2001 = vld [vmem:[%s1970 + $0x78] sm:$0xf]
  %v2002 = vld [vmem:[%s1970 + $0x7c] sm:$0xf]
  %v2003 = vld [vmem:[%s1970 + $0x80] sm:$0xf]
  %v2004 = vld [vmem:[%s1970 + $0x84] sm:$0xf]
  %v2005 = vld [vmem:[%s1970 + $0x88] sm:$0xf]
  %v2006 = vld [vmem:[%s1970 + $0x8c] sm:$0xf]
  %v2007 = vld [vmem:[%s1970 + $0x90] sm:$0xf]
  %v2008 = vld [vmem:[%s1970 + $0x94] sm:$0xf]
  %v2009 = vld [vmem:[%s1970 + $0x98] sm:$0xf]
  %v2010 = vld [vmem:[%s1970 + $0x9c] sm:$0xf]
  %v2011 = vld [vmem:[%s1970 + $0xa0] sm:$0xf]
  %v2012 = vld [vmem:[%s1970 + $0xa4] sm:$0xf]
  %v2013 = vld [vmem:[%s1970 + $0xa8] sm:$0xf]
  %v2014 = vld [vmem:[%s1970 + $0xac] sm:$0xf]
  %v2015 = vld [vmem:[%s1970 + $0xb0] sm:$0xf]
  %v2016 = vld [vmem:[%s1970 + $0xb4] sm:$0xf]
  %v2017 = vld [vmem:[%s1970 + $0xb8] sm:$0xf]
  %v2018 = vld [vmem:[%s1970 + $0xbc] sm:$0xf]
  %s2019 = scalar_lea.vmem %s5, 16
  %v2020 = vld [vmem:[%s2019] sm:$0xf]
  %v2021 = vld [vmem:[%s2019 + $0x4] sm:$0xf]
  %v2022 = vld [vmem:[%s2019 + $0x8] sm:$0xf]
  %v2023 = vld [vmem:[%s2019 + $0xc] sm:$0xf]
  %s2024 = scalar_lea.vmem %s8, 16
  %v2025 = vld [vmem:[%s2024] sm:$0xf]
  %v2026 = vld [vmem:[%s2024 + $0x4] sm:$0xf]
  %v2027 = vld [vmem:[%s2024 + $0x8] sm:$0xf]
  %v2028 = vld [vmem:[%s2024 + $0xc] sm:$0xf]
  %s2029 = scalar_lea.vmem %s9, 1
  %v2030 = vld [vmem:[%s2029] sm:$0x1]
  %s2031 = scalar_lea.vmem %s10, 32
  %v2032 = vld [vmem:[%s2031] sm:$0xf]
  %v2033 = vld [vmem:[%s2031 + $0x4] sm:$0xf]
  %v2034 = vld [vmem:[%s2031 + $0x8] sm:$0xf]
  %v2035 = vld [vmem:[%s2031 + $0xc] sm:$0xf]
  %v2036 = vld [vmem:[%s2031 + $0x10] sm:$0xf]
  %v2037 = vld [vmem:[%s2031 + $0x14] sm:$0xf]
  %v2038 = vld [vmem:[%s2031 + $0x18] sm:$0xf]
  %v2039 = vld [vmem:[%s2031 + $0x1c] sm:$0xf]
  %s2040 = scalar_lea.vmem %s11, 1
  %v2041 = vld [vmem:[%s2040] sm:$0x1]
  %v2042 = vsel %vm122, %v1960, 0.0
  %2043 = vadd.xlane.f32.xlu0 %v2042
  %v2044 = vpop.xlane.xlu0 %2043
  %v2045 = vsel %vm122, %v1961, 0.0
  %2046 = vadd.xlane.f32.xlu0 %v2045
  %v2047 = vpop.xlane.xlu0 %2046
  %v2048 = vmul.f32 %v2044, %v129
  %v2049 = vmul.f32 %v2047, %v129
  %v2050 = vsub.f32 %v1960, %v2048
  %v2051 = vsub.f32 %v1961, %v2049
  %v2052 = vmul.f32 %v2050, %v2050
  %v2053 = vmul.f32 %v2051, %v2051
  %v2054 = vsel %vm122, %v2052, 0.0
  %2055 = vadd.xlane.f32.xlu0 %v2054
  %v2056 = vpop.xlane.xlu0 %2055
  %v2057 = vsel %vm122, %v2053, 0.0
  %2058 = vadd.xlane.f32.xlu0 %v2057
  %v2059 = vpop.xlane.xlu0 %2058
  %v2060 = vmul.f32 %v2056, %v129
  %v2061 = vmul.f32 %v2059, %v129
  %v2062 = vadd.f32 %v2060, 1e-06
  %v2063 = vadd.f32 %v2061, 1e-06
  %v2064 = vrsqrt.pop %v2062
  %v2065 = vrsqrt.pop %v2063
  %v2066 = vmul.f32 %v2050, %v2064
  %v2067 = vmul.f32 %v2051, %v2065
  %v2069 = vlaneseq
  %v2070 = vshrl.u32 %v2069, 7
  %v2071 = vsub.s32 0, %v2070
  %v2072 = vrot.slane %v1963, %v2071
  %v2074 = vmul.f32 %v2066, %v2072
  %v2075 = vmul.f32 %v2067, %v2072
  %v2077 = vlaneseq
  %v2078 = vshrl.u32 %v2077, 7
  %v2079 = vsub.s32 0, %v2078
  %v2080 = vrot.slane %v1965, %v2079
  %v2082 = vadd.f32 %v2074, %v2080
  %v2083 = vadd.f32 %v2075, %v2080
  %v2084 = vpack.c.bf16 %v2083, %v2082
  %v2089 = vunpack.c.l.b16 %v1971
  %v2090 = vunpack.c.l.b16 %v1972
  %v2091 = vunpack.c.l.b16 %v1973
  %v2092 = vunpack.c.l.b16 %v1974
  %v2093 = vpack.c.b16 %v2090, %v2089
  %v2094 = vpack.c.b16 %v2092, %v2091
  %v2098 = vsel %vm122, %v2084, 0
  %2100 = vmatprep.subr.bf16.mxu0 0
  %2101 = vmatpush1.bf16.msra.mxu0 0
  %2102 = vmatprep.subr.bf16.mxu0 0
  %2103 = vmatpush1.bf16.msra.mxu0 0
  %2104 = vmatprep.subr.bf16.mxu0 0
  %2105 = vmatpush1.bf16.msra.mxu0 0
  %2106 = vmatprep.subr.bf16.mxu0 0
  %2107 = vmatpush1.bf16.msra.mxu0 0
  %2108 = vmatprep.subr.bf16.mxu0 0
  %2109 = vmatpush1.bf16.msra.mxu0 0
  %2110 = vmatprep.subr.bf16.mxu0 0
  %2111 = vmatpush1.bf16.msra.mxu0 0
  %2112 = vmatprep.subr.bf16.mxu0 0
  %2113 = vmatpush1.bf16.msra.mxu0 %v2094
  %2114 = vmatprep.subr.bf16.mxu0 0
  %2115 = vmatpush1.bf16.msra.mxu0 %v2093
  %2116 = vmatprep.subr.bf16.mxu0 0
  %2117 = vmatpush2.bf16.msra.mxu0 0
  %2118 = vmatprep.subr.bf16.mxu0 0
  %2119 = vmatpush2.bf16.msra.mxu0 0
  %2120 = vmatprep.subr.bf16.mxu0 0
  %2121 = vmatpush2.bf16.msra.mxu0 0
  %2122 = vmatprep.subr.bf16.mxu0 0
  %2123 = vmatpush2.bf16.msra.mxu0 0
  %2124 = vmatprep.subr.bf16.mxu0 0
  %2125 = vmatpush2.bf16.msra.mxu0 0
  %2126 = vmatprep.subr.bf16.mxu0 0
  %2127 = vmatpush2.bf16.msra.mxu0 0
  %2128 = vmatprep.subr.bf16.mxu0 0
  %2129 = vmatpush2.bf16.msra.mxu0 0
  %2130 = vmatprep.subr.bf16.mxu0 0
  %2131 = vmatpush2.bf16.msra.mxu0 0
  %2132 = vmatprep.mubr.bf16.mxu0 0
  %2133 = vmatmul.mubr.bf16.gmra.mxu0 %v2098
  %v2134 = vpop.f32.mrf.mxu0
  %v2135 = vadd.f32 0.0, %v2134
  %v2136 = vpop.f32.mrf.mxu0
  %v2137 = vpop.f32.mrf.mxu0
  %v2138 = vadd.f32 0.0, %v2137
  %v2139 = vpop.f32.mrf.mxu0
  %2140 = vdwg.mxu0
  %v2145 = vunpack.c.l.b16 %v1975
  %v2146 = vunpack.c.l.b16 %v1976
  %v2147 = vunpack.c.l.b16 %v1977
  %v2148 = vunpack.c.l.b16 %v1978
  %v2149 = vpack.c.b16 %v2146, %v2145
  %v2150 = vpack.c.b16 %v2148, %v2147
  %2153 = vmatprep.subr.bf16.mxu0 0
  %2154 = vmatpush1.bf16.msra.mxu0 0
  %2155 = vmatprep.subr.bf16.mxu0 0
  %2156 = vmatpush1.bf16.msra.mxu0 0
  %2157 = vmatprep.subr.bf16.mxu0 0
  %2158 = vmatpush1.bf16.msra.mxu0 0
  %2159 = vmatprep.subr.bf16.mxu0 0
  %2160 = vmatpush1.bf16.msra.mxu0 0
  %2161 = vmatprep.subr.bf16.mxu0 0
  %2162 = vmatpush1.bf16.msra.mxu0 0
  %2163 = vmatprep.subr.bf16.mxu0 0
  %2164 = vmatpush1.bf16.msra.mxu0 0
  %2165 = vmatprep.subr.bf16.mxu0 0
  %2166 = vmatpush1.bf16.msra.mxu0 %v2150
  %2167 = vmatprep.subr.bf16.mxu0 0
  %2168 = vmatpush1.bf16.msra.mxu0 %v2149
  %2169 = vmatprep.subr.bf16.mxu0 0
  %2170 = vmatpush2.bf16.msra.mxu0 0
  %2171 = vmatprep.subr.bf16.mxu0 0
  %2172 = vmatpush2.bf16.msra.mxu0 0
  %2173 = vmatprep.subr.bf16.mxu0 0
  %2174 = vmatpush2.bf16.msra.mxu0 0
  %2175 = vmatprep.subr.bf16.mxu0 0
  %2176 = vmatpush2.bf16.msra.mxu0 0
  %2177 = vmatprep.subr.bf16.mxu0 0
  %2178 = vmatpush2.bf16.msra.mxu0 0
  %2179 = vmatprep.subr.bf16.mxu0 0
  %2180 = vmatpush2.bf16.msra.mxu0 0
  %2181 = vmatprep.subr.bf16.mxu0 0
  %2182 = vmatpush2.bf16.msra.mxu0 0
  %2183 = vmatprep.subr.bf16.mxu0 0
  %2184 = vmatpush2.bf16.msra.mxu0 0
  %2185 = vmatprep.mubr.bf16.mxu0 0
  %2186 = vmatmul.mubr.bf16.gmra.mxu0 %v2098
  %v2187 = vpop.f32.mrf.mxu0
  %v2188 = vadd.f32 0.0, %v2187
  %v2189 = vpop.f32.mrf.mxu0
  %v2190 = vpop.f32.mrf.mxu0
  %v2191 = vadd.f32 0.0, %v2190
  %v2192 = vpop.f32.mrf.mxu0
  %2193 = vdwg.mxu0
  %v2198 = vunpack.c.l.b16 %v1979
  %v2199 = vunpack.c.l.b16 %v1980
  %v2200 = vunpack.c.l.b16 %v1981
  %v2201 = vunpack.c.l.b16 %v1982
  %v2202 = vpack.c.b16 %v2199, %v2198
  %v2203 = vpack.c.b16 %v2201, %v2200
  %2206 = vmatprep.subr.bf16.mxu0 0
  %2207 = vmatpush1.bf16.msra.mxu0 0
  %2208 = vmatprep.subr.bf16.mxu0 0
  %2209 = vmatpush1.bf16.msra.mxu0 0
  %2210 = vmatprep.subr.bf16.mxu0 0
  %2211 = vmatpush1.bf16.msra.mxu0 0
  %2212 = vmatprep.subr.bf16.mxu0 0
  %2213 = vmatpush1.bf16.msra.mxu0 0
  %2214 = vmatprep.subr.bf16.mxu0 0
  %2215 = vmatpush1.bf16.msra.mxu0 0
  %2216 = vmatprep.subr.bf16.mxu0 0
  %2217 = vmatpush1.bf16.msra.mxu0 0
  %2218 = vmatprep.subr.bf16.mxu0 0
  %2219 = vmatpush1.bf16.msra.mxu0 %v2203
  %2220 = vmatprep.subr.bf16.mxu0 0
  %2221 = vmatpush1.bf16.msra.mxu0 %v2202
  %2222 = vmatprep.subr.bf16.mxu0 0
  %2223 = vmatpush2.bf16.msra.mxu0 0
  %2224 = vmatprep.subr.bf16.mxu0 0
  %2225 = vmatpush2.bf16.msra.mxu0 0
  %2226 = vmatprep.subr.bf16.mxu0 0
  %2227 = vmatpush2.bf16.msra.mxu0 0
  %2228 = vmatprep.subr.bf16.mxu0 0
  %2229 = vmatpush2.bf16.msra.mxu0 0
  %2230 = vmatprep.subr.bf16.mxu0 0
  %2231 = vmatpush2.bf16.msra.mxu0 0
  %2232 = vmatprep.subr.bf16.mxu0 0
  %2233 = vmatpush2.bf16.msra.mxu0 0
  %2234 = vmatprep.subr.bf16.mxu0 0
  %2235 = vmatpush2.bf16.msra.mxu0 0
  %2236 = vmatprep.subr.bf16.mxu0 0
  %2237 = vmatpush2.bf16.msra.mxu0 0
  %2238 = vmatprep.mubr.bf16.mxu0 0
  %2239 = vmatmul.mubr.bf16.gmra.mxu0 %v2098
  %v2240 = vpop.f32.mrf.mxu0
  %v2241 = vadd.f32 0.0, %v2240
  %v2242 = vpop.f32.mrf.mxu0
  %v2243 = vpop.f32.mrf.mxu0
  %v2244 = vadd.f32 0.0, %v2243
  %v2245 = vpop.f32.mrf.mxu0
  %2246 = vdwg.mxu0
  %v2251 = vunpack.c.l.b16 %v1983
  %v2252 = vunpack.c.l.b16 %v1984
  %v2253 = vunpack.c.l.b16 %v1985
  %v2254 = vunpack.c.l.b16 %v1986
  %v2255 = vpack.c.b16 %v2252, %v2251
  %v2256 = vpack.c.b16 %v2254, %v2253
  %2259 = vmatprep.subr.bf16.mxu0 0
  %2260 = vmatpush1.bf16.msra.mxu0 0
  %2261 = vmatprep.subr.bf16.mxu0 0
  %2262 = vmatpush1.bf16.msra.mxu0 0
  %2263 = vmatprep.subr.bf16.mxu0 0
  %2264 = vmatpush1.bf16.msra.mxu0 0
  %2265 = vmatprep.subr.bf16.mxu0 0
  %2266 = vmatpush1.bf16.msra.mxu0 0
  %2267 = vmatprep.subr.bf16.mxu0 0
  %2268 = vmatpush1.bf16.msra.mxu0 0
  %2269 = vmatprep.subr.bf16.mxu0 0
  %2270 = vmatpush1.bf16.msra.mxu0 0
  %2271 = vmatprep.subr.bf16.mxu0 0
  %2272 = vmatpush1.bf16.msra.mxu0 %v2256
  %2273 = vmatprep.subr.bf16.mxu0 0
  %2274 = vmatpush1.bf16.msra.mxu0 %v2255
  %2275 = vmatprep.subr.bf16.mxu0 0
  %2276 = vmatpush2.bf16.msra.mxu0 0
  %2277 = vmatprep.subr.bf16.mxu0 0
  %2278 = vmatpush2.bf16.msra.mxu0 0
  %2279 = vmatprep.subr.bf16.mxu0 0
  %2280 = vmatpush2.bf16.msra.mxu0 0
  %2281 = vmatprep.subr.bf16.mxu0 0
  %2282 = vmatpush2.bf16.msra.mxu0 0
  %2283 = vmatprep.subr.bf16.mxu0 0
  %2284 = vmatpush2.bf16.msra.mxu0 0
  %2285 = vmatprep.subr.bf16.mxu0 0
  %2286 = vmatpush2.bf16.msra.mxu0 0
  %2287 = vmatprep.subr.bf16.mxu0 0
  %2288 = vmatpush2.bf16.msra.mxu0 0
  %2289 = vmatprep.subr.bf16.mxu0 0
  %2290 = vmatpush2.bf16.msra.mxu0 0
  %2291 = vmatprep.mubr.bf16.mxu0 0
  %2292 = vmatmul.mubr.bf16.gmra.mxu0 %v2098
  %v2293 = vpop.f32.mrf.mxu0
  %v2294 = vadd.f32 0.0, %v2293
  %v2295 = vpop.f32.mrf.mxu0
  %v2296 = vpop.f32.mrf.mxu0
  %v2297 = vadd.f32 0.0, %v2296
  %v2298 = vpop.f32.mrf.mxu0
  %2299 = vdwg.mxu0
  %v2304 = vunpack.c.l.b16 %v1987
  %v2305 = vunpack.c.l.b16 %v1988
  %v2306 = vunpack.c.l.b16 %v1989
  %v2307 = vunpack.c.l.b16 %v1990
  %v2308 = vpack.c.b16 %v2305, %v2304
  %v2309 = vpack.c.b16 %v2307, %v2306
  %2312 = vmatprep.subr.bf16.mxu0 0
  %2313 = vmatpush1.bf16.msra.mxu0 0
  %2314 = vmatprep.subr.bf16.mxu0 0
  %2315 = vmatpush1.bf16.msra.mxu0 0
  %2316 = vmatprep.subr.bf16.mxu0 0
  %2317 = vmatpush1.bf16.msra.mxu0 0
  %2318 = vmatprep.subr.bf16.mxu0 0
  %2319 = vmatpush1.bf16.msra.mxu0 0
  %2320 = vmatprep.subr.bf16.mxu0 0
  %2321 = vmatpush1.bf16.msra.mxu0 0
  %2322 = vmatprep.subr.bf16.mxu0 0
  %2323 = vmatpush1.bf16.msra.mxu0 0
  %2324 = vmatprep.subr.bf16.mxu0 0
  %2325 = vmatpush1.bf16.msra.mxu0 %v2309
  %2326 = vmatprep.subr.bf16.mxu0 0
  %2327 = vmatpush1.bf16.msra.mxu0 %v2308
  %2328 = vmatprep.subr.bf16.mxu0 0
  %2329 = vmatpush2.bf16.msra.mxu0 0
  %2330 = vmatprep.subr.bf16.mxu0 0
  %2331 = vmatpush2.bf16.msra.mxu0 0
  %2332 = vmatprep.subr.bf16.mxu0 0
  %2333 = vmatpush2.bf16.msra.mxu0 0
  %2334 = vmatprep.subr.bf16.mxu0 0
  %2335 = vmatpush2.bf16.msra.mxu0 0
  %2336 = vmatprep.subr.bf16.mxu0 0
  %2337 = vmatpush2.bf16.msra.mxu0 0
  %2338 = vmatprep.subr.bf16.mxu0 0
  %2339 = vmatpush2.bf16.msra.mxu0 0
  %2340 = vmatprep.subr.bf16.mxu0 0
  %2341 = vmatpush2.bf16.msra.mxu0 0
  %2342 = vmatprep.subr.bf16.mxu0 0
  %2343 = vmatpush2.bf16.msra.mxu0 0
  %2344 = vmatprep.mubr.bf16.mxu0 0
  %2345 = vmatmul.mubr.bf16.gmra.mxu0 %v2098
  %v2346 = vpop.f32.mrf.mxu0
  %v2347 = vadd.f32 0.0, %v2346
  %v2348 = vpop.f32.mrf.mxu0
  %v2349 = vpop.f32.mrf.mxu0
  %v2350 = vadd.f32 0.0, %v2349
  %v2351 = vpop.f32.mrf.mxu0
  %2352 = vdwg.mxu0
  %v2357 = vunpack.c.l.b16 %v1991
  %v2358 = vunpack.c.l.b16 %v1992
  %v2359 = vunpack.c.l.b16 %v1993
  %v2360 = vunpack.c.l.b16 %v1994
  %v2361 = vpack.c.b16 %v2358, %v2357
  %v2362 = vpack.c.b16 %v2360, %v2359
  %2365 = vmatprep.subr.bf16.mxu0 0
  %2366 = vmatpush1.bf16.msra.mxu0 0
  %2367 = vmatprep.subr.bf16.mxu0 0
  %2368 = vmatpush1.bf16.msra.mxu0 0
  %2369 = vmatprep.subr.bf16.mxu0 0
  %2370 = vmatpush1.bf16.msra.mxu0 0
  %2371 = vmatprep.subr.bf16.mxu0 0
  %2372 = vmatpush1.bf16.msra.mxu0 0
  %2373 = vmatprep.subr.bf16.mxu0 0
  %2374 = vmatpush1.bf16.msra.mxu0 0
  %2375 = vmatprep.subr.bf16.mxu0 0
  %2376 = vmatpush1.bf16.msra.mxu0 0
  %2377 = vmatprep.subr.bf16.mxu0 0
  %2378 = vmatpush1.bf16.msra.mxu0 %v2362
  %2379 = vmatprep.subr.bf16.mxu0 0
  %2380 = vmatpush1.bf16.msra.mxu0 %v2361
  %2381 = vmatprep.subr.bf16.mxu0 0
  %2382 = vmatpush2.bf16.msra.mxu0 0
  %2383 = vmatprep.subr.bf16.mxu0 0
  %2384 = vmatpush2.bf16.msra.mxu0 0
  %2385 = vmatprep.subr.bf16.mxu0 0
  %2386 = vmatpush2.bf16.msra.mxu0 0
  %2387 = vmatprep.subr.bf16.mxu0 0
  %2388 = vmatpush2.bf16.msra.mxu0 0
  %2389 = vmatprep.subr.bf16.mxu0 0
  %2390 = vmatpush2.bf16.msra.mxu0 0
  %2391 = vmatprep.subr.bf16.mxu0 0
  %2392 = vmatpush2.bf16.msra.mxu0 0
  %2393 = vmatprep.subr.bf16.mxu0 0
  %2394 = vmatpush2.bf16.msra.mxu0 0
  %2395 = vmatprep.subr.bf16.mxu0 0
  %2396 = vmatpush2.bf16.msra.mxu0 0
  %2397 = vmatprep.mubr.bf16.mxu0 0
  %2398 = vmatmul.mubr.bf16.gmra.mxu0 %v2098
  %v2399 = vpop.f32.mrf.mxu0
  %v2400 = vadd.f32 0.0, %v2399
  %v2401 = vpop.f32.mrf.mxu0
  %v2402 = vpop.f32.mrf.mxu0
  %v2403 = vadd.f32 0.0, %v2402
  %v2404 = vpop.f32.mrf.mxu0
  %2405 = vdwg.mxu0
  %v2410 = vunpack.c.l.b16 %v1995
  %v2411 = vunpack.c.l.b16 %v1996
  %v2412 = vunpack.c.l.b16 %v1997
  %v2413 = vunpack.c.l.b16 %v1998
  %v2414 = vpack.c.b16 %v2411, %v2410
  %v2415 = vpack.c.b16 %v2413, %v2412
  %2418 = vmatprep.subr.bf16.mxu0 0
  %2419 = vmatpush1.bf16.msra.mxu0 0
  %2420 = vmatprep.subr.bf16.mxu0 0
  %2421 = vmatpush1.bf16.msra.mxu0 0
  %2422 = vmatprep.subr.bf16.mxu0 0
  %2423 = vmatpush1.bf16.msra.mxu0 0
  %2424 = vmatprep.subr.bf16.mxu0 0
  %2425 = vmatpush1.bf16.msra.mxu0 0
  %2426 = vmatprep.subr.bf16.mxu0 0
  %2427 = vmatpush1.bf16.msra.mxu0 0
  %2428 = vmatprep.subr.bf16.mxu0 0
  %2429 = vmatpush1.bf16.msra.mxu0 0
  %2430 = vmatprep.subr.bf16.mxu0 0
  %2431 = vmatpush1.bf16.msra.mxu0 %v2415
  %2432 = vmatprep.subr.bf16.mxu0 0
  %2433 = vmatpush1.bf16.msra.mxu0 %v2414
  %2434 = vmatprep.subr.bf16.mxu0 0
  %2435 = vmatpush2.bf16.msra.mxu0 0
  %2436 = vmatprep.subr.bf16.mxu0 0
  %2437 = vmatpush2.bf16.msra.mxu0 0
  %2438 = vmatprep.subr.bf16.mxu0 0
  %2439 = vmatpush2.bf16.msra.mxu0 0
  %2440 = vmatprep.subr.bf16.mxu0 0
  %2441 = vmatpush2.bf16.msra.mxu0 0
  %2442 = vmatprep.subr.bf16.mxu0 0
  %2443 = vmatpush2.bf16.msra.mxu0 0
  %2444 = vmatprep.subr.bf16.mxu0 0
  %2445 = vmatpush2.bf16.msra.mxu0 0
  %2446 = vmatprep.subr.bf16.mxu0 0
  %2447 = vmatpush2.bf16.msra.mxu0 0
  %2448 = vmatprep.subr.bf16.mxu0 0
  %2449 = vmatpush2.bf16.msra.mxu0 0
  %2450 = vmatprep.mubr.bf16.mxu0 0
  %2451 = vmatmul.mubr.bf16.gmra.mxu0 %v2098
  %v2452 = vpop.f32.mrf.mxu0
  %v2453 = vadd.f32 0.0, %v2452
  %v2454 = vpop.f32.mrf.mxu0
  %v2455 = vpop.f32.mrf.mxu0
  %v2456 = vadd.f32 0.0, %v2455
  %v2457 = vpop.f32.mrf.mxu0
  %2458 = vdwg.mxu0
  %v2463 = vunpack.c.l.b16 %v1999
  %v2464 = vunpack.c.l.b16 %v2000
  %v2465 = vunpack.c.l.b16 %v2001
  %v2466 = vunpack.c.l.b16 %v2002
  %v2467 = vpack.c.b16 %v2464, %v2463
  %v2468 = vpack.c.b16 %v2466, %v2465
  %2471 = vmatprep.subr.bf16.mxu0 0
  %2472 = vmatpush1.bf16.msra.mxu0 0
  %2473 = vmatprep.subr.bf16.mxu0 0
  %2474 = vmatpush1.bf16.msra.mxu0 0
  %2475 = vmatprep.subr.bf16.mxu0 0
  %2476 = vmatpush1.bf16.msra.mxu0 0
  %2477 = vmatprep.subr.bf16.mxu0 0
  %2478 = vmatpush1.bf16.msra.mxu0 0
  %2479 = vmatprep.subr.bf16.mxu0 0
  %2480 = vmatpush1.bf16.msra.mxu0 0
  %2481 = vmatprep.subr.bf16.mxu0 0
  %2482 = vmatpush1.bf16.msra.mxu0 0
  %2483 = vmatprep.subr.bf16.mxu0 0
  %2484 = vmatpush1.bf16.msra.mxu0 %v2468
  %2485 = vmatprep.subr.bf16.mxu0 0
  %2486 = vmatpush1.bf16.msra.mxu0 %v2467
  %2487 = vmatprep.subr.bf16.mxu0 0
  %2488 = vmatpush2.bf16.msra.mxu0 0
  %2489 = vmatprep.subr.bf16.mxu0 0
  %2490 = vmatpush2.bf16.msra.mxu0 0
  %2491 = vmatprep.subr.bf16.mxu0 0
  %2492 = vmatpush2.bf16.msra.mxu0 0
  %2493 = vmatprep.subr.bf16.mxu0 0
  %2494 = vmatpush2.bf16.msra.mxu0 0
  %2495 = vmatprep.subr.bf16.mxu0 0
  %2496 = vmatpush2.bf16.msra.mxu0 0
  %2497 = vmatprep.subr.bf16.mxu0 0
  %2498 = vmatpush2.bf16.msra.mxu0 0
  %2499 = vmatprep.subr.bf16.mxu0 0
  %2500 = vmatpush2.bf16.msra.mxu0 0
  %2501 = vmatprep.subr.bf16.mxu0 0
  %2502 = vmatpush2.bf16.msra.mxu0 0
  %2503 = vmatprep.mubr.bf16.mxu0 0
  %2504 = vmatmul.mubr.bf16.gmra.mxu0 %v2098
  %v2505 = vpop.f32.mrf.mxu0
  %v2506 = vadd.f32 0.0, %v2505
  %v2507 = vpop.f32.mrf.mxu0
  %v2508 = vpop.f32.mrf.mxu0
  %v2509 = vadd.f32 0.0, %v2508
  %v2510 = vpop.f32.mrf.mxu0
  %2511 = vdwg.mxu0
  %v2516 = vunpack.c.l.b16 %v2003
  %v2517 = vunpack.c.l.b16 %v2004
  %v2518 = vunpack.c.l.b16 %v2005
  %v2519 = vunpack.c.l.b16 %v2006
  %v2520 = vpack.c.b16 %v2517, %v2516
  %v2521 = vpack.c.b16 %v2519, %v2518
  %2524 = vmatprep.subr.bf16.mxu0 0
  %2525 = vmatpush1.bf16.msra.mxu0 0
  %2526 = vmatprep.subr.bf16.mxu0 0
  %2527 = vmatpush1.bf16.msra.mxu0 0
  %2528 = vmatprep.subr.bf16.mxu0 0
  %2529 = vmatpush1.bf16.msra.mxu0 0
  %2530 = vmatprep.subr.bf16.mxu0 0
  %2531 = vmatpush1.bf16.msra.mxu0 0
  %2532 = vmatprep.subr.bf16.mxu0 0
  %2533 = vmatpush1.bf16.msra.mxu0 0
  %2534 = vmatprep.subr.bf16.mxu0 0
  %2535 = vmatpush1.bf16.msra.mxu0 0
  %2536 = vmatprep.subr.bf16.mxu0 0
  %2537 = vmatpush1.bf16.msra.mxu0 %v2521
  %2538 = vmatprep.subr.bf16.mxu0 0
  %2539 = vmatpush1.bf16.msra.mxu0 %v2520
  %2540 = vmatprep.subr.bf16.mxu0 0
  %2541 = vmatpush2.bf16.msra.mxu0 0
  %2542 = vmatprep.subr.bf16.mxu0 0
  %2543 = vmatpush2.bf16.msra.mxu0 0
  %2544 = vmatprep.subr.bf16.mxu0 0
  %2545 = vmatpush2.bf16.msra.mxu0 0
  %2546 = vmatprep.subr.bf16.mxu0 0
  %2547 = vmatpush2.bf16.msra.mxu0 0
  %2548 = vmatprep.subr.bf16.mxu0 0
  %2549 = vmatpush2.bf16.msra.mxu0 0
  %2550 = vmatprep.subr.bf16.mxu0 0
  %2551 = vmatpush2.bf16.msra.mxu0 0
  %2552 = vmatprep.subr.bf16.mxu0 0
  %2553 = vmatpush2.bf16.msra.mxu0 0
  %2554 = vmatprep.subr.bf16.mxu0 0
  %2555 = vmatpush2.bf16.msra.mxu0 0
  %2556 = vmatprep.mubr.bf16.mxu0 0
  %2557 = vmatmul.mubr.bf16.gmra.mxu0 %v2098
  %v2558 = vpop.f32.mrf.mxu0
  %v2559 = vadd.f32 0.0, %v2558
  %v2560 = vpop.f32.mrf.mxu0
  %v2561 = vpop.f32.mrf.mxu0
  %v2562 = vadd.f32 0.0, %v2561
  %v2563 = vpop.f32.mrf.mxu0
  %2564 = vdwg.mxu0
  %v2569 = vunpack.c.l.b16 %v2007
  %v2570 = vunpack.c.l.b16 %v2008
  %v2571 = vunpack.c.l.b16 %v2009
  %v2572 = vunpack.c.l.b16 %v2010
  %v2573 = vpack.c.b16 %v2570, %v2569
  %v2574 = vpack.c.b16 %v2572, %v2571
  %2577 = vmatprep.subr.bf16.mxu0 0
  %2578 = vmatpush1.bf16.msra.mxu0 0
  %2579 = vmatprep.subr.bf16.mxu0 0
  %2580 = vmatpush1.bf16.msra.mxu0 0
  %2581 = vmatprep.subr.bf16.mxu0 0
  %2582 = vmatpush1.bf16.msra.mxu0 0
  %2583 = vmatprep.subr.bf16.mxu0 0
  %2584 = vmatpush1.bf16.msra.mxu0 0
  %2585 = vmatprep.subr.bf16.mxu0 0
  %2586 = vmatpush1.bf16.msra.mxu0 0
  %2587 = vmatprep.subr.bf16.mxu0 0
  %2588 = vmatpush1.bf16.msra.mxu0 0
  %2589 = vmatprep.subr.bf16.mxu0 0
  %2590 = vmatpush1.bf16.msra.mxu0 %v2574
  %2591 = vmatprep.subr.bf16.mxu0 0
  %2592 = vmatpush1.bf16.msra.mxu0 %v2573
  %2593 = vmatprep.subr.bf16.mxu0 0
  %2594 = vmatpush2.bf16.msra.mxu0 0
  %2595 = vmatprep.subr.bf16.mxu0 0
  %2596 = vmatpush2.bf16.msra.mxu0 0
  %2597 = vmatprep.subr.bf16.mxu0 0
  %2598 = vmatpush2.bf16.msra.mxu0 0
  %2599 = vmatprep.subr.bf16.mxu0 0
  %2600 = vmatpush2.bf16.msra.mxu0 0
  %2601 = vmatprep.subr.bf16.mxu0 0
  %2602 = vmatpush2.bf16.msra.mxu0 0
  %2603 = vmatprep.subr.bf16.mxu0 0
  %2604 = vmatpush2.bf16.msra.mxu0 0
  %2605 = vmatprep.subr.bf16.mxu0 0
  %2606 = vmatpush2.bf16.msra.mxu0 0
  %2607 = vmatprep.subr.bf16.mxu0 0
  %2608 = vmatpush2.bf16.msra.mxu0 0
  %2609 = vmatprep.mubr.bf16.mxu0 0
  %2610 = vmatmul.mubr.bf16.gmra.mxu0 %v2098
  %v2611 = vpop.f32.mrf.mxu0
  %v2612 = vadd.f32 0.0, %v2611
  %v2613 = vpop.f32.mrf.mxu0
  %v2614 = vpop.f32.mrf.mxu0
  %v2615 = vadd.f32 0.0, %v2614
  %v2616 = vpop.f32.mrf.mxu0
  %2617 = vdwg.mxu0
  %v2622 = vunpack.c.l.b16 %v2011
  %v2623 = vunpack.c.l.b16 %v2012
  %v2624 = vunpack.c.l.b16 %v2013
  %v2625 = vunpack.c.l.b16 %v2014
  %v2626 = vpack.c.b16 %v2623, %v2622
  %v2627 = vpack.c.b16 %v2625, %v2624
  %2630 = vmatprep.subr.bf16.mxu0 0
  %2631 = vmatpush1.bf16.msra.mxu0 0
  %2632 = vmatprep.subr.bf16.mxu0 0
  %2633 = vmatpush1.bf16.msra.mxu0 0
  %2634 = vmatprep.subr.bf16.mxu0 0
  %2635 = vmatpush1.bf16.msra.mxu0 0
  %2636 = vmatprep.subr.bf16.mxu0 0
  %2637 = vmatpush1.bf16.msra.mxu0 0
  %2638 = vmatprep.subr.bf16.mxu0 0
  %2639 = vmatpush1.bf16.msra.mxu0 0
  %2640 = vmatprep.subr.bf16.mxu0 0
  %2641 = vmatpush1.bf16.msra.mxu0 0
  %2642 = vmatprep.subr.bf16.mxu0 0
  %2643 = vmatpush1.bf16.msra.mxu0 %v2627
  %2644 = vmatprep.subr.bf16.mxu0 0
  %2645 = vmatpush1.bf16.msra.mxu0 %v2626
  %2646 = vmatprep.subr.bf16.mxu0 0
  %2647 = vmatpush2.bf16.msra.mxu0 0
  %2648 = vmatprep.subr.bf16.mxu0 0
  %2649 = vmatpush2.bf16.msra.mxu0 0
  %2650 = vmatprep.subr.bf16.mxu0 0
  %2651 = vmatpush2.bf16.msra.mxu0 0
  %2652 = vmatprep.subr.bf16.mxu0 0
  %2653 = vmatpush2.bf16.msra.mxu0 0
  %2654 = vmatprep.subr.bf16.mxu0 0
  %2655 = vmatpush2.bf16.msra.mxu0 0
  %2656 = vmatprep.subr.bf16.mxu0 0
  %2657 = vmatpush2.bf16.msra.mxu0 0
  %2658 = vmatprep.subr.bf16.mxu0 0
  %2659 = vmatpush2.bf16.msra.mxu0 0
  %2660 = vmatprep.subr.bf16.mxu0 0
  %2661 = vmatpush2.bf16.msra.mxu0 0
  %2662 = vmatprep.mubr.bf16.mxu0 0
  %2663 = vmatmul.mubr.bf16.gmra.mxu0 %v2098
  %v2664 = vpop.f32.mrf.mxu0
  %v2665 = vadd.f32 0.0, %v2664
  %v2666 = vpop.f32.mrf.mxu0
  %v2667 = vpop.f32.mrf.mxu0
  %v2668 = vadd.f32 0.0, %v2667
  %v2669 = vpop.f32.mrf.mxu0
  %2670 = vdwg.mxu0
  %v2675 = vunpack.c.l.b16 %v2015
  %v2676 = vunpack.c.l.b16 %v2016
  %v2677 = vunpack.c.l.b16 %v2017
  %v2678 = vunpack.c.l.b16 %v2018
  %v2679 = vpack.c.b16 %v2676, %v2675
  %v2680 = vpack.c.b16 %v2678, %v2677
  %2683 = vmatprep.subr.bf16.mxu0 0
  %2684 = vmatpush1.bf16.msra.mxu0 0
  %2685 = vmatprep.subr.bf16.mxu0 0
  %2686 = vmatpush1.bf16.msra.mxu0 0
  %2687 = vmatprep.subr.bf16.mxu0 0
  %2688 = vmatpush1.bf16.msra.mxu0 0
  %2689 = vmatprep.subr.bf16.mxu0 0
  %2690 = vmatpush1.bf16.msra.mxu0 0
  %2691 = vmatprep.subr.bf16.mxu0 0
  %2692 = vmatpush1.bf16.msra.mxu0 0
  %2693 = vmatprep.subr.bf16.mxu0 0
  %2694 = vmatpush1.bf16.msra.mxu0 0
  %2695 = vmatprep.subr.bf16.mxu0 0
  %2696 = vmatpush1.bf16.msra.mxu0 %v2680
  %2697 = vmatprep.subr.bf16.mxu0 0
  %2698 = vmatpush1.bf16.msra.mxu0 %v2679
  %2699 = vmatprep.subr.bf16.mxu0 0
  %2700 = vmatpush2.bf16.msra.mxu0 0
  %2701 = vmatprep.subr.bf16.mxu0 0
  %2702 = vmatpush2.bf16.msra.mxu0 0
  %2703 = vmatprep.subr.bf16.mxu0 0
  %2704 = vmatpush2.bf16.msra.mxu0 0
  %2705 = vmatprep.subr.bf16.mxu0 0
  %2706 = vmatpush2.bf16.msra.mxu0 0
  %2707 = vmatprep.subr.bf16.mxu0 0
  %2708 = vmatpush2.bf16.msra.mxu0 0
  %2709 = vmatprep.subr.bf16.mxu0 0
  %2710 = vmatpush2.bf16.msra.mxu0 0
  %2711 = vmatprep.subr.bf16.mxu0 0
  %2712 = vmatpush2.bf16.msra.mxu0 0
  %2713 = vmatprep.subr.bf16.mxu0 0
  %2714 = vmatpush2.bf16.msra.mxu0 0
  %2715 = vmatprep.mubr.bf16.mxu0 0
  %2716 = vmatmul.mubr.bf16.gmra.mxu0 %v2098
  %v2717 = vpop.f32.mrf.mxu0
  %v2718 = vadd.f32 0.0, %v2717
  %v2719 = vpop.f32.mrf.mxu0
  %v2720 = vpop.f32.mrf.mxu0
  %v2721 = vadd.f32 0.0, %v2720
  %v2722 = vpop.f32.mrf.mxu0
  %2723 = vdwg.mxu0
  %v2725 = vsel %vm806, %v2135, 0
  %v2728 = vsel %vm806, %v2138, 0
  %v2731 = vsel %vm806, %v2347, 0
  %v2734 = vsel %vm806, %v2350, 0
  %2736 = vmatprep.subr.mxu0 0.0
  %2737 = vmatpush1.xpose.msra.mxu0 0.0
  %2738 = vmatprep.subr.mxu0 0.0
  %2739 = vmatpush1.xpose.msra.mxu0 0.0
  %2740 = vmatprep.subr.mxu0 0.0
  %2741 = vmatpush1.xpose.msra.mxu0 0.0
  %2742 = vmatprep.subr.mxu0 0.0
  %2743 = vmatpush1.xpose.msra.mxu0 0.0
  %2744 = vmatprep.subr.mxu0 0.0
  %2745 = vmatpush1.xpose.msra.mxu0 0.0
  %2746 = vmatprep.subr.mxu0 0.0
  %2747 = vmatpush1.xpose.msra.mxu0 0.0
  %2748 = vmatprep.subr.mxu0 0.0
  %2749 = vmatpush1.xpose.msra.mxu0 0.0
  %2750 = vmatprep.subr.mxu0 0.0
  %2751 = vmatpush1.xpose.msra.mxu0 0.0
  %2752 = vmatprep.subr.mxu0 0.0
  %2753 = vmatpush1.xpose.msra.mxu0 0.0
  %2754 = vmatprep.subr.mxu0 0.0
  %2755 = vmatpush1.xpose.msra.mxu0 0.0
  %2756 = vmatprep.subr.mxu0 0.0
  %2757 = vmatpush1.xpose.msra.mxu0 0.0
  %2758 = vmatprep.subr.mxu0 0.0
  %2759 = vmatpush1.xpose.msra.mxu0 0.0
  %2760 = vmatprep.subr.mxu0 0.0
  %2761 = vmatpush1.xpose.msra.mxu0 0.0
  %2762 = vmatprep.subr.mxu0 0.0
  %2763 = vmatpush1.xpose.msra.mxu0 0.0
  %2764 = vmatprep.subr.mxu0 0.0
  %2765 = vmatpush1.xpose.msra.mxu0 %v2734
  %2766 = vmatprep.subr.mxu0 0.0
  %2767 = vmatpush1.xpose.msra.mxu0 %v2731
  %2768 = vmatprep.subr.mxu0 0.0
  %2769 = vmatpush2.xpose.msra.mxu0 0.0
  %2770 = vmatprep.subr.mxu0 0.0
  %2771 = vmatpush2.xpose.msra.mxu0 0.0
  %2772 = vmatprep.subr.mxu0 0.0
  %2773 = vmatpush2.xpose.msra.mxu0 0.0
  %2774 = vmatprep.subr.mxu0 0.0
  %2775 = vmatpush2.xpose.msra.mxu0 0.0
  %2776 = vmatprep.subr.mxu0 0.0
  %2777 = vmatpush2.xpose.msra.mxu0 0.0
  %2778 = vmatprep.subr.mxu0 0.0
  %2779 = vmatpush2.xpose.msra.mxu0 0.0
  %2780 = vmatprep.subr.mxu0 0.0
  %2781 = vmatpush2.xpose.msra.mxu0 0.0
  %2782 = vmatprep.subr.mxu0 0.0
  %2783 = vmatpush2.xpose.msra.mxu0 0.0
  %2784 = vmatprep.subr.mxu0 0.0
  %2785 = vmatpush2.xpose.msra.mxu0 0.0
  %2786 = vmatprep.subr.mxu0 0.0
  %2787 = vmatpush2.xpose.msra.mxu0 0.0
  %2788 = vmatprep.subr.mxu0 0.0
  %2789 = vmatpush2.xpose.msra.mxu0 0.0
  %2790 = vmatprep.subr.mxu0 0.0
  %2791 = vmatpush2.xpose.msra.mxu0 0.0
  %2792 = vmatprep.subr.mxu0 0.0
  %2793 = vmatpush2.xpose.msra.mxu0 0.0
  %2794 = vmatprep.subr.mxu0 0.0
  %2795 = vmatpush2.xpose.msra.mxu0 0.0
  %2796 = vmatprep.subr.mxu0 0.0
  %2797 = vmatpush2.xpose.msra.mxu0 0.0
  %2798 = vmatprep.subr.mxu0 0.0
  %2799 = vmatpush2.xpose.msra.mxu0 0.0
  %2800 = vmatprep.mubr.f32.mxu0 0.0
  %2801 = vmatmul.mubr.f32.gmra.mxu0 %v2725
  %v2802 = vpop.f32.mrf.mxu0
  %v2803 = vadd.f32 %v50, %v2802
  %v2804 = vpop.f32.mrf.mxu0
  %2805 = vmatprep.mubr.f32.mxu0 0.0
  %2806 = vmatmul.mubr.f32.gmra.mxu0 %v2728
  %v2807 = vpop.f32.mrf.mxu0
  %v2808 = vadd.f32 %v51, %v2807
  %v2809 = vpop.f32.mrf.mxu0
  %2810 = vdwg.mxu0
  %v2812 = vsel %vm806, %v2188, 0
  %v2815 = vsel %vm806, %v2191, 0
  %v2818 = vsel %vm806, %v2400, 0
  %v2821 = vsel %vm806, %v2403, 0
  %2823 = vmatprep.subr.mxu0 0.0
  %2824 = vmatpush1.xpose.msra.mxu0 0.0
  %2825 = vmatprep.subr.mxu0 0.0
  %2826 = vmatpush1.xpose.msra.mxu0 0.0
  %2827 = vmatprep.subr.mxu0 0.0
  %2828 = vmatpush1.xpose.msra.mxu0 0.0
  %2829 = vmatprep.subr.mxu0 0.0
  %2830 = vmatpush1.xpose.msra.mxu0 0.0
  %2831 = vmatprep.subr.mxu0 0.0
  %2832 = vmatpush1.xpose.msra.mxu0 0.0
  %2833 = vmatprep.subr.mxu0 0.0
  %2834 = vmatpush1.xpose.msra.mxu0 0.0
  %2835 = vmatprep.subr.mxu0 0.0
  %2836 = vmatpush1.xpose.msra.mxu0 0.0
  %2837 = vmatprep.subr.mxu0 0.0
  %2838 = vmatpush1.xpose.msra.mxu0 0.0
  %2839 = vmatprep.subr.mxu0 0.0
  %2840 = vmatpush1.xpose.msra.mxu0 0.0
  %2841 = vmatprep.subr.mxu0 0.0
  %2842 = vmatpush1.xpose.msra.mxu0 0.0
  %2843 = vmatprep.subr.mxu0 0.0
  %2844 = vmatpush1.xpose.msra.mxu0 0.0
  %2845 = vmatprep.subr.mxu0 0.0
  %2846 = vmatpush1.xpose.msra.mxu0 0.0
  %2847 = vmatprep.subr.mxu0 0.0
  %2848 = vmatpush1.xpose.msra.mxu0 0.0
  %2849 = vmatprep.subr.mxu0 0.0
  %2850 = vmatpush1.xpose.msra.mxu0 0.0
  %2851 = vmatprep.subr.mxu0 0.0
  %2852 = vmatpush1.xpose.msra.mxu0 %v2821
  %2853 = vmatprep.subr.mxu0 0.0
  %2854 = vmatpush1.xpose.msra.mxu0 %v2818
  %2855 = vmatprep.subr.mxu0 0.0
  %2856 = vmatpush2.xpose.msra.mxu0 0.0
  %2857 = vmatprep.subr.mxu0 0.0
  %2858 = vmatpush2.xpose.msra.mxu0 0.0
  %2859 = vmatprep.subr.mxu0 0.0
  %2860 = vmatpush2.xpose.msra.mxu0 0.0
  %2861 = vmatprep.subr.mxu0 0.0
  %2862 = vmatpush2.xpose.msra.mxu0 0.0
  %2863 = vmatprep.subr.mxu0 0.0
  %2864 = vmatpush2.xpose.msra.mxu0 0.0
  %2865 = vmatprep.subr.mxu0 0.0
  %2866 = vmatpush2.xpose.msra.mxu0 0.0
  %2867 = vmatprep.subr.mxu0 0.0
  %2868 = vmatpush2.xpose.msra.mxu0 0.0
  %2869 = vmatprep.subr.mxu0 0.0
  %2870 = vmatpush2.xpose.msra.mxu0 0.0
  %2871 = vmatprep.subr.mxu0 0.0
  %2872 = vmatpush2.xpose.msra.mxu0 0.0
  %2873 = vmatprep.subr.mxu0 0.0
  %2874 = vmatpush2.xpose.msra.mxu0 0.0
  %2875 = vmatprep.subr.mxu0 0.0
  %2876 = vmatpush2.xpose.msra.mxu0 0.0
  %2877 = vmatprep.subr.mxu0 0.0
  %2878 = vmatpush2.xpose.msra.mxu0 0.0
  %2879 = vmatprep.subr.mxu0 0.0
  %2880 = vmatpush2.xpose.msra.mxu0 0.0
  %2881 = vmatprep.subr.mxu0 0.0
  %2882 = vmatpush2.xpose.msra.mxu0 0.0
  %2883 = vmatprep.subr.mxu0 0.0
  %2884 = vmatpush2.xpose.msra.mxu0 0.0
  %2885 = vmatprep.subr.mxu0 0.0
  %2886 = vmatpush2.xpose.msra.mxu0 0.0
  %2887 = vmatprep.mubr.f32.mxu0 0.0
  %2888 = vmatmul.mubr.f32.gmra.mxu0 %v2812
  %v2889 = vpop.f32.mrf.mxu0
  %v2890 = vadd.f32 %v50, %v2889
  %v2891 = vpop.f32.mrf.mxu0
  %2892 = vmatprep.mubr.f32.mxu0 0.0
  %2893 = vmatmul.mubr.f32.gmra.mxu0 %v2815
  %v2894 = vpop.f32.mrf.mxu0
  %v2895 = vadd.f32 %v51, %v2894
  %v2896 = vpop.f32.mrf.mxu0
  %2897 = vdwg.mxu0
  %v2899 = vsel %vm806, %v2241, 0
  %v2902 = vsel %vm806, %v2244, 0
  %v2905 = vsel %vm806, %v2453, 0
  %v2908 = vsel %vm806, %v2456, 0
  %2910 = vmatprep.subr.mxu0 0.0
  %2911 = vmatpush1.xpose.msra.mxu0 0.0
  %2912 = vmatprep.subr.mxu0 0.0
  %2913 = vmatpush1.xpose.msra.mxu0 0.0
  %2914 = vmatprep.subr.mxu0 0.0
  %2915 = vmatpush1.xpose.msra.mxu0 0.0
  %2916 = vmatprep.subr.mxu0 0.0
  %2917 = vmatpush1.xpose.msra.mxu0 0.0
  %2918 = vmatprep.subr.mxu0 0.0
  %2919 = vmatpush1.xpose.msra.mxu0 0.0
  %2920 = vmatprep.subr.mxu0 0.0
  %2921 = vmatpush1.xpose.msra.mxu0 0.0
  %2922 = vmatprep.subr.mxu0 0.0
  %2923 = vmatpush1.xpose.msra.mxu0 0.0
  %2924 = vmatprep.subr.mxu0 0.0
  %2925 = vmatpush1.xpose.msra.mxu0 0.0
  %2926 = vmatprep.subr.mxu0 0.0
  %2927 = vmatpush1.xpose.msra.mxu0 0.0
  %2928 = vmatprep.subr.mxu0 0.0
  %2929 = vmatpush1.xpose.msra.mxu0 0.0
  %2930 = vmatprep.subr.mxu0 0.0
  %2931 = vmatpush1.xpose.msra.mxu0 0.0
  %2932 = vmatprep.subr.mxu0 0.0
  %2933 = vmatpush1.xpose.msra.mxu0 0.0
  %2934 = vmatprep.subr.mxu0 0.0
  %2935 = vmatpush1.xpose.msra.mxu0 0.0
  %2936 = vmatprep.subr.mxu0 0.0
  %2937 = vmatpush1.xpose.msra.mxu0 0.0
  %2938 = vmatprep.subr.mxu0 0.0
  %2939 = vmatpush1.xpose.msra.mxu0 %v2908
  %2940 = vmatprep.subr.mxu0 0.0
  %2941 = vmatpush1.xpose.msra.mxu0 %v2905
  %2942 = vmatprep.subr.mxu0 0.0
  %2943 = vmatpush2.xpose.msra.mxu0 0.0
  %2944 = vmatprep.subr.mxu0 0.0
  %2945 = vmatpush2.xpose.msra.mxu0 0.0
  %2946 = vmatprep.subr.mxu0 0.0
  %2947 = vmatpush2.xpose.msra.mxu0 0.0
  %2948 = vmatprep.subr.mxu0 0.0
  %2949 = vmatpush2.xpose.msra.mxu0 0.0
  %2950 = vmatprep.subr.mxu0 0.0
  %2951 = vmatpush2.xpose.msra.mxu0 0.0
  %2952 = vmatprep.subr.mxu0 0.0
  %2953 = vmatpush2.xpose.msra.mxu0 0.0
  %2954 = vmatprep.subr.mxu0 0.0
  %2955 = vmatpush2.xpose.msra.mxu0 0.0
  %2956 = vmatprep.subr.mxu0 0.0
  %2957 = vmatpush2.xpose.msra.mxu0 0.0
  %2958 = vmatprep.subr.mxu0 0.0
  %2959 = vmatpush2.xpose.msra.mxu0 0.0
  %2960 = vmatprep.subr.mxu0 0.0
  %2961 = vmatpush2.xpose.msra.mxu0 0.0
  %2962 = vmatprep.subr.mxu0 0.0
  %2963 = vmatpush2.xpose.msra.mxu0 0.0
  %2964 = vmatprep.subr.mxu0 0.0
  %2965 = vmatpush2.xpose.msra.mxu0 0.0
  %2966 = vmatprep.subr.mxu0 0.0
  %2967 = vmatpush2.xpose.msra.mxu0 0.0
  %2968 = vmatprep.subr.mxu0 0.0
  %2969 = vmatpush2.xpose.msra.mxu0 0.0
  %2970 = vmatprep.subr.mxu0 0.0
  %2971 = vmatpush2.xpose.msra.mxu0 0.0
  %2972 = vmatprep.subr.mxu0 0.0
  %2973 = vmatpush2.xpose.msra.mxu0 0.0
  %2974 = vmatprep.mubr.f32.mxu0 0.0
  %2975 = vmatmul.mubr.f32.gmra.mxu0 %v2899
  %v2976 = vpop.f32.mrf.mxu0
  %v2977 = vadd.f32 %v50, %v2976
  %v2978 = vpop.f32.mrf.mxu0
  %2979 = vmatprep.mubr.f32.mxu0 0.0
  %2980 = vmatmul.mubr.f32.gmra.mxu0 %v2902
  %v2981 = vpop.f32.mrf.mxu0
  %v2982 = vadd.f32 %v51, %v2981
  %v2983 = vpop.f32.mrf.mxu0
  %2984 = vdwg.mxu0
  %v2986 = vsel %vm806, %v2294, 0
  %v2989 = vsel %vm806, %v2297, 0
  %v2992 = vsel %vm806, %v2506, 0
  %v2995 = vsel %vm806, %v2509, 0
  %2997 = vmatprep.subr.mxu0 0.0
  %2998 = vmatpush1.xpose.msra.mxu0 0.0
  %2999 = vmatprep.subr.mxu0 0.0
  %3000 = vmatpush1.xpose.msra.mxu0 0.0
  %3001 = vmatprep.subr.mxu0 0.0
  %3002 = vmatpush1.xpose.msra.mxu0 0.0
  %3003 = vmatprep.subr.mxu0 0.0
  %3004 = vmatpush1.xpose.msra.mxu0 0.0
  %3005 = vmatprep.subr.mxu0 0.0
  %3006 = vmatpush1.xpose.msra.mxu0 0.0
  %3007 = vmatprep.subr.mxu0 0.0
  %3008 = vmatpush1.xpose.msra.mxu0 0.0
  %3009 = vmatprep.subr.mxu0 0.0
  %3010 = vmatpush1.xpose.msra.mxu0 0.0
  %3011 = vmatprep.subr.mxu0 0.0
  %3012 = vmatpush1.xpose.msra.mxu0 0.0
  %3013 = vmatprep.subr.mxu0 0.0
  %3014 = vmatpush1.xpose.msra.mxu0 0.0
  %3015 = vmatprep.subr.mxu0 0.0
  %3016 = vmatpush1.xpose.msra.mxu0 0.0
  %3017 = vmatprep.subr.mxu0 0.0
  %3018 = vmatpush1.xpose.msra.mxu0 0.0
  %3019 = vmatprep.subr.mxu0 0.0
  %3020 = vmatpush1.xpose.msra.mxu0 0.0
  %3021 = vmatprep.subr.mxu0 0.0
  %3022 = vmatpush1.xpose.msra.mxu0 0.0
  %3023 = vmatprep.subr.mxu0 0.0
  %3024 = vmatpush1.xpose.msra.mxu0 0.0
  %3025 = vmatprep.subr.mxu0 0.0
  %3026 = vmatpush1.xpose.msra.mxu0 %v2995
  %3027 = vmatprep.subr.mxu0 0.0
  %3028 = vmatpush1.xpose.msra.mxu0 %v2992
  %3029 = vmatprep.subr.mxu0 0.0
  %3030 = vmatpush2.xpose.msra.mxu0 0.0
  %3031 = vmatprep.subr.mxu0 0.0
  %3032 = vmatpush2.xpose.msra.mxu0 0.0
  %3033 = vmatprep.subr.mxu0 0.0
  %3034 = vmatpush2.xpose.msra.mxu0 0.0
  %3035 = vmatprep.subr.mxu0 0.0
  %3036 = vmatpush2.xpose.msra.mxu0 0.0
  %3037 = vmatprep.subr.mxu0 0.0
  %3038 = vmatpush2.xpose.msra.mxu0 0.0
  %3039 = vmatprep.subr.mxu0 0.0
  %3040 = vmatpush2.xpose.msra.mxu0 0.0
  %3041 = vmatprep.subr.mxu0 0.0
  %3042 = vmatpush2.xpose.msra.mxu0 0.0
  %3043 = vmatprep.subr.mxu0 0.0
  %3044 = vmatpush2.xpose.msra.mxu0 0.0
  %3045 = vmatprep.subr.mxu0 0.0
  %3046 = vmatpush2.xpose.msra.mxu0 0.0
  %3047 = vmatprep.subr.mxu0 0.0
  %3048 = vmatpush2.xpose.msra.mxu0 0.0
  %3049 = vmatprep.subr.mxu0 0.0
  %3050 = vmatpush2.xpose.msra.mxu0 0.0
  %3051 = vmatprep.subr.mxu0 0.0
  %3052 = vmatpush2.xpose.msra.mxu0 0.0
  %3053 = vmatprep.subr.mxu0 0.0
  %3054 = vmatpush2.xpose.msra.mxu0 0.0
  %3055 = vmatprep.subr.mxu0 0.0
  %3056 = vmatpush2.xpose.msra.mxu0 0.0
  %3057 = vmatprep.subr.mxu0 0.0
  %3058 = vmatpush2.xpose.msra.mxu0 0.0
  %3059 = vmatprep.subr.mxu0 0.0
  %3060 = vmatpush2.xpose.msra.mxu0 0.0
  %3061 = vmatprep.mubr.f32.mxu0 0.0
  %3062 = vmatmul.mubr.f32.gmra.mxu0 %v2986
  %v3063 = vpop.f32.mrf.mxu0
  %v3064 = vadd.f32 %v50, %v3063
  %v3065 = vpop.f32.mrf.mxu0
  %3066 = vmatprep.mubr.f32.mxu0 0.0
  %3067 = vmatmul.mubr.f32.gmra.mxu0 %v2989
  %v3068 = vpop.f32.mrf.mxu0
  %v3069 = vadd.f32 %v51, %v3068
  %v3070 = vpop.f32.mrf.mxu0
  %3071 = vdwg.mxu0
  %v3072 = vsel %vm1155, %v2803, -inf
  %3073 = vmax.xlane.f32.xlu0 %v3072
  %v3074 = vpop.xlane.xlu0 %3073
  %v3075 = vsel %vm1155, %v2808, -inf
  %3076 = vmax.xlane.f32.xlu0 %v3075
  %v3077 = vpop.xlane.xlu0 %3076
  %v3078 = vsel %vm1155, %v2890, -inf
  %3079 = vmax.xlane.f32.xlu0 %v3078
  %v3080 = vpop.xlane.xlu0 %3079
  %v3081 = vsel %vm1155, %v2895, -inf
  %3082 = vmax.xlane.f32.xlu0 %v3081
  %v3083 = vpop.xlane.xlu0 %3082
  %v3084 = vsel %vm1155, %v2977, -inf
  %3085 = vmax.xlane.f32.xlu0 %v3084
  %v3086 = vpop.xlane.xlu0 %3085
  %v3087 = vsel %vm1155, %v2982, -inf
  %3088 = vmax.xlane.f32.xlu0 %v3087
  %v3089 = vpop.xlane.xlu0 %3088
  %v3090 = vsel %vm1155, %v3064, -inf
  %3091 = vmax.xlane.f32.xlu0 %v3090
  %v3092 = vpop.xlane.xlu0 %3091
  %v3093 = vsel %vm1155, %v3069, -inf
  %3094 = vmax.xlane.f32.xlu0 %v3093
  %v3095 = vpop.xlane.xlu0 %3094
  %v3096 = vsub.f32 %v2803, %v3074
  %v3097 = vsub.f32 %v2808, %v3077
  %v3098 = vsub.f32 %v2890, %v3080
  %v3099 = vsub.f32 %v2895, %v3083
  %v3100 = vsub.f32 %v2977, %v3086
  %v3101 = vsub.f32 %v2982, %v3089
  %v3102 = vsub.f32 %v3064, %v3092
  %v3103 = vsub.f32 %v3069, %v3095
  %v3104 = vmul.f32 %v3096, 1.442695
  %v3105 = vpow.pop %v3104
  %v3106 = vmul.f32 %v3097, 1.442695
  %v3107 = vpow.pop %v3106
  %v3108 = vmul.f32 %v3098, 1.442695
  %v3109 = vpow.pop %v3108
  %v3110 = vmul.f32 %v3099, 1.442695
  %v3111 = vpow.pop %v3110
  %v3112 = vmul.f32 %v3100, 1.442695
  %v3113 = vpow.pop %v3112
  %v3114 = vmul.f32 %v3101, 1.442695
  %v3115 = vpow.pop %v3114
  %v3116 = vmul.f32 %v3102, 1.442695
  %v3117 = vpow.pop %v3116
  %v3118 = vmul.f32 %v3103, 1.442695
  %v3119 = vpow.pop %v3118
  %v3120 = vsel %vm1155, %v3105, 0.0
  %3121 = vadd.xlane.f32.xlu0 %v3120
  %v3122 = vpop.xlane.xlu0 %3121
  %v3123 = vsel %vm1155, %v3107, 0.0
  %3124 = vadd.xlane.f32.xlu0 %v3123
  %v3125 = vpop.xlane.xlu0 %3124
  %v3126 = vsel %vm1155, %v3109, 0.0
  %3127 = vadd.xlane.f32.xlu0 %v3126
  %v3128 = vpop.xlane.xlu0 %3127
  %v3129 = vsel %vm1155, %v3111, 0.0
  %3130 = vadd.xlane.f32.xlu0 %v3129
  %v3131 = vpop.xlane.xlu0 %3130
  %v3132 = vsel %vm1155, %v3113, 0.0
  %3133 = vadd.xlane.f32.xlu0 %v3132
  %v3134 = vpop.xlane.xlu0 %3133
  %v3135 = vsel %vm1155, %v3115, 0.0
  %3136 = vadd.xlane.f32.xlu0 %v3135
  %v3137 = vpop.xlane.xlu0 %3136
  %v3138 = vsel %vm1155, %v3117, 0.0
  %3139 = vadd.xlane.f32.xlu0 %v3138
  %v3140 = vpop.xlane.xlu0 %3139
  %v3141 = vsel %vm1155, %v3119, 0.0
  %3142 = vadd.xlane.f32.xlu0 %v3141
  %v3143 = vpop.xlane.xlu0 %3142
  %v3144 = vrcp.pop %v3122
  %v3145 = vmul.f32 %v3105, %v3144
  %v3146 = vrcp.pop %v3125
  %v3147 = vmul.f32 %v3107, %v3146
  %v3148 = vrcp.pop %v3128
  %v3149 = vmul.f32 %v3109, %v3148
  %v3150 = vrcp.pop %v3131
  %v3151 = vmul.f32 %v3111, %v3150
  %v3152 = vrcp.pop %v3134
  %v3153 = vmul.f32 %v3113, %v3152
  %v3154 = vrcp.pop %v3137
  %v3155 = vmul.f32 %v3115, %v3154
  %v3156 = vrcp.pop %v3140
  %v3157 = vmul.f32 %v3117, %v3156
  %v3158 = vrcp.pop %v3143
  %v3159 = vmul.f32 %v3119, %v3158
  %v3161 = vsel %vm1155, %v3145, 0
  %v3164 = vsel %vm1155, %v3147, 0
  %3166 = vmatprep.subr.mxu0 0.0
  %3167 = vmatpush1.msra.mxu0 0.0
  %3168 = vmatprep.subr.mxu0 0.0
  %3169 = vmatpush1.msra.mxu0 0.0
  %3170 = vmatprep.subr.mxu0 0.0
  %3171 = vmatpush1.msra.mxu0 0.0
  %3172 = vmatprep.subr.mxu0 0.0
  %3173 = vmatpush1.msra.mxu0 0.0
  %3174 = vmatprep.subr.mxu0 0.0
  %3175 = vmatpush1.msra.mxu0 0.0
  %3176 = vmatprep.subr.mxu0 0.0
  %3177 = vmatpush1.msra.mxu0 0.0
  %3178 = vmatprep.subr.mxu0 0.0
  %3179 = vmatpush1.msra.mxu0 0.0
  %3180 = vmatprep.subr.mxu0 0.0
  %3181 = vmatpush1.msra.mxu0 0.0
  %3182 = vmatprep.subr.mxu0 0.0
  %3183 = vmatpush1.msra.mxu0 0.0
  %3184 = vmatprep.subr.mxu0 0.0
  %3185 = vmatpush1.msra.mxu0 0.0
  %3186 = vmatprep.subr.mxu0 0.0
  %3187 = vmatpush1.msra.mxu0 0.0
  %3188 = vmatprep.subr.mxu0 0.0
  %3189 = vmatpush1.msra.mxu0 0.0
  %3190 = vmatprep.subr.mxu0 0.0
  %3191 = vmatpush1.msra.mxu0 0.0
  %3192 = vmatprep.subr.mxu0 0.0
  %3193 = vmatpush1.msra.mxu0 0.0
  %3194 = vmatprep.subr.mxu0 0.0
  %3195 = vmatpush1.msra.mxu0 %v2562
  %3196 = vmatprep.subr.mxu0 0.0
  %3197 = vmatpush1.msra.mxu0 %v2559
  %3198 = vmatprep.subr.mxu0 0.0
  %3199 = vmatpush2.msra.mxu0 0.0
  %3200 = vmatprep.subr.mxu0 0.0
  %3201 = vmatpush2.msra.mxu0 0.0
  %3202 = vmatprep.subr.mxu0 0.0
  %3203 = vmatpush2.msra.mxu0 0.0
  %3204 = vmatprep.subr.mxu0 0.0
  %3205 = vmatpush2.msra.mxu0 0.0
  %3206 = vmatprep.subr.mxu0 0.0
  %3207 = vmatpush2.msra.mxu0 0.0
  %3208 = vmatprep.subr.mxu0 0.0
  %3209 = vmatpush2.msra.mxu0 0.0
  %3210 = vmatprep.subr.mxu0 0.0
  %3211 = vmatpush2.msra.mxu0 0.0
  %3212 = vmatprep.subr.mxu0 0.0
  %3213 = vmatpush2.msra.mxu0 0.0
  %3214 = vmatprep.subr.mxu0 0.0
  %3215 = vmatpush2.msra.mxu0 0.0
  %3216 = vmatprep.subr.mxu0 0.0
  %3217 = vmatpush2.msra.mxu0 0.0
  %3218 = vmatprep.subr.mxu0 0.0
  %3219 = vmatpush2.msra.mxu0 0.0
  %3220 = vmatprep.subr.mxu0 0.0
  %3221 = vmatpush2.msra.mxu0 0.0
  %3222 = vmatprep.subr.mxu0 0.0
  %3223 = vmatpush2.msra.mxu0 0.0
  %3224 = vmatprep.subr.mxu0 0.0
  %3225 = vmatpush2.msra.mxu0 0.0
  %3226 = vmatprep.subr.mxu0 0.0
  %3227 = vmatpush2.msra.mxu0 0.0
  %3228 = vmatprep.subr.mxu0 0.0
  %3229 = vmatpush2.msra.mxu0 0.0
  %3230 = vmatprep.mubr.f32.mxu0 0.0
  %3231 = vmatmul.mubr.f32.gmra.mxu0 %v3161
  %v3232 = vpop.f32.mrf.mxu0
  %v3233 = vadd.f32 0.0, %v3232
  %v3234 = vpop.f32.mrf.mxu0
  %3235 = vmatprep.mubr.f32.mxu0 0.0
  %3236 = vmatmul.mubr.f32.gmra.mxu0 %v3164
  %v3237 = vpop.f32.mrf.mxu0
  %v3238 = vadd.f32 0.0, %v3237
  %v3239 = vpop.f32.mrf.mxu0
  %3240 = vdwg.mxu0
  %v3242 = vsel %vm1155, %v3149, 0
  %v3245 = vsel %vm1155, %v3151, 0
  %3247 = vmatprep.subr.mxu0 0.0
  %3248 = vmatpush1.msra.mxu0 0.0
  %3249 = vmatprep.subr.mxu0 0.0
  %3250 = vmatpush1.msra.mxu0 0.0
  %3251 = vmatprep.subr.mxu0 0.0
  %3252 = vmatpush1.msra.mxu0 0.0
  %3253 = vmatprep.subr.mxu0 0.0
  %3254 = vmatpush1.msra.mxu0 0.0
  %3255 = vmatprep.subr.mxu0 0.0
  %3256 = vmatpush1.msra.mxu0 0.0
  %3257 = vmatprep.subr.mxu0 0.0
  %3258 = vmatpush1.msra.mxu0 0.0
  %3259 = vmatprep.subr.mxu0 0.0
  %3260 = vmatpush1.msra.mxu0 0.0
  %3261 = vmatprep.subr.mxu0 0.0
  %3262 = vmatpush1.msra.mxu0 0.0
  %3263 = vmatprep.subr.mxu0 0.0
  %3264 = vmatpush1.msra.mxu0 0.0
  %3265 = vmatprep.subr.mxu0 0.0
  %3266 = vmatpush1.msra.mxu0 0.0
  %3267 = vmatprep.subr.mxu0 0.0
  %3268 = vmatpush1.msra.mxu0 0.0
  %3269 = vmatprep.subr.mxu0 0.0
  %3270 = vmatpush1.msra.mxu0 0.0
  %3271 = vmatprep.subr.mxu0 0.0
  %3272 = vmatpush1.msra.mxu0 0.0
  %3273 = vmatprep.subr.mxu0 0.0
  %3274 = vmatpush1.msra.mxu0 0.0
  %3275 = vmatprep.subr.mxu0 0.0
  %3276 = vmatpush1.msra.mxu0 %v2615
  %3277 = vmatprep.subr.mxu0 0.0
  %3278 = vmatpush1.msra.mxu0 %v2612
  %3279 = vmatprep.subr.mxu0 0.0
  %3280 = vmatpush2.msra.mxu0 0.0
  %3281 = vmatprep.subr.mxu0 0.0
  %3282 = vmatpush2.msra.mxu0 0.0
  %3283 = vmatprep.subr.mxu0 0.0
  %3284 = vmatpush2.msra.mxu0 0.0
  %3285 = vmatprep.subr.mxu0 0.0
  %3286 = vmatpush2.msra.mxu0 0.0
  %3287 = vmatprep.subr.mxu0 0.0
  %3288 = vmatpush2.msra.mxu0 0.0
  %3289 = vmatprep.subr.mxu0 0.0
  %3290 = vmatpush2.msra.mxu0 0.0
  %3291 = vmatprep.subr.mxu0 0.0
  %3292 = vmatpush2.msra.mxu0 0.0
  %3293 = vmatprep.subr.mxu0 0.0
  %3294 = vmatpush2.msra.mxu0 0.0
  %3295 = vmatprep.subr.mxu0 0.0
  %3296 = vmatpush2.msra.mxu0 0.0
  %3297 = vmatprep.subr.mxu0 0.0
  %3298 = vmatpush2.msra.mxu0 0.0
  %3299 = vmatprep.subr.mxu0 0.0
  %3300 = vmatpush2.msra.mxu0 0.0
  %3301 = vmatprep.subr.mxu0 0.0
  %3302 = vmatpush2.msra.mxu0 0.0
  %3303 = vmatprep.subr.mxu0 0.0
  %3304 = vmatpush2.msra.mxu0 0.0
  %3305 = vmatprep.subr.mxu0 0.0
  %3306 = vmatpush2.msra.mxu0 0.0
  %3307 = vmatprep.subr.mxu0 0.0
  %3308 = vmatpush2.msra.mxu0 0.0
  %3309 = vmatprep.subr.mxu0 0.0
  %3310 = vmatpush2.msra.mxu0 0.0
  %3311 = vmatprep.mubr.f32.mxu0 0.0
  %3312 = vmatmul.mubr.f32.gmra.mxu0 %v3242
  %v3313 = vpop.f32.mrf.mxu0
  %v3314 = vadd.f32 0.0, %v3313
  %v3315 = vpop.f32.mrf.mxu0
  %3316 = vmatprep.mubr.f32.mxu0 0.0
  %3317 = vmatmul.mubr.f32.gmra.mxu0 %v3245
  %v3318 = vpop.f32.mrf.mxu0
  %v3319 = vadd.f32 0.0, %v3318
  %v3320 = vpop.f32.mrf.mxu0
  %3321 = vdwg.mxu0
  %v3323 = vsel %vm1155, %v3153, 0
  %v3326 = vsel %vm1155, %v3155, 0
  %3328 = vmatprep.subr.mxu0 0.0
  %3329 = vmatpush1.msra.mxu0 0.0
  %3330 = vmatprep.subr.mxu0 0.0
  %3331 = vmatpush1.msra.mxu0 0.0
  %3332 = vmatprep.subr.mxu0 0.0
  %3333 = vmatpush1.msra.mxu0 0.0
  %3334 = vmatprep.subr.mxu0 0.0
  %3335 = vmatpush1.msra.mxu0 0.0
  %3336 = vmatprep.subr.mxu0 0.0
  %3337 = vmatpush1.msra.mxu0 0.0
  %3338 = vmatprep.subr.mxu0 0.0
  %3339 = vmatpush1.msra.mxu0 0.0
  %3340 = vmatprep.subr.mxu0 0.0
  %3341 = vmatpush1.msra.mxu0 0.0
  %3342 = vmatprep.subr.mxu0 0.0
  %3343 = vmatpush1.msra.mxu0 0.0
  %3344 = vmatprep.subr.mxu0 0.0
  %3345 = vmatpush1.msra.mxu0 0.0
  %3346 = vmatprep.subr.mxu0 0.0
  %3347 = vmatpush1.msra.mxu0 0.0
  %3348 = vmatprep.subr.mxu0 0.0
  %3349 = vmatpush1.msra.mxu0 0.0
  %3350 = vmatprep.subr.mxu0 0.0
  %3351 = vmatpush1.msra.mxu0 0.0
  %3352 = vmatprep.subr.mxu0 0.0
  %3353 = vmatpush1.msra.mxu0 0.0
  %3354 = vmatprep.subr.mxu0 0.0
  %3355 = vmatpush1.msra.mxu0 0.0
  %3356 = vmatprep.subr.mxu0 0.0
  %3357 = vmatpush1.msra.mxu0 %v2668
  %3358 = vmatprep.subr.mxu0 0.0
  %3359 = vmatpush1.msra.mxu0 %v2665
  %3360 = vmatprep.subr.mxu0 0.0
  %3361 = vmatpush2.msra.mxu0 0.0
  %3362 = vmatprep.subr.mxu0 0.0
  %3363 = vmatpush2.msra.mxu0 0.0
  %3364 = vmatprep.subr.mxu0 0.0
  %3365 = vmatpush2.msra.mxu0 0.0
  %3366 = vmatprep.subr.mxu0 0.0
  %3367 = vmatpush2.msra.mxu0 0.0
  %3368 = vmatprep.subr.mxu0 0.0
  %3369 = vmatpush2.msra.mxu0 0.0
  %3370 = vmatprep.subr.mxu0 0.0
  %3371 = vmatpush2.msra.mxu0 0.0
  %3372 = vmatprep.subr.mxu0 0.0
  %3373 = vmatpush2.msra.mxu0 0.0
  %3374 = vmatprep.subr.mxu0 0.0
  %3375 = vmatpush2.msra.mxu0 0.0
  %3376 = vmatprep.subr.mxu0 0.0
  %3377 = vmatpush2.msra.mxu0 0.0
  %3378 = vmatprep.subr.mxu0 0.0
  %3379 = vmatpush2.msra.mxu0 0.0
  %3380 = vmatprep.subr.mxu0 0.0
  %3381 = vmatpush2.msra.mxu0 0.0
  %3382 = vmatprep.subr.mxu0 0.0
  %3383 = vmatpush2.msra.mxu0 0.0
  %3384 = vmatprep.subr.mxu0 0.0
  %3385 = vmatpush2.msra.mxu0 0.0
  %3386 = vmatprep.subr.mxu0 0.0
  %3387 = vmatpush2.msra.mxu0 0.0
  %3388 = vmatprep.subr.mxu0 0.0
  %3389 = vmatpush2.msra.mxu0 0.0
  %3390 = vmatprep.subr.mxu0 0.0
  %3391 = vmatpush2.msra.mxu0 0.0
  %3392 = vmatprep.mubr.f32.mxu0 0.0
  %3393 = vmatmul.mubr.f32.gmra.mxu0 %v3323
  %v3394 = vpop.f32.mrf.mxu0
  %v3395 = vadd.f32 0.0, %v3394
  %v3396 = vpop.f32.mrf.mxu0
  %3397 = vmatprep.mubr.f32.mxu0 0.0
  %3398 = vmatmul.mubr.f32.gmra.mxu0 %v3326
  %v3399 = vpop.f32.mrf.mxu0
  %v3400 = vadd.f32 0.0, %v3399
  %v3401 = vpop.f32.mrf.mxu0
  %3402 = vdwg.mxu0
  %v3404 = vsel %vm1155, %v3157, 0
  %v3407 = vsel %vm1155, %v3159, 0
  %3409 = vmatprep.subr.mxu0 0.0
  %3410 = vmatpush1.msra.mxu0 0.0
  %3411 = vmatprep.subr.mxu0 0.0
  %3412 = vmatpush1.msra.mxu0 0.0
  %3413 = vmatprep.subr.mxu0 0.0
  %3414 = vmatpush1.msra.mxu0 0.0
  %3415 = vmatprep.subr.mxu0 0.0
  %3416 = vmatpush1.msra.mxu0 0.0
  %3417 = vmatprep.subr.mxu0 0.0
  %3418 = vmatpush1.msra.mxu0 0.0
  %3419 = vmatprep.subr.mxu0 0.0
  %3420 = vmatpush1.msra.mxu0 0.0
  %3421 = vmatprep.subr.mxu0 0.0
  %3422 = vmatpush1.msra.mxu0 0.0
  %3423 = vmatprep.subr.mxu0 0.0
  %3424 = vmatpush1.msra.mxu0 0.0
  %3425 = vmatprep.subr.mxu0 0.0
  %3426 = vmatpush1.msra.mxu0 0.0
  %3427 = vmatprep.subr.mxu0 0.0
  %3428 = vmatpush1.msra.mxu0 0.0
  %3429 = vmatprep.subr.mxu0 0.0
  %3430 = vmatpush1.msra.mxu0 0.0
  %3431 = vmatprep.subr.mxu0 0.0
  %3432 = vmatpush1.msra.mxu0 0.0
  %3433 = vmatprep.subr.mxu0 0.0
  %3434 = vmatpush1.msra.mxu0 0.0
  %3435 = vmatprep.subr.mxu0 0.0
  %3436 = vmatpush1.msra.mxu0 0.0
  %3437 = vmatprep.subr.mxu0 0.0
  %3438 = vmatpush1.msra.mxu0 %v2721
  %3439 = vmatprep.subr.mxu0 0.0
  %3440 = vmatpush1.msra.mxu0 %v2718
  %3441 = vmatprep.subr.mxu0 0.0
  %3442 = vmatpush2.msra.mxu0 0.0
  %3443 = vmatprep.subr.mxu0 0.0
  %3444 = vmatpush2.msra.mxu0 0.0
  %3445 = vmatprep.subr.mxu0 0.0
  %3446 = vmatpush2.msra.mxu0 0.0
  %3447 = vmatprep.subr.mxu0 0.0
  %3448 = vmatpush2.msra.mxu0 0.0
  %3449 = vmatprep.subr.mxu0 0.0
  %3450 = vmatpush2.msra.mxu0 0.0
  %3451 = vmatprep.subr.mxu0 0.0
  %3452 = vmatpush2.msra.mxu0 0.0
  %3453 = vmatprep.subr.mxu0 0.0
  %3454 = vmatpush2.msra.mxu0 0.0
  %3455 = vmatprep.subr.mxu0 0.0
  %3456 = vmatpush2.msra.mxu0 0.0
  %3457 = vmatprep.subr.mxu0 0.0
  %3458 = vmatpush2.msra.mxu0 0.0
  %3459 = vmatprep.subr.mxu0 0.0
  %3460 = vmatpush2.msra.mxu0 0.0
  %3461 = vmatprep.subr.mxu0 0.0
  %3462 = vmatpush2.msra.mxu0 0.0
  %3463 = vmatprep.subr.mxu0 0.0
  %3464 = vmatpush2.msra.mxu0 0.0
  %3465 = vmatprep.subr.mxu0 0.0
  %3466 = vmatpush2.msra.mxu0 0.0
  %3467 = vmatprep.subr.mxu0 0.0
  %3468 = vmatpush2.msra.mxu0 0.0
  %3469 = vmatprep.subr.mxu0 0.0
  %3470 = vmatpush2.msra.mxu0 0.0
  %3471 = vmatprep.subr.mxu0 0.0
  %3472 = vmatpush2.msra.mxu0 0.0
  %3473 = vmatprep.mubr.f32.mxu0 0.0
  %3474 = vmatmul.mubr.f32.gmra.mxu0 %v3404
  %v3475 = vpop.f32.mrf.mxu0
  %v3476 = vadd.f32 0.0, %v3475
  %v3477 = vpop.f32.mrf.mxu0
  %3478 = vmatprep.mubr.f32.mxu0 0.0
  %3479 = vmatmul.mubr.f32.gmra.mxu0 %v3407
  %v3480 = vpop.f32.mrf.mxu0
  %v3481 = vadd.f32 0.0, %v3480
  %v3482 = vpop.f32.mrf.mxu0
  %3483 = vdwg.mxu0
  %v3484 = vpack.c.bf16 %v3238, %v3233
  %v3485 = vpack.c.bf16 %v3319, %v3314
  %v3486 = vpack.c.bf16 %v3400, %v3395
  %v3487 = vpack.c.bf16 %v3481, %v3476
  %v3489 = vsel %vm806, %v3484, 0
  %v3492 = vsel %vm1575, %v2020, 0
  %3494 = vmatprep.subr.bf16.mxu0 0
  %3495 = vmatpush1.bf16.msra.mxu0 0
  %3496 = vmatprep.subr.bf16.mxu0 0
  %3497 = vmatpush1.bf16.msra.mxu0 0
  %3498 = vmatprep.subr.bf16.mxu0 0
  %3499 = vmatpush1.bf16.msra.mxu0 0
  %3500 = vmatprep.subr.bf16.mxu0 0
  %3501 = vmatpush1.bf16.msra.mxu0 0
  %3502 = vmatprep.subr.bf16.mxu0 0
  %3503 = vmatpush1.bf16.msra.mxu0 0
  %3504 = vmatprep.subr.bf16.mxu0 0
  %3505 = vmatpush1.bf16.msra.mxu0 0
  %3506 = vmatprep.subr.bf16.mxu0 0
  %3507 = vmatpush1.bf16.msra.mxu0 0
  %3508 = vmatprep.subr.bf16.mxu0 0
  %3509 = vmatpush1.bf16.msra.mxu0 %v3492
  %3510 = vmatprep.subr.bf16.mxu0 0
  %3511 = vmatpush2.bf16.msra.mxu0 0
  %3512 = vmatprep.subr.bf16.mxu0 0
  %3513 = vmatpush2.bf16.msra.mxu0 0
  %3514 = vmatprep.subr.bf16.mxu0 0
  %3515 = vmatpush2.bf16.msra.mxu0 0
  %3516 = vmatprep.subr.bf16.mxu0 0
  %3517 = vmatpush2.bf16.msra.mxu0 0
  %3518 = vmatprep.subr.bf16.mxu0 0
  %3519 = vmatpush2.bf16.msra.mxu0 0
  %3520 = vmatprep.subr.bf16.mxu0 0
  %3521 = vmatpush2.bf16.msra.mxu0 0
  %3522 = vmatprep.subr.bf16.mxu0 0
  %3523 = vmatpush2.bf16.msra.mxu0 0
  %3524 = vmatprep.subr.bf16.mxu0 0
  %3525 = vmatpush2.bf16.msra.mxu0 0
  %3526 = vmatprep.mubr.bf16.mxu0 0
  %3527 = vmatmul.mubr.bf16.gmra.mxu0 %v3489
  %v3528 = vpop.f32.mrf.mxu0
  %v3529 = vadd.f32 0.0, %v3528
  %v3530 = vpop.f32.mrf.mxu0
  %v3531 = vpop.f32.mrf.mxu0
  %v3532 = vadd.f32 0.0, %v3531
  %v3533 = vpop.f32.mrf.mxu0
  %3534 = vdwg.mxu0
  %v3536 = vsel %vm806, %v3485, 0
  %v3539 = vsel %vm1575, %v2021, 0
  %3541 = vmatprep.subr.bf16.mxu0 0
  %3542 = vmatpush1.bf16.msra.mxu0 0
  %3543 = vmatprep.subr.bf16.mxu0 0
  %3544 = vmatpush1.bf16.msra.mxu0 0
  %3545 = vmatprep.subr.bf16.mxu0 0
  %3546 = vmatpush1.bf16.msra.mxu0 0
  %3547 = vmatprep.subr.bf16.mxu0 0
  %3548 = vmatpush1.bf16.msra.mxu0 0
  %3549 = vmatprep.subr.bf16.mxu0 0
  %3550 = vmatpush1.bf16.msra.mxu0 0
  %3551 = vmatprep.subr.bf16.mxu0 0
  %3552 = vmatpush1.bf16.msra.mxu0 0
  %3553 = vmatprep.subr.bf16.mxu0 0
  %3554 = vmatpush1.bf16.msra.mxu0 0
  %3555 = vmatprep.subr.bf16.mxu0 0
  %3556 = vmatpush1.bf16.msra.mxu0 %v3539
  %3557 = vmatprep.subr.bf16.mxu0 0
  %3558 = vmatpush2.bf16.msra.mxu0 0
  %3559 = vmatprep.subr.bf16.mxu0 0
  %3560 = vmatpush2.bf16.msra.mxu0 0
  %3561 = vmatprep.subr.bf16.mxu0 0
  %3562 = vmatpush2.bf16.msra.mxu0 0
  %3563 = vmatprep.subr.bf16.mxu0 0
  %3564 = vmatpush2.bf16.msra.mxu0 0
  %3565 = vmatprep.subr.bf16.mxu0 0
  %3566 = vmatpush2.bf16.msra.mxu0 0
  %3567 = vmatprep.subr.bf16.mxu0 0
  %3568 = vmatpush2.bf16.msra.mxu0 0
  %3569 = vmatprep.subr.bf16.mxu0 0
  %3570 = vmatpush2.bf16.msra.mxu0 0
  %3571 = vmatprep.subr.bf16.mxu0 0
  %3572 = vmatpush2.bf16.msra.mxu0 0
  %3573 = vmatprep.mubr.bf16.mxu0 0
  %3574 = vmatmul.mubr.bf16.gmra.mxu0 %v3536
  %v3575 = vpop.f32.mrf.mxu0
  %v3576 = vadd.f32 0.0, %v3575
  %v3577 = vpop.f32.mrf.mxu0
  %v3578 = vpop.f32.mrf.mxu0
  %v3579 = vadd.f32 0.0, %v3578
  %v3580 = vpop.f32.mrf.mxu0
  %3581 = vdwg.mxu0
  %v3583 = vsel %vm806, %v3486, 0
  %v3586 = vsel %vm1575, %v2022, 0
  %3588 = vmatprep.subr.bf16.mxu0 0
  %3589 = vmatpush1.bf16.msra.mxu0 0
  %3590 = vmatprep.subr.bf16.mxu0 0
  %3591 = vmatpush1.bf16.msra.mxu0 0
  %3592 = vmatprep.subr.bf16.mxu0 0
  %3593 = vmatpush1.bf16.msra.mxu0 0
  %3594 = vmatprep.subr.bf16.mxu0 0
  %3595 = vmatpush1.bf16.msra.mxu0 0
  %3596 = vmatprep.subr.bf16.mxu0 0
  %3597 = vmatpush1.bf16.msra.mxu0 0
  %3598 = vmatprep.subr.bf16.mxu0 0
  %3599 = vmatpush1.bf16.msra.mxu0 0
  %3600 = vmatprep.subr.bf16.mxu0 0
  %3601 = vmatpush1.bf16.msra.mxu0 0
  %3602 = vmatprep.subr.bf16.mxu0 0
  %3603 = vmatpush1.bf16.msra.mxu0 %v3586
  %3604 = vmatprep.subr.bf16.mxu0 0
  %3605 = vmatpush2.bf16.msra.mxu0 0
  %3606 = vmatprep.subr.bf16.mxu0 0
  %3607 = vmatpush2.bf16.msra.mxu0 0
  %3608 = vmatprep.subr.bf16.mxu0 0
  %3609 = vmatpush2.bf16.msra.mxu0 0
  %3610 = vmatprep.subr.bf16.mxu0 0
  %3611 = vmatpush2.bf16.msra.mxu0 0
  %3612 = vmatprep.subr.bf16.mxu0 0
  %3613 = vmatpush2.bf16.msra.mxu0 0
  %3614 = vmatprep.subr.bf16.mxu0 0
  %3615 = vmatpush2.bf16.msra.mxu0 0
  %3616 = vmatprep.subr.bf16.mxu0 0
  %3617 = vmatpush2.bf16.msra.mxu0 0
  %3618 = vmatprep.subr.bf16.mxu0 0
  %3619 = vmatpush2.bf16.msra.mxu0 0
  %3620 = vmatprep.mubr.bf16.mxu0 0
  %3621 = vmatmul.mubr.bf16.gmra.mxu0 %v3583
  %v3622 = vpop.f32.mrf.mxu0
  %v3623 = vadd.f32 0.0, %v3622
  %v3624 = vpop.f32.mrf.mxu0
  %v3625 = vpop.f32.mrf.mxu0
  %v3626 = vadd.f32 0.0, %v3625
  %v3627 = vpop.f32.mrf.mxu0
  %3628 = vdwg.mxu0
  %v3630 = vsel %vm806, %v3487, 0
  %v3633 = vsel %vm1575, %v2023, 0
  %3635 = vmatprep.subr.bf16.mxu0 0
  %3636 = vmatpush1.bf16.msra.mxu0 0
  %3637 = vmatprep.subr.bf16.mxu0 0
  %3638 = vmatpush1.bf16.msra.mxu0 0
  %3639 = vmatprep.subr.bf16.mxu0 0
  %3640 = vmatpush1.bf16.msra.mxu0 0
  %3641 = vmatprep.subr.bf16.mxu0 0
  %3642 = vmatpush1.bf16.msra.mxu0 0
  %3643 = vmatprep.subr.bf16.mxu0 0
  %3644 = vmatpush1.bf16.msra.mxu0 0
  %3645 = vmatprep.subr.bf16.mxu0 0
  %3646 = vmatpush1.bf16.msra.mxu0 0
  %3647 = vmatprep.subr.bf16.mxu0 0
  %3648 = vmatpush1.bf16.msra.mxu0 0
  %3649 = vmatprep.subr.bf16.mxu0 0
  %3650 = vmatpush1.bf16.msra.mxu0 %v3633
  %3651 = vmatprep.subr.bf16.mxu0 0
  %3652 = vmatpush2.bf16.msra.mxu0 0
  %3653 = vmatprep.subr.bf16.mxu0 0
  %3654 = vmatpush2.bf16.msra.mxu0 0
  %3655 = vmatprep.subr.bf16.mxu0 0
  %3656 = vmatpush2.bf16.msra.mxu0 0
  %3657 = vmatprep.subr.bf16.mxu0 0
  %3658 = vmatpush2.bf16.msra.mxu0 0
  %3659 = vmatprep.subr.bf16.mxu0 0
  %3660 = vmatpush2.bf16.msra.mxu0 0
  %3661 = vmatprep.subr.bf16.mxu0 0
  %3662 = vmatpush2.bf16.msra.mxu0 0
  %3663 = vmatprep.subr.bf16.mxu0 0
  %3664 = vmatpush2.bf16.msra.mxu0 0
  %3665 = vmatprep.subr.bf16.mxu0 0
  %3666 = vmatpush2.bf16.msra.mxu0 0
  %3667 = vmatprep.mubr.bf16.mxu0 0
  %3668 = vmatmul.mubr.bf16.gmra.mxu0 %v3630
  %v3669 = vpop.f32.mrf.mxu0
  %v3670 = vadd.f32 0.0, %v3669
  %v3671 = vpop.f32.mrf.mxu0
  %v3672 = vpop.f32.mrf.mxu0
  %v3673 = vadd.f32 0.0, %v3672
  %v3674 = vpop.f32.mrf.mxu0
  %3675 = vdwg.mxu0
  %v3676 = vsel %vm122, %v3529, 0.0
  %v3677 = vsel %vm122, %v3576, 0.0
  %v3678 = vadd.f32 %v3676, %v3677
  %v3679 = vsel %vm122, %v3623, 0.0
  %v3680 = vadd.f32 %v3678, %v3679
  %v3681 = vsel %vm122, %v3670, 0.0
  %v3682 = vadd.f32 %v3680, %v3681
  %v3683 = vsel %vm122, %v3532, 0.0
  %v3684 = vsel %vm122, %v3579, 0.0
  %v3685 = vadd.f32 %v3683, %v3684
  %v3686 = vsel %vm122, %v3626, 0.0
  %v3687 = vadd.f32 %v3685, %v3686
  %v3688 = vsel %vm122, %v3673, 0.0
  %v3689 = vadd.f32 %v3687, %v3688
  %v3690 = vadd.f32 %v1960, %v3682
  %v3691 = vadd.f32 %v1961, %v3689
  %v3692 = vsel %vm122, %v3690, 0.0
  %3693 = vadd.xlane.f32.xlu0 %v3692
  %v3694 = vpop.xlane.xlu0 %3693
  %v3695 = vsel %vm122, %v3691, 0.0
  %3696 = vadd.xlane.f32.xlu0 %v3695
  %v3697 = vpop.xlane.xlu0 %3696
  %v3698 = vmul.f32 %v3694, %v129
  %v3699 = vmul.f32 %v3697, %v129
  %v3700 = vsub.f32 %v3690, %v3698
  %v3701 = vsub.f32 %v3691, %v3699
  %v3702 = vmul.f32 %v3700, %v3700
  %v3703 = vmul.f32 %v3701, %v3701
  %v3704 = vsel %vm122, %v3702, 0.0
  %3705 = vadd.xlane.f32.xlu0 %v3704
  %v3706 = vpop.xlane.xlu0 %3705
  %v3707 = vsel %vm122, %v3703, 0.0
  %3708 = vadd.xlane.f32.xlu0 %v3707
  %v3709 = vpop.xlane.xlu0 %3708
  %v3710 = vmul.f32 %v3706, %v129
  %v3711 = vmul.f32 %v3709, %v129
  %v3712 = vadd.f32 %v3710, 1e-06
  %v3713 = vadd.f32 %v3711, 1e-06
  %v3714 = vrsqrt.pop %v3712
  %v3715 = vrsqrt.pop %v3713
  %v3716 = vmul.f32 %v3700, %v3714
  %v3717 = vmul.f32 %v3701, %v3715
  %v3719 = vlaneseq
  %v3720 = vshrl.u32 %v3719, 7
  %v3721 = vsub.s32 0, %v3720
  %v3722 = vrot.slane %v1967, %v3721
  %v3724 = vmul.f32 %v3716, %v3722
  %v3725 = vmul.f32 %v3717, %v3722
  %v3727 = vlaneseq
  %v3728 = vshrl.u32 %v3727, 7
  %v3729 = vsub.s32 0, %v3728
  %v3730 = vrot.slane %v1969, %v3729
  %v3732 = vadd.f32 %v3724, %v3730
  %v3733 = vadd.f32 %v3725, %v3730
  %v3734 = vpack.c.bf16 %v3733, %v3732
  %v3736 = vlaneseq
  %v3737 = vshrl.u32 %v3736, 7
  %v3738 = vsub.s32 0, %v3737
  %v3739 = vrot.slane %v2030, %v3738
  %v3745 = vunpack.c.l.b16 %v2025
  %v3746 = vunpack.c.l.b16 %v2026
  %v3747 = vunpack.c.l.b16 %v2027
  %v3748 = vunpack.c.l.b16 %v2028
  %v3749 = vpack.c.b16 %v3746, %v3745
  %v3750 = vpack.c.b16 %v3748, %v3747
  %v3754 = vsel %vm122, %v3734, 0
  %3756 = vmatprep.subr.bf16.mxu0 0
  %3757 = vmatpush1.bf16.msra.mxu0 0
  %3758 = vmatprep.subr.bf16.mxu0 0
  %3759 = vmatpush1.bf16.msra.mxu0 0
  %3760 = vmatprep.subr.bf16.mxu0 0
  %3761 = vmatpush1.bf16.msra.mxu0 0
  %3762 = vmatprep.subr.bf16.mxu0 0
  %3763 = vmatpush1.bf16.msra.mxu0 0
  %3764 = vmatprep.subr.bf16.mxu0 0
  %3765 = vmatpush1.bf16.msra.mxu0 0
  %3766 = vmatprep.subr.bf16.mxu0 0
  %3767 = vmatpush1.bf16.msra.mxu0 0
  %3768 = vmatprep.subr.bf16.mxu0 0
  %3769 = vmatpush1.bf16.msra.mxu0 %v3750
  %3770 = vmatprep.subr.bf16.mxu0 0
  %3771 = vmatpush1.bf16.msra.mxu0 %v3749
  %3772 = vmatprep.subr.bf16.mxu0 0
  %3773 = vmatpush2.bf16.msra.mxu0 0
  %3774 = vmatprep.subr.bf16.mxu0 0
  %3775 = vmatpush2.bf16.msra.mxu0 0
  %3776 = vmatprep.subr.bf16.mxu0 0
  %3777 = vmatpush2.bf16.msra.mxu0 0
  %3778 = vmatprep.subr.bf16.mxu0 0
  %3779 = vmatpush2.bf16.msra.mxu0 0
  %3780 = vmatprep.subr.bf16.mxu0 0
  %3781 = vmatpush2.bf16.msra.mxu0 0
  %3782 = vmatprep.subr.bf16.mxu0 0
  %3783 = vmatpush2.bf16.msra.mxu0 0
  %3784 = vmatprep.subr.bf16.mxu0 0
  %3785 = vmatpush2.bf16.msra.mxu0 0
  %3786 = vmatprep.subr.bf16.mxu0 0
  %3787 = vmatpush2.bf16.msra.mxu0 0
  %3788 = vmatprep.mubr.bf16.mxu0 0
  %3789 = vmatmul.mubr.bf16.gmra.mxu0 %v3754
  %v3790 = vpop.f32.mrf.mxu0
  %v3791 = vadd.f32 %v3739, %v3790
  %v3792 = vpop.f32.mrf.mxu0
  %v3793 = vpop.f32.mrf.mxu0
  %v3794 = vadd.f32 %v3739, %v3793
  %v3795 = vpop.f32.mrf.mxu0
  %3796 = vdwg.mxu0
  %v3797 = vmax.f32 %v3791, 0.0
  %v3798 = vmax.f32 %v3794, 0.0
  %v3799 = vpack.c.bf16 %v3798, %v3797
  %v3801 = vlaneseq
  %v3802 = vshrl.u32 %v3801, 7
  %v3803 = vsub.s32 0, %v3802
  %v3804 = vrot.slane %v2041, %v3803
  %v3814 = vunpack.c.l.b16 %v2032
  %v3815 = vunpack.c.l.b16 %v2033
  %v3816 = vunpack.c.l.b16 %v2034
  %v3817 = vunpack.c.l.b16 %v2035
  %v3818 = vunpack.c.l.b16 %v2036
  %v3819 = vunpack.c.l.b16 %v2037
  %v3820 = vunpack.c.l.b16 %v2038
  %v3821 = vunpack.c.l.b16 %v2039
  %v3822 = vpack.c.b16 %v3815, %v3814
  %v3823 = vpack.c.b16 %v3817, %v3816
  %v3824 = vpack.c.b16 %v3819, %v3818
  %v3825 = vpack.c.b16 %v3821, %v3820
  %v3831 = vsel %vm1915, %v3799, 0
  %3833 = vmatprep.subr.bf16.mxu0 0
  %3834 = vmatpush1.bf16.msra.mxu0 0
  %3835 = vmatprep.subr.bf16.mxu0 0
  %3836 = vmatpush1.bf16.msra.mxu0 0
  %3837 = vmatprep.subr.bf16.mxu0 0
  %3838 = vmatpush1.bf16.msra.mxu0 0
  %3839 = vmatprep.subr.bf16.mxu0 0
  %3840 = vmatpush1.bf16.msra.mxu0 0
  %3841 = vmatprep.subr.bf16.mxu0 0
  %3842 = vmatpush1.bf16.msra.mxu0 %v3825
  %3843 = vmatprep.subr.bf16.mxu0 0
  %3844 = vmatpush1.bf16.msra.mxu0 %v3824
  %3845 = vmatprep.subr.bf16.mxu0 0
  %3846 = vmatpush1.bf16.msra.mxu0 %v3823
  %3847 = vmatprep.subr.bf16.mxu0 0
  %3848 = vmatpush1.bf16.msra.mxu0 %v3822
  %3849 = vmatprep.subr.bf16.mxu0 0
  %3850 = vmatpush2.bf16.msra.mxu0 0
  %3851 = vmatprep.subr.bf16.mxu0 0
  %3852 = vmatpush2.bf16.msra.mxu0 0
  %3853 = vmatprep.subr.bf16.mxu0 0
  %3854 = vmatpush2.bf16.msra.mxu0 0
  %3855 = vmatprep.subr.bf16.mxu0 0
  %3856 = vmatpush2.bf16.msra.mxu0 0
  %3857 = vmatprep.subr.bf16.mxu0 0
  %3858 = vmatpush2.bf16.msra.mxu0 0
  %3859 = vmatprep.subr.bf16.mxu0 0
  %3860 = vmatpush2.bf16.msra.mxu0 0
  %3861 = vmatprep.subr.bf16.mxu0 0
  %3862 = vmatpush2.bf16.msra.mxu0 0
  %3863 = vmatprep.subr.bf16.mxu0 0
  %3864 = vmatpush2.bf16.msra.mxu0 0
  %3865 = vmatprep.mubr.bf16.mxu0 0
  %3866 = vmatmul.mubr.bf16.gmra.mxu0 %v3831
  %v3867 = vpop.f32.mrf.mxu0
  %v3868 = vadd.f32 %v3804, %v3867
  %v3869 = vpop.f32.mrf.mxu0
  %v3870 = vpop.f32.mrf.mxu0
  %v3871 = vadd.f32 %v3804, %v3870
  %v3872 = vpop.f32.mrf.mxu0
  %3873 = vdwg.mxu0
  %v3874 = vadd.f32 %v3690, %v3868
  %v3875 = vadd.f32 %v3691, %v3871
  %v3876 = vld [vmem:[%s12] sm:$0x1]
  %v3877 = vld [vmem:[%s13] sm:$0x1]
  %v3878 = vsel %vm122, %v3874, 0.0
  %3879 = vadd.xlane.f32.xlu0 %v3878
  %v3880 = vpop.xlane.xlu0 %3879
  %v3881 = vsel %vm122, %v3875, 0.0
  %3882 = vadd.xlane.f32.xlu0 %v3881
  %v3883 = vpop.xlane.xlu0 %3882
  %v3884 = vmul.f32 %v3880, %v129
  %v3885 = vmul.f32 %v3883, %v129
  %v3886 = vsub.f32 %v3874, %v3884
  %v3887 = vsub.f32 %v3875, %v3885
  %v3888 = vmul.f32 %v3886, %v3886
  %v3889 = vmul.f32 %v3887, %v3887
  %v3890 = vsel %vm122, %v3888, 0.0
  %3891 = vadd.xlane.f32.xlu0 %v3890
  %v3892 = vpop.xlane.xlu0 %3891
  %v3893 = vsel %vm122, %v3889, 0.0
  %3894 = vadd.xlane.f32.xlu0 %v3893
  %v3895 = vpop.xlane.xlu0 %3894
  %v3896 = vmul.f32 %v3892, %v129
  %v3897 = vmul.f32 %v3895, %v129
  %v3898 = vadd.f32 %v3896, 1e-06
  %v3899 = vadd.f32 %v3897, 1e-06
  %v3900 = vrsqrt.pop %v3898
  %v3901 = vrsqrt.pop %v3899
  %v3902 = vmul.f32 %v3886, %v3900
  %v3903 = vmul.f32 %v3887, %v3901
  %v3905 = vlaneseq
  %v3906 = vshrl.u32 %v3905, 7
  %v3907 = vsub.s32 0, %v3906
  %v3908 = vrot.slane %v3876, %v3907
  %v3910 = vmul.f32 %v3902, %v3908
  %v3911 = vmul.f32 %v3903, %v3908
  %v3913 = vlaneseq
  %v3914 = vshrl.u32 %v3913, 7
  %v3915 = vsub.s32 0, %v3914
  %v3916 = vrot.slane %v3877, %v3915
  %v3918 = vadd.f32 %v3910, %v3916
  %v3919 = vadd.f32 %v3911, %v3916
  %3920 = vst.msk [vmem:[%s14] sm:$0xff] %vm122, %v3918
  %3921 = vst.msk [vmem:[%s14 + $0x8] sm:$0xff] %vm122, %v3919
  // Predicated region
  $region58: #{encoder_forward.1} parent=0 // pred_check
    _
  $region59: #{encoder_forward.1} parent=0 // pred_check_branch
    %3923 = sbr.rel (0) target = $region61
  $region60: #{encoder_forward.1} parent=0 // pred_region
    _
  $region61: #{encoder_forward.1} parent=0 // pred_fallthru
    _
  // Predicated region
  $region62: #{encoder_forward.1} parent=0 // pred_check
    _
  $region63: #{encoder_forward.1} parent=0 // pred_check_branch
    %3925 = sbr.rel (0) target = $region65
  $region64: #{encoder_forward.1} parent=0 // pred_region
    _
  $region65: #{encoder_forward.1} parent=0 // pred_fallthru
    _

</llo_original>
